<compile_context>
chip_gen: v7x
topology: tpu7x:2x2x1
jax: 0.10.0
libtpu: 0.0.40
codegen_flags: <defaults>
</compile_context>

<pallas_src>
import functools

import jax
import jax.numpy as jnp
from jax.experimental import pallas as pl
from jax.experimental.pallas import tpu as pltpu


def _fused_sage_kernel(a_ref, xn_ref, xs_ref, inv_ref, ws2_ref, wn2_ref,
                       b1_ref, b2_ref, o_ref, acc_ref, h_ref, *, blk):
    """Fused 2-layer GraphSAGE.

    Grid: (layer, m, k).  Per (layer, m): accumulate the (un-normalized)
    neighbor sum adj @ feats over k tiles, then finalize with the 1/deg mean
    scale, bias, relu (layer 0) and the layer-2 projections (layer 1).
    Layer 0 writes h1 into the persistent VMEM scratch `h_ref`; layer 1 reads
    it and writes the kernel output.
    """
    layer = pl.program_id(0)
    m = pl.program_id(1)
    k = pl.program_id(2)                     # reduction axis is last
    last_k = pl.num_programs(2) - 1

    @pl.when(k == 0)
    def _init():
        acc_ref[...] = jnp.zeros_like(acc_ref)

    # int8 {0,1} adjacency mask -> bf16 (exact) for the MXU.
    a_blk = a_ref[...].astype(jnp.bfloat16)                  # (blk, blk)

    # ---- layer-0 aggregation: acc += adj[m,k] @ (X @ Wn1)[k] ---------------
    @pl.when(layer == 0)
    def _agg_l0():
        acc_ref[...] += jnp.dot(a_blk, xn_ref[...],
                                preferred_element_type=jnp.float32)

    # ---- layer-1 aggregation: acc += adj[m,k] @ h1[k] ----------------------
    @pl.when(layer == 1)
    def _agg_l1():
        row_k = pl.multiple_of(k * blk, blk)
        acc_ref[...] += jnp.dot(a_blk, h_ref[pl.ds(row_k, blk), :],
                                preferred_element_type=jnp.float32)

    # ---- layer-0 finalize: h1[m] = relu(X@Ws1 + (1/deg)*acc @ I + b1) ------
    @pl.when(jnp.logical_and(layer == 0, k == last_k))
    def _fin_l0():
        inv = inv_ref[:, 0:1]                                # (blk, 1) f32
        h1 = xs_ref[...] + inv * acc_ref[...] + b1_ref[...]
        h1 = jnp.maximum(h1, 0.0)                            # fused F.relu
        row_m = pl.multiple_of(m * blk, blk)
        h_ref[pl.ds(row_m, blk), :] = h1.astype(h_ref.dtype)

    # ---- layer-1 finalize: out[m] = h1[m]@Ws2 + ((1/deg)*acc)@Wn2 + b2 -----
    @pl.when(jnp.logical_and(layer == 1, k == last_k))
    def _fin_l1():
        inv = inv_ref[:, 0:1]                                # (blk, 1) f32
        row_m = pl.multiple_of(m * blk, blk)
        hm = h_ref[pl.ds(row_m, blk), :]                     # (blk, Hp) bf16
        neigh = (inv * acc_ref[...]).astype(jnp.bfloat16)
        out = (jnp.dot(hm, ws2_ref[...], preferred_element_type=jnp.float32)
               + jnp.dot(neigh, wn2_ref[...],
                         preferred_element_type=jnp.float32)
               + b2_ref[...])
        o_ref[...] = out.astype(o_ref.dtype)


def _round_up(v, m):
    return (v + m - 1) // m * m


def _pad2(arr, rows, cols, dtype):
    return jnp.pad(arr, ((0, rows - arr.shape[0]),
                         (0, cols - arr.shape[1]))).astype(dtype)


def graphsage_forward(adj, x, params, *, block=512):
    """2-layer GraphSAGE: conv2(g, relu(conv1(g, x))) as one Pallas call.

    `adj` is the dense {0,1} adjacency (row i = in-neighbors of node i); the
    'mean' normalization (1/deg) is applied inside the kernel.
    """
    n, _ = x.shape
    h = params["w_self1"].shape[1]

    # NOTE: on v7x prefer block=256 (64 MiB VMEM, 256-wide MXU already full).
    block = min(block, _round_up(n, 128))
    n_p = _round_up(n, block)
    h_p = _round_up(h, 128)

    # Per-row mean normalization (matches A_norm = adj / deg, 0 if deg == 0).
    deg = jnp.sum(adj, axis=1, keepdims=True)
    inv_deg = jnp.where(deg > 0, 1.0 / jnp.maximum(deg, 1.0), 0.0)   # (n, 1)

    # Prologue: tiny N*F*H pre-projections (linearity: (A@X)@W == A@(X@W)),
    # so the O(N^2) kernel streams only H_pad-wide features.
    xn1 = x @ params["w_neigh1"]                                      # (n, h)
    xs1 = x @ params["w_self1"]                                       # (n, h)

    a_i8 = _pad2(adj, n_p, n_p, jnp.int8)          # exact {0,1} mask, 1 B/elem
    xn_p = _pad2(xn1, n_p, h_p, jnp.bfloat16)      # MXU stream operand
    xs_p = _pad2(xs1, n_p, h_p, jnp.float32)       # finalize addend (exact)
    inv_p = _pad2(inv_deg, n_p, 128, jnp.float32)  # column 0 holds 1/deg
    ws2 = _pad2(params["w_self2"], h_p, h_p, jnp.bfloat16)
    wn2 = _pad2(params["w_neigh2"], h_p, h_p, jnp.bfloat16)
    b1 = _pad2(params["b1"], 1, h_p, jnp.float32)
    b2 = _pad2(params["b2"], 1, h_p, jnp.float32)

    m_tiles = n_p // block
    grid = (2, m_tiles, m_tiles)

    # VMEM budget -> explicit limit (v5e scoped default is only 16 MiB).
    est_vmem = (n_p * h_p * 2                       # whole-graph h1 scratch
                + block * h_p * 4                   # f32 accumulator
                + 2 * (block * block * 1            # A tile (double-buffered)
                       + block * h_p * 2            # xn1 block
                       + block * h_p * 4            # xs1 block
                       + block * 128 * 4            # inv_deg block
                       + block * h_p * 4)           # output block
                + 2 * (2 * h_p * h_p * 2 + 2 * h_p * 4))   # weights + biases
    vmem_limit = int(max(est_vmem + (8 << 20), 32 << 20))

    flops = 2 * (2 * n_p * n_p * h_p) + 4 * n_p * h_p * h_p
    bytes_accessed = (2 * n_p * n_p                 # int8 adjacency x 2 layers
                      + n_p * h_p * (2 + 4)         # xn1 + xs1
                      + 2 * n_p * 128 * 4           # inv_deg
                      + 2 * h_p * h_p * 2           # layer-2 weights
                      + 2 * h_p * 4                 # biases
                      + n_p * h_p * 4)              # output
    cost = pl.CostEstimate(flops=int(flops), transcendentals=0,
                           bytes_accessed=int(bytes_accessed))

    def whole(r, c):
        return pl.BlockSpec((r, c), lambda l, m, k: (0, 0))

    grid_spec = pltpu.PrefetchScalarGridSpec(
        num_scalar_prefetch=0,
        grid=grid,
        in_specs=[
            # adjacency mask tile (m, k), int8
            pl.BlockSpec((block, block), lambda l, m, k: (m, k)),
            # X @ Wn1 neighbor stream: follows k in layer 0, pinned (dead) in layer 1
            pl.BlockSpec((block, h_p), lambda l, m, k: (k * (1 - l), 0)),
            # X @ Ws1 self rows: follows m in layer 0, pinned (dead) in layer 1
            pl.BlockSpec((block, h_p), lambda l, m, k: (m * (1 - l), 0)),
            # per-row 1/deg (column 0), needed at finalize of both layers
            pl.BlockSpec((block, 128), lambda l, m, k: (m, 0)),
            whole(h_p, h_p),   # W_self2
            whole(h_p, h_p),   # W_neigh2
            whole(1, h_p),     # b1 (b_self + b_neigh)
            whole(1, h_p),     # b2
        ],
        # Pinned to block 0 during layer 0 -> no garbage HBM writeback.
        out_specs=pl.BlockSpec((block, h_p), lambda l, m, k: (m * l, 0)),
        scratch_shapes=[
            pltpu.VMEM((block, h_p), jnp.float32),   # neighbor-sum accumulator
            pltpu.VMEM((n_p, h_p), jnp.bfloat16),    # intermediate h1 (whole graph)
        ],
    )

    out = pl.pallas_call(
        functools.partial(_fused_sage_kernel, blk=block),
        out_shape=jax.ShapeDtypeStruct((n_p, h_p), jnp.float32),
        grid_spec=grid_spec,
        compiler_params=pltpu.CompilerParams(
            dimension_semantics=("arbitrary", "arbitrary", "arbitrary"),
            vmem_limit_bytes=vmem_limit),
        cost_estimate=cost,
    )(a_i8, xn_p, xs_p, inv_p, ws2, wn2, b1, b2)

    return out[:n, :h]


def init_params(key, in_feats, h_feats):
    """Deterministic Xavier-uniform-ish init for the two SAGEConv layers."""
    ks = jax.random.split(key, 8)

    def xavier(k, fan_in, fan_out):
        lim = jnp.sqrt(6.0 / (fan_in + fan_out))
        return jax.random.uniform(k, (fan_in, fan_out), jnp.float32, -lim, lim)

    b1_self = jax.random.uniform(ks[4], (1, h_feats), jnp.float32, -0.1, 0.1)
    b1_neigh = jax.random.uniform(ks[5], (1, h_feats), jnp.float32, -0.1, 0.1)
    b2_self = jax.random.uniform(ks[6], (1, h_feats), jnp.float32, -0.1, 0.1)
    b2_neigh = jax.random.uniform(ks[7], (1, h_feats), jnp.float32, -0.1, 0.1)
    return {
        "w_self1": xavier(ks[0], in_feats, h_feats),
        "w_neigh1": xavier(ks[1], in_feats, h_feats),
        "b1": b1_self + b1_neigh,
        "w_self2": xavier(ks[2], h_feats, h_feats),
        "w_neigh2": xavier(ks[3], h_feats, h_feats),
        "b2": b2_self + b2_neigh,
    }


def make_graph(key, num_nodes):
    """Deterministic random directed graph as a dense {0,1} adjacency."""
    adj = jax.random.bernoulli(key, p=0.3, shape=(num_nodes, num_nodes))
    return adj.astype(jnp.float32)


if __name__ == "__main__":
    NUM_NODES = 1000    # pads to 1024 rows -> 2x2 tiles of 512 (exercises tiling)
    IN_FEATS = 96       # only touches the tiny JAX prologue
    H_FEATS = 32        # pads to 128 lanes

    root = jax.random.PRNGKey(0)
    k_graph, k_feat, k_param = jax.random.split(root, 3)

    adj = make_graph(k_graph, NUM_NODES)                                # (N, N)
    x = jax.random.normal(k_feat, (NUM_NODES, IN_FEATS), jnp.float32)   # (N, F)
    params = init_params(k_param, IN_FEATS, H_FEATS)

    out = graphsage_forward(adj, x, params)
    out = jax.block_until_ready(out)

    # Pure-JAX f32 reference (same math as the PyTorch module, no Pallas).
    def ref(a, xx, p):
        deg = jnp.sum(a, axis=1, keepdims=True)
        a_norm = jnp.where(deg > 0, a / jnp.maximum(deg, 1.0), 0.0)
        h1 = xx @ p["w_self1"] + (a_norm @ xx) @ p["w_neigh1"] + p["b1"]
        h1 = jnp.maximum(h1, 0.0)
        return h1 @ p["w_self2"] + (a_norm @ h1) @ p["w_neigh2"] + p["b2"]

    ref_out = ref(adj, x, params)
    assert out.shape == (NUM_NODES, H_FEATS)
    # bf16 intermediates / weights with f32 accumulation -> relaxed tolerance
    # (deliberate precision trade-off; adjacency itself is streamed exactly).
    err = float(jnp.max(jnp.abs(out - ref_out)))
    assert jnp.allclose(out, ref_out, atol=5e-2, rtol=5e-2), err

    print("KERNEL_OK")
</pallas_src>

<mosaic_0001>
module attributes {stable_mosaic.version = 11 : i64} {
  func.func @_fused_sage_kernel(%arg0: i32, %arg1: i32, %arg2: i32, %arg3: memref<512x512xi8, #tpu.memory_space<vmem>>, %arg4: memref<512x128xbf16, #tpu.memory_space<vmem>>, %arg5: memref<512x128xf32, #tpu.memory_space<vmem>>, %arg6: memref<512x128xf32, #tpu.memory_space<vmem>>, %arg7: memref<128x128xbf16, #tpu.memory_space<vmem>>, %arg8: memref<128x128xbf16, #tpu.memory_space<vmem>>, %arg9: memref<1x128xf32, #tpu.memory_space<vmem>>, %arg10: memref<1x128xf32, #tpu.memory_space<vmem>>, %arg11: memref<512x128xf32, #tpu.memory_space<vmem>>, %arg12: memref<512x128xf32, #tpu.memory_space<vmem>>, %arg13: memref<1024x128xbf16, #tpu.memory_space<vmem>>) attributes {dimension_semantics = [#tpu.dimension_semantics<arbitrary>, #tpu.dimension_semantics<arbitrary>, #tpu.dimension_semantics<arbitrary>], iteration_bounds = array<i64: 2, 2, 2>, scalar_prefetch = 0 : i64, scratch_operands = 2 : i64, tpu.core_type = #tpu.core_type<tc>, window_params = [{transform_indices = @transform_0, window_bounds = array<i64: 512, 512>}, {transform_indices = @transform_1, window_bounds = array<i64: 512, 128>}, {transform_indices = @transform_2, window_bounds = array<i64: 512, 128>}, {transform_indices = @transform_3, window_bounds = array<i64: 512, 128>}, {pipeline_mode = #tpu.pipeline_mode<synchronous>, transform_indices = @transform_4, window_bounds = array<i64: 128, 128>}, {pipeline_mode = #tpu.pipeline_mode<synchronous>, transform_indices = @transform_5, window_bounds = array<i64: 128, 128>}, {pipeline_mode = #tpu.pipeline_mode<synchronous>, transform_indices = @transform_6, window_bounds = array<i64: 1, 128>}, {pipeline_mode = #tpu.pipeline_mode<synchronous>, transform_indices = @transform_7, window_bounds = array<i64: 1, 128>}, {transform_indices = @transform_8, window_bounds = array<i64: 512, 128>}]} {
    %c0_i32 = arith.constant 0 : i32
    %0 = arith.cmpi eq, %arg2, %c0_i32 : i32
    %1 = arith.extui %0 : i1 to i32
    %c0_i32_0 = arith.constant 0 : i32
    %2 = arith.cmpi ne, %1, %c0_i32_0 : i32
    scf.if %2 {
      %cst = arith.constant 0.000000e+00 : f32
      %21 = vector.broadcast %cst : f32 to vector<512x128xf32>
      %c0_11 = arith.constant 0 : index
      %c0_12 = arith.constant 0 : index
      %22 = vector.load %arg12[%c0_11, %c0_12] : memref<512x128xf32, #tpu.memory_space<vmem>>, vector<512x128xf32>
      tpu.vector_store %arg12[%c0_11, %c0_12], %21 {strides = array<i32>} : memref<512x128xf32, #tpu.memory_space<vmem>>, vector<512x128xf32>,
    } else {
    }
    %c0 = arith.constant 0 : index
    %c0_1 = arith.constant 0 : index
    %3 = vector.load %arg3[%c0, %c0_1] : memref<512x512xi8, #tpu.memory_space<vmem>>, vector<512x512xi8>
    %4 = arith.sitofp %3 : vector<512x512xi8> to vector<512x512xbf16>
    %c0_i32_2 = arith.constant 0 : i32
    %5 = arith.cmpi eq, %arg0, %c0_i32_2 : i32
    %6 = arith.extui %5 : i1 to i32
    %c0_i32_3 = arith.constant 0 : i32
    %7 = arith.cmpi ne, %6, %c0_i32_3 : i32
    scf.if %7 {
      %c0_11 = arith.constant 0 : index
      %c0_12 = arith.constant 0 : index
      %21 = vector.load %arg12[%c0_11, %c0_12] : memref<512x128xf32, #tpu.memory_space<vmem>>, vector<512x128xf32>
      %c0_13 = arith.constant 0 : index
      %c0_14 = arith.constant 0 : index
      %22 = vector.load %arg4[%c0_13, %c0_14] : memref<512x128xbf16, #tpu.memory_space<vmem>>, vector<512x128xbf16>
      %cst = arith.constant dense<0.000000e+00> : vector<512x128xf32>
      %23 = tpu.matmul %4, %22, %cst {dimension_numbers = #tpu.dot_dimension_numbers<[1], [0], [0], [1], [0, 0, 1, 1], [], []>} : vector<512x512xbf16>, vector<512x128xbf16>, vector<512x128xf32> -> vector<512x128xf32>
      %24 = arith.addf %21, %23 : vector<512x128xf32>
      %c0_15 = arith.constant 0 : index
      %c0_16 = arith.constant 0 : index
      %25 = vector.load %arg12[%c0_15, %c0_16] : memref<512x128xf32, #tpu.memory_space<vmem>>, vector<512x128xf32>
      tpu.vector_store %arg12[%c0_15, %c0_16], %24 {strides = array<i32>} : memref<512x128xf32, #tpu.memory_space<vmem>>, vector<512x128xf32>,
    } else {
    }
    %c1_i32 = arith.constant 1 : i32
    %8 = arith.cmpi eq, %arg0, %c1_i32 : i32
    %9 = arith.extui %8 : i1 to i32
    %c0_i32_4 = arith.constant 0 : i32
    %10 = arith.cmpi ne, %9, %c0_i32_4 : i32
    scf.if %10 {
      %c512_i32 = arith.constant 512 : i32
      %21 = arith.muli %arg2, %c512_i32 : i32
      %22 = tpu.assume_multiple %21, 512 : i32
      %c0_11 = arith.constant 0 : index
      %c0_12 = arith.constant 0 : index
      %23 = vector.load %arg12[%c0_11, %c0_12] : memref<512x128xf32, #tpu.memory_space<vmem>>, vector<512x128xf32>
      %24 = arith.index_cast %22 : i32 to index
      %c0_13 = arith.constant 0 : index
      %25 = vector.load %arg13[%24, %c0_13] : memref<1024x128xbf16, #tpu.memory_space<vmem>>, vector<512x128xbf16>
      %cst = arith.constant dense<0.000000e+00> : vector<512x128xf32>
      %26 = tpu.matmul %4, %25, %cst {dimension_numbers = #tpu.dot_dimension_numbers<[1], [0], [0], [1], [0, 0, 1, 1], [], []>} : vector<512x512xbf16>, vector<512x128xbf16>, vector<512x128xf32> -> vector<512x128xf32>
      %27 = arith.addf %23, %26 : vector<512x128xf32>
      %c0_14 = arith.constant 0 : index
      %c0_15 = arith.constant 0 : index
      %28 = vector.load %arg12[%c0_14, %c0_15] : memref<512x128xf32, #tpu.memory_space<vmem>>, vector<512x128xf32>
      tpu.vector_store %arg12[%c0_14, %c0_15], %27 {strides = array<i32>} : memref<512x128xf32, #tpu.memory_space<vmem>>, vector<512x128xf32>,
    } else {
    }
    %c0_i32_5 = arith.constant 0 : i32
    %11 = arith.cmpi eq, %arg0, %c0_i32_5 : i32
    %c1_i32_6 = arith.constant 1 : i32
    %12 = arith.cmpi eq, %arg2, %c1_i32_6 : i32
    %13 = arith.andi %11, %12 : i1
    %14 = arith.extui %13 : i1 to i32
    %c0_i32_7 = arith.constant 0 : i32
    %15 = arith.cmpi ne, %14, %c0_i32_7 : i32
    scf.if %15 {
      %c0_11 = arith.constant 0 : index
      %c0_12 = arith.constant 0 : index
      %21 = vector.load %arg6[%c0_11, %c0_12] : memref<512x128xf32, #tpu.memory_space<vmem>>, vector<512x1xf32>
      %c0_13 = arith.constant 0 : index
      %c0_14 = arith.constant 0 : index
      %22 = vector.load %arg5[%c0_13, %c0_14] : memref<512x128xf32, #tpu.memory_space<vmem>>, vector<512x128xf32>
      %c0_15 = arith.constant 0 : index
      %c0_16 = arith.constant 0 : index
      %23 = vector.load %arg12[%c0_15, %c0_16] : memref<512x128xf32, #tpu.memory_space<vmem>>, vector<512x128xf32>
      %24 = vector.broadcast %21 : vector<512x1xf32> to vector<512x128xf32>
      %25 = arith.mulf %24, %23 : vector<512x128xf32>
      %26 = arith.addf %22, %25 : vector<512x128xf32>
      %c0_17 = arith.constant 0 : index
      %c0_18 = arith.constant 0 : index
      %27 = vector.load %arg9[%c0_17, %c0_18] : memref<1x128xf32, #tpu.memory_space<vmem>>, vector<1x128xf32>
      %28 = vector.broadcast %27 : vector<1x128xf32> to vector<512x128xf32>
      %29 = arith.addf %26, %28 : vector<512x128xf32>
      %cst = arith.constant 0.000000e+00 : f32
      %30 = vector.broadcast %cst : f32 to vector<512x128xf32>
      %31 = arith.maximumf %29, %30 : vector<512x128xf32>
      %c512_i32 = arith.constant 512 : i32
      %32 = arith.muli %arg1, %c512_i32 : i32
      %33 = tpu.assume_multiple %32, 512 : i32
      %34 = arith.truncf %31 : vector<512x128xf32> to vector<512x128xbf16>
      %35 = arith.index_cast %33 : i32 to index
      %c0_19 = arith.constant 0 : index
      %36 = vector.load %arg13[%35, %c0_19] : memref<1024x128xbf16, #tpu.memory_space<vmem>>, vector<512x128xbf16>
      tpu.vector_store %arg13[%35, %c0_19], %34 {strides = array<i32>} : memref<1024x128xbf16, #tpu.memory_space<vmem>>, vector<512x128xbf16>,
    } else {
    }
    %c1_i32_8 = arith.constant 1 : i32
    %16 = arith.cmpi eq, %arg0, %c1_i32_8 : i32
    %c1_i32_9 = arith.constant 1 : i32
    %17 = arith.cmpi eq, %arg2, %c1_i32_9 : i32
    %18 = arith.andi %16, %17 : i1
    %19 = arith.extui %18 : i1 to i32
    %c0_i32_10 = arith.constant 0 : i32
    %20 = arith.cmpi ne, %19, %c0_i32_10 : i32
    scf.if %20 {
      %c0_11 = arith.constant 0 : index
      %c0_12 = arith.constant 0 : index
      %21 = vector.load %arg6[%c0_11, %c0_12] : memref<512x128xf32, #tpu.memory_space<vmem>>, vector<512x1xf32>
      %c512_i32 = arith.constant 512 : i32
      %22 = arith.muli %arg1, %c512_i32 : i32
      %23 = tpu.assume_multiple %22, 512 : i32
      %24 = arith.index_cast %23 : i32 to index
      %c0_13 = arith.constant 0 : index
      %25 = vector.load %arg13[%24, %c0_13] : memref<1024x128xbf16, #tpu.memory_space<vmem>>, vector<512x128xbf16>
      %c0_14 = arith.constant 0 : index
      %c0_15 = arith.constant 0 : index
      %26 = vector.load %arg12[%c0_14, %c0_15] : memref<512x128xf32, #tpu.memory_space<vmem>>, vector<512x128xf32>
      %27 = vector.broadcast %21 : vector<512x1xf32> to vector<512x128xf32>
      %28 = arith.mulf %27, %26 : vector<512x128xf32>
      %29 = arith.truncf %28 : vector<512x128xf32> to vector<512x128xbf16>
      %c0_16 = arith.constant 0 : index
      %c0_17 = arith.constant 0 : index
      %30 = vector.load %arg7[%c0_16, %c0_17] : memref<128x128xbf16, #tpu.memory_space<vmem>>, vector<128x128xbf16>
      %cst = arith.constant dense<0.000000e+00> : vector<512x128xf32>
      %31 = tpu.matmul %25, %30, %cst {dimension_numbers = #tpu.dot_dimension_numbers<[1], [0], [0], [1], [0, 0, 1, 1], [], []>} : vector<512x128xbf16>, vector<128x128xbf16>, vector<512x128xf32> -> vector<512x128xf32>
      %c0_18 = arith.constant 0 : index
      %c0_19 = arith.constant 0 : index
      %32 = vector.load %arg8[%c0_18, %c0_19] : memref<128x128xbf16, #tpu.memory_space<vmem>>, vector<128x128xbf16>
      %cst_20 = arith.constant dense<0.000000e+00> : vector<512x128xf32>
      %33 = tpu.matmul %29, %32, %cst_20 {dimension_numbers = #tpu.dot_dimension_numbers<[1], [0], [0], [1], [0, 0, 1, 1], [], []>} : vector<512x128xbf16>, vector<128x128xbf16>, vector<512x128xf32> -> vector<512x128xf32>
      %34 = arith.addf %31, %33 : vector<512x128xf32>
      %c0_21 = arith.constant 0 : index
      %c0_22 = arith.constant 0 : index
      %35 = vector.load %arg10[%c0_21, %c0_22] : memref<1x128xf32, #tpu.memory_space<vmem>>, vector<1x128xf32>
      %36 = vector.broadcast %35 : vector<1x128xf32> to vector<512x128xf32>
      %37 = arith.addf %34, %36 : vector<512x128xf32>
      %c0_23 = arith.constant 0 : index
      %c0_24 = arith.constant 0 : index
      %38 = vector.load %arg11[%c0_23, %c0_24] : memref<512x128xf32, #tpu.memory_space<vmem>>, vector<512x128xf32>
      tpu.vector_store %arg11[%c0_23, %c0_24], %37 {strides = array<i32>} : memref<512x128xf32, #tpu.memory_space<vmem>>, vector<512x128xf32>,
    } else {
    }
    return
  }
  func.func @transform_0(%arg0: i32, %arg1: i32, %arg2: i32) -> (i32, i32) {
    %c0_i32 = arith.constant 0 : i32
    return %arg1, %arg2 : i32, i32
  }
  func.func @transform_1(%arg0: i32, %arg1: i32, %arg2: i32) -> (i32, i32) {
    %c1_i32 = arith.constant 1 : i32
    %0 = arith.subi %c1_i32, %arg0 : i32
    %1 = arith.muli %arg2, %0 : i32
    %c0_i32 = arith.constant 0 : i32
    %c0_i32_0 = arith.constant 0 : i32
    return %1, %c0_i32 : i32, i32
  }
  func.func @transform_2(%arg0: i32, %arg1: i32, %arg2: i32) -> (i32, i32) {
    %c1_i32 = arith.constant 1 : i32
    %0 = arith.subi %c1_i32, %arg0 : i32
    %1 = arith.muli %arg1, %0 : i32
    %c0_i32 = arith.constant 0 : i32
    %c0_i32_0 = arith.constant 0 : i32
    return %1, %c0_i32 : i32, i32
  }
  func.func @transform_3(%arg0: i32, %arg1: i32, %arg2: i32) -> (i32, i32) {
    %c0_i32 = arith.constant 0 : i32
    %c0_i32_0 = arith.constant 0 : i32
    return %arg1, %c0_i32 : i32, i32
  }
  func.func @transform_4(%arg0: i32, %arg1: i32, %arg2: i32) -> (i32, i32) {
    %c0_i32 = arith.constant 0 : i32
    %c0_i32_0 = arith.constant 0 : i32
    %c0_i32_1 = arith.constant 0 : i32
    return %c0_i32, %c0_i32_0 : i32, i32
  }
  func.func @transform_5(%arg0: i32, %arg1: i32, %arg2: i32) -> (i32, i32) {
    %c0_i32 = arith.constant 0 : i32
    %c0_i32_0 = arith.constant 0 : i32
    %c0_i32_1 = arith.constant 0 : i32
    return %c0_i32, %c0_i32_0 : i32, i32
  }
  func.func @transform_6(%arg0: i32, %arg1: i32, %arg2: i32) -> (i32, i32) {
    %c0_i32 = arith.constant 0 : i32
    %c0_i32_0 = arith.constant 0 : i32
    %c0_i32_1 = arith.constant 0 : i32
    return %c0_i32, %c0_i32_0 : i32, i32
  }
  func.func @transform_7(%arg0: i32, %arg1: i32, %arg2: i32) -> (i32, i32) {
    %c0_i32 = arith.constant 0 : i32
    %c0_i32_0 = arith.constant 0 : i32
    %c0_i32_1 = arith.constant 0 : i32
    return %c0_i32, %c0_i32_0 : i32, i32
  }
  func.func @transform_8(%arg0: i32, %arg1: i32, %arg2: i32) -> (i32, i32) {
    %0 = arith.muli %arg1, %arg0 : i32
    %c0_i32 = arith.constant 0 : i32
    %c0_i32_0 = arith.constant 0 : i32
    return %0, %c0_i32 : i32, i32
  }
}

</mosaic_0001>

<llo_original>
// kernel: tpu_custom_call.1
$region0: #{tpu_custom_call.1}
  #allocation0 [shape = 'u32[]', space=smem, size = 0x4, offset = 0x4, fixed_abs, tag = 'smem constant byte address 0x4 - core index']
  #allocation1 [shape = 'u32[144,128]{1,0:T(1,128)}', space=vmem, size = 0x12000, scoped, tag = 'internal scratch']
  #allocation2 [shape = 'f32[512,128]{1,0:T(8,128)}', space=vmem, size = 0x40000, scoped, tag = 'scratch operand']
  #allocation3 [shape = 'bf16[1024,128]{1,0:T(16,128)(2,1)}', space=vmem, size = 0x40000, scoped, tag = 'scratch operand']
  %s0 = inlined_call_operand.hbm [shape: s8[1024,1024], index: 0, kind: input, shape index: {}]
  %s1 = inlined_call_operand.hbm [shape: bf16[1024,128], index: 1, kind: input, shape index: {}]
  %s2 = inlined_call_operand.hbm [shape: f32[1024,128], index: 2, kind: input, shape index: {}]
  %s3 = inlined_call_operand.hbm [shape: f32[1024,128], index: 3, kind: input, shape index: {}]
  %s4 = inlined_call_operand.hbm [shape: bf16[128,128], index: 4, kind: input, shape index: {}]
  %s5 = inlined_call_operand.hbm [shape: bf16[128,128], index: 5, kind: input, shape index: {}]
  %s6 = inlined_call_operand.vmem [shape: f32[1,128], index: 6, kind: input, shape index: {}]
  %s7 = inlined_call_operand.vmem [shape: f32[1,128], index: 7, kind: input, shape index: {}]
  %s8 = inlined_call_operand.hbm [shape: f32[1024,128], index: 8, kind: output, shape index: {}]
  %s9 = sld [smem:[#allocation0]]
  $region109: #{tpu_custom_call.1} parent=0
    _
  %s11 = ssub.s32 1, %s9
  %s12 = scalar_select 0, %s11, %s9
  $region1: #{tpu_custom_call.1} parent=0
    #allocation4 [shape = 'u8[524288]{0}', space=vmem, size = 0x80000, scoped, tag = 'input window, operand 0']
    #allocation5 [shape = 's32[2]{0}', space=sflag, size = 0x8, scoped, tag = 'scoped memory for tpu_custom_call.1']
    #allocation6 [shape = 's32[2]{0}', space=sflag, size = 0x8, scoped, tag = 'scoped memory for tpu_custom_call.1']
    #allocation7 [shape = 'u8[262144]{0}', space=vmem, size = 0x40000, scoped, tag = 'input window, operand 1']
    #allocation8 [shape = 's32[2]{0}', space=sflag, size = 0x8, scoped, tag = 'scoped memory for tpu_custom_call.1']
    #allocation9 [shape = 'u8[524288]{0}', space=vmem, size = 0x80000, scoped, tag = 'input window, operand 2']
    #allocation10 [shape = 'u8[524288]{0}', space=vmem, size = 0x80000, scoped, tag = 'input window, operand 3']
    #allocation11 [shape = 's32[2]{0}', space=sflag, size = 0x8, scoped, tag = 'scoped memory for tpu_custom_call.1']
    #allocation12 [shape = 'u8[32768]{0}', space=vmem, size = 0x8000, scoped, tag = 'input window, operand 4, single buffered']
    #allocation13 [shape = 'u8[32768]{0}', space=vmem, size = 0x8000, scoped, tag = 'input window, operand 5, single buffered']
    #allocation14 [shape = 's32[1]{0}', space=sflag, size = 0x4, scoped, tag = 'scoped memory for tpu_custom_call.1']
    #allocation15 [shape = 'u8[524288]{0}', space=vmem, size = 0x80000, scoped, tag = 'output window, operand 0']
    %13 = vsyncpa [#allocation5], 0
    %s14 = scalar_lea.sflag [#allocation5], 1
    %15 = vsyncpa %s14, 0
    %16 = vsyncpa [#allocation8], 0
    %s17 = scalar_lea.sflag [#allocation8], 1
    %18 = vsyncpa %s17, 0
    %19 = vsyncpa [#allocation11], 0
    %s20 = scalar_lea.sflag [#allocation11], 1
    %21 = vsyncpa %s20, 0
    %22 = vsyncpa [#allocation14], 0
    %23 = vsyncpa [#allocation6], 0
    %s24 = scalar_lea.sflag [#allocation6], 1
    %25 = vsyncpa %s24, 0
    loop: start=0, step=1, limit=10
    $region2: #{tpu_custom_call.1} parent=1 // loop_pre_header
      _
    $region3: #{tpu_custom_call.1} parent=1 // loop_header
      %s27 = sphi 0, %s31
      %p28 = scmp.ge.s32.totalorder %s27, 10
      %s34 = sphi 0, %s53
      %s35 = sphi 0, %s49
      %s36 = sphi 0, %s45
      %s37 = sphi 0, %s34
      %s38 = sphi 0, %s35
      %s39 = sphi 0, %s36
      %s40 = sphi 0, %s37
      %s41 = sphi 0, %s38
      %s42 = sphi 0, %s39
      %s58 = sphi 0, %s60
      %s61 = sphi 0, %s58
      %s62 = sphi 0, %s61
      %s78 = sphi 0, %s62
      %s88 = sphi 0, %s90
      %s91 = sphi 0, %s88
      %s92 = sphi 0, %s91
      %s108 = sphi 0, %s92
      %s118 = sphi 0, %s120
      %s121 = sphi 0, %s118
      %s122 = sphi 0, %s121
      %s138 = sphi 0, %s122
      %s144 = sphi 0, %s146
      %s147 = sphi 0, %s144
      %s148 = sphi 0, %s147
      %s164 = sphi 0, %s148
      %s168 = sphi 0, %s168
      %s170 = sphi 0, %s168
      %s171 = sphi 0, %s170
      %s185 = sphi 0, %s171
      %s189 = sphi 0, %s189
      %s191 = sphi 0, %s189
      %s192 = sphi 0, %s191
      %s206 = sphi 0, %s192
      %s210 = sphi 0, %s210
      %s212 = sphi 0, %s210
      %s213 = sphi 0, %s212
      %s227 = sphi 0, %s213
      %s231 = sphi 0, %s231
      %s233 = sphi 0, %s231
      %s234 = sphi 0, %s233
      %s248 = sphi 0, %s234
      %s256 = sphi 0, %s258
      %s259 = sphi 0, %s256
      %s260 = sphi 0, %s259
      %s276 = sphi 0, %s260
    $region4: #{tpu_custom_call.1} parent=1 // loop_header_branch
      %30 = sbr.rel (%p28) target = $region8
    $region5: #{tpu_custom_call.1} parent=1 // loop_body
      %s32 = ssub.s32 %s27, 1
      %s33 = ssub.s32 %s27, 2
      %s43 = sadd.s32 1, %s36
      %p44 = scmp.ge.s32.totalorder %s43, 2
      %s45 = scalar_select %p44, 0, %s43
      %s46 = sadd.s32 1, %s35
      %s47 = scalar_select %p44, %s46, %s35
      %p48 = scmp.ge.s32.totalorder %s47, 2
      %s49 = scalar_select %p48, 0, %s47
      %s50 = sadd.s32 1, %s34
      %s51 = scalar_select %p48, %s50, %s34
      %p52 = scmp.ge.s32.totalorder %s51, 2
      %s53 = scalar_select %p52, 0, %s51
      %s54 = ssub.s32 %s35, %s49
      %s55 = ssub.s32 %s36, %s45
      %s56 = sor.u32 %s54, %s55
      %p57 = scmp.eq.s32.totalorder %s56, 0
      %s59 = sadd.s32 %s58, 1
      %s60 = scalar_select %p57, %s58, %s59
      %p63 = pneg %p57
      %p64 = scmp.eq.s32.totalorder %s27, 7
      %p65 = por %p63, %p64
      %p66 = scmp.ne.s32.totalorder %s58, %s61
      %p67 = scmp.eq.s32.totalorder %s27, 0
      %p68 = por %p66, %p67
      %p69 = scmp.ne.s32.totalorder %s58, %s61
      %p70 = scmp.eq.s32.totalorder %s32, 7
      %p71 = por %p69, %p70
      %p72 = scmp.ne.s32.totalorder %s61, %s62
      %p73 = scmp.eq.s32.totalorder %s32, 0
      %p74 = por %p72, %p73
      %p75 = scmp.ne.s32.totalorder %s61, %s62
      %p76 = scmp.eq.s32.totalorder %s33, 7
      %p77 = por %p75, %p76
      %p79 = scmp.ne.s32.totalorder %s62, %s78
      %p80 = scmp.eq.s32.totalorder %s33, 0
      %p81 = por %p79, %p80
      %s82 = ssub.s32 1, %s34
      %s83 = smul.u32 %s36, %s82
      %s84 = ssub.s32 1, %s53
      %s85 = smul.u32 %s45, %s84
      %s86 = ssub.s32 %s83, %s85
      %p87 = scmp.eq.s32.totalorder %s86, 0
      %s89 = sadd.s32 %s88, 1
      %s90 = scalar_select %p87, %s88, %s89
      %p93 = pneg %p87
      %p94 = scmp.eq.s32.totalorder %s27, 7
      %p95 = por %p93, %p94
      %p96 = scmp.ne.s32.totalorder %s88, %s91
      %p97 = scmp.eq.s32.totalorder %s27, 0
      %p98 = por %p96, %p97
      %p99 = scmp.ne.s32.totalorder %s88, %s91
      %p100 = scmp.eq.s32.totalorder %s32, 7
      %p101 = por %p99, %p100
      %p102 = scmp.ne.s32.totalorder %s91, %s92
      %p103 = scmp.eq.s32.totalorder %s32, 0
      %p104 = por %p102, %p103
      %p105 = scmp.ne.s32.totalorder %s91, %s92
      %p106 = scmp.eq.s32.totalorder %s33, 7
      %p107 = por %p105, %p106
      %p109 = scmp.ne.s32.totalorder %s92, %s108
      %p110 = scmp.eq.s32.totalorder %s33, 0
      %p111 = por %p109, %p110
      %s112 = ssub.s32 1, %s34
      %s113 = smul.u32 %s35, %s112
      %s114 = ssub.s32 1, %s53
      %s115 = smul.u32 %s49, %s114
      %s116 = ssub.s32 %s113, %s115
      %p117 = scmp.eq.s32.totalorder %s116, 0
      %s119 = sadd.s32 %s118, 1
      %s120 = scalar_select %p117, %s118, %s119
      %p123 = pneg %p117
      %p124 = scmp.eq.s32.totalorder %s27, 7
      %p125 = por %p123, %p124
      %p126 = scmp.ne.s32.totalorder %s118, %s121
      %p127 = scmp.eq.s32.totalorder %s27, 0
      %p128 = por %p126, %p127
      %p129 = scmp.ne.s32.totalorder %s118, %s121
      %p130 = scmp.eq.s32.totalorder %s32, 7
      %p131 = por %p129, %p130
      %p132 = scmp.ne.s32.totalorder %s121, %s122
      %p133 = scmp.eq.s32.totalorder %s32, 0
      %p134 = por %p132, %p133
      %p135 = scmp.ne.s32.totalorder %s121, %s122
      %p136 = scmp.eq.s32.totalorder %s33, 7
      %p137 = por %p135, %p136
      %p139 = scmp.ne.s32.totalorder %s122, %s138
      %p140 = scmp.eq.s32.totalorder %s33, 0
      %p141 = por %p139, %p140
      %s142 = ssub.s32 %s35, %s49
      %p143 = scmp.eq.s32.totalorder %s142, 0
      %s145 = sadd.s32 %s144, 1
      %s146 = scalar_select %p143, %s144, %s145
      %p149 = pneg %p143
      %p150 = scmp.eq.s32.totalorder %s27, 7
      %p151 = por %p149, %p150
      %p152 = scmp.ne.s32.totalorder %s144, %s147
      %p153 = scmp.eq.s32.totalorder %s27, 0
      %p154 = por %p152, %p153
      %p155 = scmp.ne.s32.totalorder %s144, %s147
      %p156 = scmp.eq.s32.totalorder %s32, 7
      %p157 = por %p155, %p156
      %p158 = scmp.ne.s32.totalorder %s147, %s148
      %p159 = scmp.eq.s32.totalorder %s32, 0
      %p160 = por %p158, %p159
      %p161 = scmp.ne.s32.totalorder %s147, %s148
      %p162 = scmp.eq.s32.totalorder %s33, 7
      %p163 = por %p161, %p162
      %p165 = scmp.ne.s32.totalorder %s148, %s164
      %p166 = scmp.eq.s32.totalorder %s33, 0
      %p167 = por %p165, %p166
      %s169 = sadd.s32 %s168, 1
      %p172 = scmp.eq.s32.totalorder %s27, 7
      %p173 = scmp.ne.s32.totalorder %s168, %s170
      %p174 = scmp.eq.s32.totalorder %s27, 0
      %p175 = por %p173, %p174
      %p176 = scmp.ne.s32.totalorder %s168, %s170
      %p177 = scmp.eq.s32.totalorder %s32, 7
      %p178 = por %p176, %p177
      %p179 = scmp.ne.s32.totalorder %s170, %s171
      %p180 = scmp.eq.s32.totalorder %s32, 0
      %p181 = por %p179, %p180
      %p182 = scmp.ne.s32.totalorder %s170, %s171
      %p183 = scmp.eq.s32.totalorder %s33, 7
      %p184 = por %p182, %p183
      %p186 = scmp.ne.s32.totalorder %s171, %s185
      %p187 = scmp.eq.s32.totalorder %s33, 0
      %p188 = por %p186, %p187
      %s190 = sadd.s32 %s189, 1
      %p193 = scmp.eq.s32.totalorder %s27, 7
      %p194 = scmp.ne.s32.totalorder %s189, %s191
      %p195 = scmp.eq.s32.totalorder %s27, 0
      %p196 = por %p194, %p195
      %p197 = scmp.ne.s32.totalorder %s189, %s191
      %p198 = scmp.eq.s32.totalorder %s32, 7
      %p199 = por %p197, %p198
      %p200 = scmp.ne.s32.totalorder %s191, %s192
      %p201 = scmp.eq.s32.totalorder %s32, 0
      %p202 = por %p200, %p201
      %p203 = scmp.ne.s32.totalorder %s191, %s192
      %p204 = scmp.eq.s32.totalorder %s33, 7
      %p205 = por %p203, %p204
      %p207 = scmp.ne.s32.totalorder %s192, %s206
      %p208 = scmp.eq.s32.totalorder %s33, 0
      %p209 = por %p207, %p208
      %s211 = sadd.s32 %s210, 1
      %p214 = scmp.eq.s32.totalorder %s27, 7
      %p215 = scmp.ne.s32.totalorder %s210, %s212
      %p216 = scmp.eq.s32.totalorder %s27, 0
      %p217 = por %p215, %p216
      %p218 = scmp.ne.s32.totalorder %s210, %s212
      %p219 = scmp.eq.s32.totalorder %s32, 7
      %p220 = por %p218, %p219
      %p221 = scmp.ne.s32.totalorder %s212, %s213
      %p222 = scmp.eq.s32.totalorder %s32, 0
      %p223 = por %p221, %p222
      %p224 = scmp.ne.s32.totalorder %s212, %s213
      %p225 = scmp.eq.s32.totalorder %s33, 7
      %p226 = por %p224, %p225
      %p228 = scmp.ne.s32.totalorder %s213, %s227
      %p229 = scmp.eq.s32.totalorder %s33, 0
      %p230 = por %p228, %p229
      %s232 = sadd.s32 %s231, 1
      %p235 = scmp.eq.s32.totalorder %s27, 7
      %p236 = scmp.ne.s32.totalorder %s231, %s233
      %p237 = scmp.eq.s32.totalorder %s27, 0
      %p238 = por %p236, %p237
      %p239 = scmp.ne.s32.totalorder %s231, %s233
      %p240 = scmp.eq.s32.totalorder %s32, 7
      %p241 = por %p239, %p240
      %p242 = scmp.ne.s32.totalorder %s233, %s234
      %p243 = scmp.eq.s32.totalorder %s32, 0
      %p244 = por %p242, %p243
      %p245 = scmp.ne.s32.totalorder %s233, %s234
      %p246 = scmp.eq.s32.totalorder %s33, 7
      %p247 = por %p245, %p246
      %p249 = scmp.ne.s32.totalorder %s234, %s248
      %p250 = scmp.eq.s32.totalorder %s33, 0
      %p251 = por %p249, %p250
      %s252 = smul.u32 %s35, %s34
      %s253 = smul.u32 %s49, %s53
      %s254 = ssub.s32 %s252, %s253
      %p255 = scmp.eq.s32.totalorder %s254, 0
      %s257 = sadd.s32 %s256, 1
      %s258 = scalar_select %p255, %s256, %s257
      %p261 = pneg %p255
      %p262 = scmp.eq.s32.totalorder %s27, 7
      %p263 = por %p261, %p262
      %p264 = scmp.ne.s32.totalorder %s256, %s259
      %p265 = scmp.eq.s32.totalorder %s27, 0
      %p266 = por %p264, %p265
      %p267 = scmp.ne.s32.totalorder %s256, %s259
      %p268 = scmp.eq.s32.totalorder %s32, 7
      %p269 = por %p267, %p268
      %p270 = scmp.ne.s32.totalorder %s259, %s260
      %p271 = scmp.eq.s32.totalorder %s32, 0
      %p272 = por %p270, %p271
      %p273 = scmp.ne.s32.totalorder %s259, %s260
      %p274 = scmp.eq.s32.totalorder %s33, 7
      %p275 = por %p273, %p274
      %p277 = scmp.ne.s32.totalorder %s260, %s276
      %p278 = scmp.eq.s32.totalorder %s33, 0
      %p279 = por %p277, %p278
      %p280 = scmp.le.s32.totalorder 1, %s27
      %p281 = scmp.lt.s32.totalorder %s27, 9
      %p282 = pnand %p280, %p281
      %p283 = pneg %p282
      // Predicated region
      $region9: #{tpu_custom_call.1} parent=5 // pred_check
        _
      $region10: #{tpu_custom_call.1} parent=5 // pred_check_branch
        %285 = sbr.rel (%p282) target = $region12
      $region11: #{tpu_custom_call.1} parent=5 // pred_region
        %s286 = ssub.s32 %s27, 1
        // Predicated region
        $region13: #{tpu_custom_call.1} parent=11 // pred_check
          %p287 = pneg %p181
        $region14: #{tpu_custom_call.1} parent=11 // pred_check_branch
          %289 = sbr.rel (%p287) target = $region16
        $region15: #{tpu_custom_call.1} parent=11 // pred_region
          %s291 = ssub.s32 1024, 1024
          %292 = vsyncadd [#allocation11], %s291
          %s293 = sshll.u32 [#allocation12], 4
          %s294 = int_to_ptr.vmem [resolvable:$true] %s293
          %299 = dma.hbm_to_vmem [thread:$0]  %s4, 1024, %s294, [#allocation11], 64, 64, 4
        $region16: #{tpu_custom_call.1} parent=11 // pred_fallthru
          _
        // Predicated region
        $region17: #{tpu_custom_call.1} parent=11 // pred_check
          %p300 = pneg %p202
        $region18: #{tpu_custom_call.1} parent=11 // pred_check_branch
          %302 = sbr.rel (%p300) target = $region20
        $region19: #{tpu_custom_call.1} parent=11 // pred_region
          %s304 = ssub.s32 1024, 1024
          %305 = vsyncadd [#allocation14], %s304
          %s306 = sshll.u32 [#allocation13], 4
          %s307 = int_to_ptr.vmem [resolvable:$true] %s306
          %312 = dma.hbm_to_vmem [thread:$0]  %s5, 1024, %s307, [#allocation14], 64, 64, 4
        $region20: #{tpu_custom_call.1} parent=11 // pred_fallthru
          _
        // Predicated region
        $region21: #{tpu_custom_call.1} parent=11 // pred_check
          %p313 = pneg %p223
        $region22: #{tpu_custom_call.1} parent=11 // pred_check_branch
          %315 = sbr.rel (%p313) target = $region24
        $region23: #{tpu_custom_call.1} parent=11 // pred_region
          _
        $region24: #{tpu_custom_call.1} parent=11 // pred_fallthru
          _
        // Predicated region
        $region25: #{tpu_custom_call.1} parent=11 // pred_check
          %p316 = pneg %p244
        $region26: #{tpu_custom_call.1} parent=11 // pred_check_branch
          %318 = sbr.rel (%p316) target = $region28
        $region27: #{tpu_custom_call.1} parent=11 // pred_region
          _
        $region28: #{tpu_custom_call.1} parent=11 // pred_fallthru
          _
      $region12: #{tpu_custom_call.1} parent=5 // pred_fallthru
        _
      %p319 = scmp.lt.s32.totalorder %s27, 8
      // Predicated region
      $region29: #{tpu_custom_call.1} parent=5 // pred_check
        %p320 = pneg %p319
      $region30: #{tpu_custom_call.1} parent=5 // pred_check_branch
        %322 = sbr.rel (%p320) target = $region32
      $region31: #{tpu_custom_call.1} parent=5 // pred_region
        // Predicated region
        $region33: #{tpu_custom_call.1} parent=31 // pred_check
          %p323 = pneg %p68
        $region34: #{tpu_custom_call.1} parent=31 // pred_check_branch
          %325 = sbr.rel (%p323) target = $region36
        $region35: #{tpu_custom_call.1} parent=31 // pred_region
          %s326 = sand.u32 %s58, 1
          %s327 = scalar_lea.sflag [#allocation5], %s326
          %s328 = sand.u32 %s58, 1
          %s329 = smul.addr %s328, 512
          %s330 = scalar_lea.vmem [#allocation4], %s329
          %s331 = smul.u32 16, %s35
          %s332 = smul.u32 4, %s36
          %s334 = ssub.s32 8192, 8192
          %335 = vsyncadd %s327, %s334
          %s336 = smul.addr %s331, 8
          %s337 = sadd.s32 %s332, %s336
          %s338 = smul.addr %s337, 128
          %s339 = scalar_lea.hbm %s0, %s338
          %s340 = sshll.u32 %s330, 4
          %s341 = int_to_ptr.vmem [resolvable:$true] %s340
          %346 = dma.hbm_to_vmem [thread:$0]  %s339, 8192, %s341, %s327, 1024, 512, 32
        $region36: #{tpu_custom_call.1} parent=31 // pred_fallthru
          _
        // Predicated region
        $region37: #{tpu_custom_call.1} parent=31 // pred_check
          %p347 = pneg %p98
        $region38: #{tpu_custom_call.1} parent=31 // pred_check_branch
          %349 = sbr.rel (%p347) target = $region40
        $region39: #{tpu_custom_call.1} parent=31 // pred_region
          %s350 = sand.u32 %s27, 1
          %s351 = scalar_lea.sflag [#allocation8], %s350
          %s352 = sand.u32 %s88, 1
          %s353 = smul.addr %s352, 256
          %s354 = scalar_lea.vmem [#allocation7], %s353
          %s355 = ssub.s32 1, %s34
          %s356 = smul.u32 %s36, %s355
          %s357 = smul.u32 64, %s356
          %s359 = ssub.s32 4096, 4096
          %360 = vsyncadd %s351, %s359
          %s361 = smul.addr %s357, 64
          %s362 = scalar_lea.hbm %s1, %s361
          %s363 = sshll.u32 %s354, 4
          %s364 = int_to_ptr.vmem [resolvable:$true] %s363
          %369 = dma.hbm_to_vmem [thread:$0]  %s362, 4096, %s364, %s351, 64, 64, 4
        $region40: #{tpu_custom_call.1} parent=31 // pred_fallthru
          _
        // Predicated region
        $region41: #{tpu_custom_call.1} parent=31 // pred_check
          %p370 = pneg %p128
        $region42: #{tpu_custom_call.1} parent=31 // pred_check_branch
          %372 = sbr.rel (%p370) target = $region44
        $region43: #{tpu_custom_call.1} parent=31 // pred_region
          %s373 = sand.u32 %s27, 1
          %s374 = scalar_lea.sflag [#allocation8], %s373
          %s375 = sand.u32 %s118, 1
          %s376 = smul.addr %s375, 512
          %s377 = scalar_lea.vmem [#allocation9], %s376
          %s378 = ssub.s32 1, %s34
          %s379 = smul.u32 %s35, %s378
          %s380 = smul.u32 64, %s379
          %s382 = ssub.s32 8192, 8192
          %383 = vsyncadd %s374, %s382
          %s384 = smul.addr %s380, 128
          %s385 = scalar_lea.hbm %s2, %s384
          %s386 = sshll.u32 %s377, 4
          %s387 = int_to_ptr.vmem [resolvable:$true] %s386
          %392 = dma.hbm_to_vmem [thread:$0]  %s385, 8192, %s387, %s374, 128, 128, 8
        $region44: #{tpu_custom_call.1} parent=31 // pred_fallthru
          _
        // Predicated region
        $region45: #{tpu_custom_call.1} parent=31 // pred_check
          %p393 = pneg %p154
        $region46: #{tpu_custom_call.1} parent=31 // pred_check_branch
          %395 = sbr.rel (%p393) target = $region48
        $region47: #{tpu_custom_call.1} parent=31 // pred_region
          %s396 = sand.u32 %s27, 1
          %s397 = scalar_lea.sflag [#allocation11], %s396
          %s398 = sand.u32 %s144, 1
          %s399 = smul.addr %s398, 512
          %s400 = scalar_lea.vmem [#allocation10], %s399
          %s401 = smul.u32 64, %s35
          %s403 = ssub.s32 8192, 8192
          %404 = vsyncadd %s397, %s403
          %s405 = smul.addr %s401, 128
          %s406 = scalar_lea.hbm %s3, %s405
          %s407 = sshll.u32 %s400, 4
          %s408 = int_to_ptr.vmem [resolvable:$true] %s407
          %413 = dma.hbm_to_vmem [thread:$0]  %s406, 8192, %s408, %s397, 128, 128, 8
        $region48: #{tpu_custom_call.1} parent=31 // pred_fallthru
          _
      $region32: #{tpu_custom_call.1} parent=5 // pred_fallthru
        _
      %p414 = scmp.le.s32.totalorder 1, %s27
      %p415 = scmp.lt.s32.totalorder %s27, 9
      %p416 = pnand %p414, %p415
      %p417 = pneg %p416
      // Predicated region
      $region49: #{tpu_custom_call.1} parent=5 // pred_check
        _
      $region50: #{tpu_custom_call.1} parent=5 // pred_check_branch
        %419 = sbr.rel (%p416) target = $region52
      $region51: #{tpu_custom_call.1} parent=5 // pred_region
        %s420 = ssub.s32 %s27, 1
        %s421 = sand.u32 %s61, 1
        %s422 = scalar_lea.sflag [#allocation5], %s421
        %s423 = sand.u32 %s61, 1
        %s424 = smul.addr %s423, 512
        %s425 = scalar_lea.vmem [#allocation4], %s424
        // Predicated region
        $region53: #{tpu_custom_call.1} parent=51 // pred_check
          %p426 = pneg %p74
        $region54: #{tpu_custom_call.1} parent=51 // pred_check_branch
          %428 = sbr.rel (%p426) target = $region56
        $region55: #{tpu_custom_call.1} parent=51 // pred_region
          %429 = dma.done %s422, 8192
        $region56: #{tpu_custom_call.1} parent=51 // pred_fallthru
          _
        %s430 = sand.u32 %s32, 1
        %s431 = scalar_lea.sflag [#allocation8], %s430
        %s432 = sand.u32 %s91, 1
        %s433 = smul.addr %s432, 256
        %s434 = scalar_lea.vmem [#allocation7], %s433
        // Predicated region
        $region57: #{tpu_custom_call.1} parent=51 // pred_check
          %p435 = pneg %p104
        $region58: #{tpu_custom_call.1} parent=51 // pred_check_branch
          %437 = sbr.rel (%p435) target = $region60
        $region59: #{tpu_custom_call.1} parent=51 // pred_region
          %438 = dma.done %s431, 4096
        $region60: #{tpu_custom_call.1} parent=51 // pred_fallthru
          _
        %s439 = sand.u32 %s32, 1
        %s440 = scalar_lea.sflag [#allocation8], %s439
        %s441 = sand.u32 %s121, 1
        %s442 = smul.addr %s441, 512
        %s443 = scalar_lea.vmem [#allocation9], %s442
        // Predicated region
        $region61: #{tpu_custom_call.1} parent=51 // pred_check
          %p444 = pneg %p134
        $region62: #{tpu_custom_call.1} parent=51 // pred_check_branch
          %446 = sbr.rel (%p444) target = $region64
        $region63: #{tpu_custom_call.1} parent=51 // pred_region
          %447 = dma.done %s440, 8192
        $region64: #{tpu_custom_call.1} parent=51 // pred_fallthru
          _
        %s448 = sand.u32 %s32, 1
        %s449 = scalar_lea.sflag [#allocation11], %s448
        %s450 = sand.u32 %s147, 1
        %s451 = smul.addr %s450, 512
        %s452 = scalar_lea.vmem [#allocation10], %s451
        // Predicated region
        $region65: #{tpu_custom_call.1} parent=51 // pred_check
          %p453 = pneg %p160
        $region66: #{tpu_custom_call.1} parent=51 // pred_check_branch
          %455 = sbr.rel (%p453) target = $region68
        $region67: #{tpu_custom_call.1} parent=51 // pred_region
          %456 = dma.done %s449, 8192
        $region68: #{tpu_custom_call.1} parent=51 // pred_fallthru
          _
        // Predicated region
        $region69: #{tpu_custom_call.1} parent=51 // pred_check
          %p457 = pneg %p181
        $region70: #{tpu_custom_call.1} parent=51 // pred_check_branch
          %459 = sbr.rel (%p457) target = $region72
        $region71: #{tpu_custom_call.1} parent=51 // pred_region
          %460 = dma.done [#allocation11], 1024
        $region72: #{tpu_custom_call.1} parent=51 // pred_fallthru
          _
        // Predicated region
        $region73: #{tpu_custom_call.1} parent=51 // pred_check
          %p461 = pneg %p202
        $region74: #{tpu_custom_call.1} parent=51 // pred_check_branch
          %463 = sbr.rel (%p461) target = $region76
        $region75: #{tpu_custom_call.1} parent=51 // pred_region
          %464 = dma.done [#allocation14], 1024
        $region76: #{tpu_custom_call.1} parent=51 // pred_fallthru
          _
        %s465 = sand.u32 %s61, 1
        %s466 = scalar_lea.sflag [#allocation5], %s465
        %s467 = sand.u32 %s61, 1
        %s468 = smul.addr %s467, 512
        %s469 = scalar_lea.vmem [#allocation4], %s468
        %p470 = pneg %p74
        %p471 = pneg %p71
        %s472 = sand.u32 %s32, 1
        %s473 = scalar_lea.sflag [#allocation8], %s472
        %s474 = sand.u32 %s91, 1
        %s475 = smul.addr %s474, 256
        %s476 = scalar_lea.vmem [#allocation7], %s475
        %p477 = pneg %p104
        %p478 = pneg %p101
        %s479 = sand.u32 %s32, 1
        %s480 = scalar_lea.sflag [#allocation8], %s479
        %s481 = sand.u32 %s121, 1
        %s482 = smul.addr %s481, 512
        %s483 = scalar_lea.vmem [#allocation9], %s482
        %p484 = pneg %p134
        %p485 = pneg %p131
        %s486 = sand.u32 %s32, 1
        %s487 = scalar_lea.sflag [#allocation11], %s486
        %s488 = sand.u32 %s147, 1
        %s489 = smul.addr %s488, 512
        %s490 = scalar_lea.vmem [#allocation10], %s489
        %p491 = pneg %p160
        %p492 = pneg %p157
        %p493 = pneg %p181
        %p494 = pneg %p178
        %p495 = pneg %p202
        %p496 = pneg %p199
        %p497 = pneg %p223
        %p498 = pneg %p220
        %p499 = pneg %p244
        %p500 = pneg %p241
        %p501 = pneg %p272
        %p502 = pneg %p269
        %s503 = sand.u32 %s259, 1
        %s504 = scalar_lea.sflag [#allocation6], %s503
        %s505 = sand.u32 %s259, 1
        %s506 = smul.addr %s505, 512
        %s507 = scalar_lea.vmem [#allocation15], %s506
        %s508 = smul.u32 16, %s38
        %s509 = smul.u32 4, %s39
        %s510 = ssub.s32 1, %s37
        %s511 = smul.u32 %s39, %s510
        %s512 = smul.u32 64, %s511
        %s513 = ssub.s32 1, %s37
        %s514 = smul.u32 %s38, %s513
        %s515 = smul.u32 64, %s514
        %s516 = smul.u32 64, %s38
        %s517 = smul.u32 %s38, %s37
        %s518 = smul.u32 64, %s517
        %p520 = scmp.eq.s32.totalorder %s39, 0
        // Predicated region
        $region77: #{tpu_custom_call.1} parent=51 // pred_check
          %p521 = pneg %p520
        $region78: #{tpu_custom_call.1} parent=51 // pred_check_branch
          %523 = sbr.rel (%p521) target = $region80
        $region79: #{tpu_custom_call.1} parent=51 // pred_region
          %524 = vst [vmem:[#allocation2] sm:$0xff] 0.0
          %525 = vst [vmem:[#allocation2 + $0x8] sm:$0xff] 0.0
          %526 = vst [vmem:[#allocation2 + $0x10] sm:$0xff] 0.0
          %527 = vst [vmem:[#allocation2 + $0x18] sm:$0xff] 0.0
          %528 = vst [vmem:[#allocation2 + $0x20] sm:$0xff] 0.0
          %529 = vst [vmem:[#allocation2 + $0x28] sm:$0xff] 0.0
          %530 = vst [vmem:[#allocation2 + $0x30] sm:$0xff] 0.0
          %531 = vst [vmem:[#allocation2 + $0x38] sm:$0xff] 0.0
          %532 = vst [vmem:[#allocation2 + $0x40] sm:$0xff] 0.0
          %533 = vst [vmem:[#allocation2 + $0x48] sm:$0xff] 0.0
          %534 = vst [vmem:[#allocation2 + $0x50] sm:$0xff] 0.0
          %535 = vst [vmem:[#allocation2 + $0x58] sm:$0xff] 0.0
          %536 = vst [vmem:[#allocation2 + $0x60] sm:$0xff] 0.0
          %537 = vst [vmem:[#allocation2 + $0x68] sm:$0xff] 0.0
          %538 = vst [vmem:[#allocation2 + $0x70] sm:$0xff] 0.0
          %539 = vst [vmem:[#allocation2 + $0x78] sm:$0xff] 0.0
          %540 = vst [vmem:[#allocation2 + $0x80] sm:$0xff] 0.0
          %541 = vst [vmem:[#allocation2 + $0x88] sm:$0xff] 0.0
          %542 = vst [vmem:[#allocation2 + $0x90] sm:$0xff] 0.0
          %543 = vst [vmem:[#allocation2 + $0x98] sm:$0xff] 0.0
          %544 = vst [vmem:[#allocation2 + $0xa0] sm:$0xff] 0.0
          %545 = vst [vmem:[#allocation2 + $0xa8] sm:$0xff] 0.0
          %546 = vst [vmem:[#allocation2 + $0xb0] sm:$0xff] 0.0
          %547 = vst [vmem:[#allocation2 + $0xb8] sm:$0xff] 0.0
          %548 = vst [vmem:[#allocation2 + $0xc0] sm:$0xff] 0.0
          %549 = vst [vmem:[#allocation2 + $0xc8] sm:$0xff] 0.0
          %550 = vst [vmem:[#allocation2 + $0xd0] sm:$0xff] 0.0
          %551 = vst [vmem:[#allocation2 + $0xd8] sm:$0xff] 0.0
          %552 = vst [vmem:[#allocation2 + $0xe0] sm:$0xff] 0.0
          %553 = vst [vmem:[#allocation2 + $0xe8] sm:$0xff] 0.0
          %554 = vst [vmem:[#allocation2 + $0xf0] sm:$0xff] 0.0
          %555 = vst [vmem:[#allocation2 + $0xf8] sm:$0xff] 0.0
          %556 = vst [vmem:[#allocation2 + $0x100] sm:$0xff] 0.0
          %557 = vst [vmem:[#allocation2 + $0x108] sm:$0xff] 0.0
          %558 = vst [vmem:[#allocation2 + $0x110] sm:$0xff] 0.0
          %559 = vst [vmem:[#allocation2 + $0x118] sm:$0xff] 0.0
          %560 = vst [vmem:[#allocation2 + $0x120] sm:$0xff] 0.0
          %561 = vst [vmem:[#allocation2 + $0x128] sm:$0xff] 0.0
          %562 = vst [vmem:[#allocation2 + $0x130] sm:$0xff] 0.0
          %563 = vst [vmem:[#allocation2 + $0x138] sm:$0xff] 0.0
          %564 = vst [vmem:[#allocation2 + $0x140] sm:$0xff] 0.0
          %565 = vst [vmem:[#allocation2 + $0x148] sm:$0xff] 0.0
          %566 = vst [vmem:[#allocation2 + $0x150] sm:$0xff] 0.0
          %567 = vst [vmem:[#allocation2 + $0x158] sm:$0xff] 0.0
          %568 = vst [vmem:[#allocation2 + $0x160] sm:$0xff] 0.0
          %569 = vst [vmem:[#allocation2 + $0x168] sm:$0xff] 0.0
          %570 = vst [vmem:[#allocation2 + $0x170] sm:$0xff] 0.0
          %571 = vst [vmem:[#allocation2 + $0x178] sm:$0xff] 0.0
          %572 = vst [vmem:[#allocation2 + $0x180] sm:$0xff] 0.0
          %573 = vst [vmem:[#allocation2 + $0x188] sm:$0xff] 0.0
          %574 = vst [vmem:[#allocation2 + $0x190] sm:$0xff] 0.0
          %575 = vst [vmem:[#allocation2 + $0x198] sm:$0xff] 0.0
          %576 = vst [vmem:[#allocation2 + $0x1a0] sm:$0xff] 0.0
          %577 = vst [vmem:[#allocation2 + $0x1a8] sm:$0xff] 0.0
          %578 = vst [vmem:[#allocation2 + $0x1b0] sm:$0xff] 0.0
          %579 = vst [vmem:[#allocation2 + $0x1b8] sm:$0xff] 0.0
          %580 = vst [vmem:[#allocation2 + $0x1c0] sm:$0xff] 0.0
          %581 = vst [vmem:[#allocation2 + $0x1c8] sm:$0xff] 0.0
          %582 = vst [vmem:[#allocation2 + $0x1d0] sm:$0xff] 0.0
          %583 = vst [vmem:[#allocation2 + $0x1d8] sm:$0xff] 0.0
          %584 = vst [vmem:[#allocation2 + $0x1e0] sm:$0xff] 0.0
          %585 = vst [vmem:[#allocation2 + $0x1e8] sm:$0xff] 0.0
          %586 = vst [vmem:[#allocation2 + $0x1f0] sm:$0xff] 0.0
          %587 = vst [vmem:[#allocation2 + $0x1f8] sm:$0xff] 0.0
        $region80: #{tpu_custom_call.1} parent=51 // pred_fallthru
          _
        %v588 = vld [vmem:[%s425] sm:$0xff]
        %v589 = vld [vmem:[%s425 + $0x8] sm:$0xff]
        %v590 = vld [vmem:[%s425 + $0x10] sm:$0xff]
        %v591 = vld [vmem:[%s425 + $0x18] sm:$0xff]
        %v592 = vld [vmem:[%s425 + $0x20] sm:$0xff]
        %v593 = vld [vmem:[%s425 + $0x28] sm:$0xff]
        %v594 = vld [vmem:[%s425 + $0x30] sm:$0xff]
        %v595 = vld [vmem:[%s425 + $0x38] sm:$0xff]
        %v596 = vld [vmem:[%s425 + $0x40] sm:$0xff]
        %v597 = vld [vmem:[%s425 + $0x48] sm:$0xff]
        %v598 = vld [vmem:[%s425 + $0x50] sm:$0xff]
        %v599 = vld [vmem:[%s425 + $0x58] sm:$0xff]
        %v600 = vld [vmem:[%s425 + $0x60] sm:$0xff]
        %v601 = vld [vmem:[%s425 + $0x68] sm:$0xff]
        %v602 = vld [vmem:[%s425 + $0x70] sm:$0xff]
        %v603 = vld [vmem:[%s425 + $0x78] sm:$0xff]
        %v604 = vld [vmem:[%s425 + $0x80] sm:$0xff]
        %v605 = vld [vmem:[%s425 + $0x88] sm:$0xff]
        %v606 = vld [vmem:[%s425 + $0x90] sm:$0xff]
        %v607 = vld [vmem:[%s425 + $0x98] sm:$0xff]
        %v608 = vld [vmem:[%s425 + $0xa0] sm:$0xff]
        %v609 = vld [vmem:[%s425 + $0xa8] sm:$0xff]
        %v610 = vld [vmem:[%s425 + $0xb0] sm:$0xff]
        %v611 = vld [vmem:[%s425 + $0xb8] sm:$0xff]
        %v612 = vld [vmem:[%s425 + $0xc0] sm:$0xff]
        %v613 = vld [vmem:[%s425 + $0xc8] sm:$0xff]
        %v614 = vld [vmem:[%s425 + $0xd0] sm:$0xff]
        %v615 = vld [vmem:[%s425 + $0xd8] sm:$0xff]
        %v616 = vld [vmem:[%s425 + $0xe0] sm:$0xff]
        %v617 = vld [vmem:[%s425 + $0xe8] sm:$0xff]
        %v618 = vld [vmem:[%s425 + $0xf0] sm:$0xff]
        %v619 = vld [vmem:[%s425 + $0xf8] sm:$0xff]
        %v620 = vld [vmem:[%s425 + $0x100] sm:$0xff]
        %v621 = vld [vmem:[%s425 + $0x108] sm:$0xff]
        %v622 = vld [vmem:[%s425 + $0x110] sm:$0xff]
        %v623 = vld [vmem:[%s425 + $0x118] sm:$0xff]
        %v624 = vld [vmem:[%s425 + $0x120] sm:$0xff]
        %v625 = vld [vmem:[%s425 + $0x128] sm:$0xff]
        %v626 = vld [vmem:[%s425 + $0x130] sm:$0xff]
        %v627 = vld [vmem:[%s425 + $0x138] sm:$0xff]
        %v628 = vld [vmem:[%s425 + $0x140] sm:$0xff]
        %v629 = vld [vmem:[%s425 + $0x148] sm:$0xff]
        %v630 = vld [vmem:[%s425 + $0x150] sm:$0xff]
        %v631 = vld [vmem:[%s425 + $0x158] sm:$0xff]
        %v632 = vld [vmem:[%s425 + $0x160] sm:$0xff]
        %v633 = vld [vmem:[%s425 + $0x168] sm:$0xff]
        %v634 = vld [vmem:[%s425 + $0x170] sm:$0xff]
        %v635 = vld [vmem:[%s425 + $0x178] sm:$0xff]
        %v636 = vld [vmem:[%s425 + $0x180] sm:$0xff]
        %v637 = vld [vmem:[%s425 + $0x188] sm:$0xff]
        %v638 = vld [vmem:[%s425 + $0x190] sm:$0xff]
        %v639 = vld [vmem:[%s425 + $0x198] sm:$0xff]
        %v640 = vld [vmem:[%s425 + $0x1a0] sm:$0xff]
        %v641 = vld [vmem:[%s425 + $0x1a8] sm:$0xff]
        %v642 = vld [vmem:[%s425 + $0x1b0] sm:$0xff]
        %v643 = vld [vmem:[%s425 + $0x1b8] sm:$0xff]
        %v644 = vld [vmem:[%s425 + $0x1c0] sm:$0xff]
        %v645 = vld [vmem:[%s425 + $0x1c8] sm:$0xff]
        %v646 = vld [vmem:[%s425 + $0x1d0] sm:$0xff]
        %v647 = vld [vmem:[%s425 + $0x1d8] sm:$0xff]
        %v648 = vld [vmem:[%s425 + $0x1e0] sm:$0xff]
        %v649 = vld [vmem:[%s425 + $0x1e8] sm:$0xff]
        %v650 = vld [vmem:[%s425 + $0x1f0] sm:$0xff]
        %v651 = vld [vmem:[%s425 + $0x1f8] sm:$0xff]
        %v652 = vunpack.c.l.s8.bf16 %v588
        %v653 = vunpack.c.l.s8.bf16 %v589
        %v654 = vunpack.c.l.s8.bf16 %v590
        %v655 = vunpack.c.l.s8.bf16 %v591
        %v656 = vunpack.c.h.s8.bf16 %v588
        %v657 = vunpack.c.h.s8.bf16 %v589
        %v658 = vunpack.c.h.s8.bf16 %v590
        %v659 = vunpack.c.h.s8.bf16 %v591
        %v660 = vunpack.c.l.s8.bf16 %v592
        %v661 = vunpack.c.l.s8.bf16 %v593
        %v662 = vunpack.c.l.s8.bf16 %v594
        %v663 = vunpack.c.l.s8.bf16 %v595
        %v664 = vunpack.c.h.s8.bf16 %v592
        %v665 = vunpack.c.h.s8.bf16 %v593
        %v666 = vunpack.c.h.s8.bf16 %v594
        %v667 = vunpack.c.h.s8.bf16 %v595
        %v668 = vunpack.c.l.s8.bf16 %v596
        %v669 = vunpack.c.l.s8.bf16 %v597
        %v670 = vunpack.c.l.s8.bf16 %v598
        %v671 = vunpack.c.l.s8.bf16 %v599
        %v672 = vunpack.c.h.s8.bf16 %v596
        %v673 = vunpack.c.h.s8.bf16 %v597
        %v674 = vunpack.c.h.s8.bf16 %v598
        %v675 = vunpack.c.h.s8.bf16 %v599
        %v676 = vunpack.c.l.s8.bf16 %v600
        %v677 = vunpack.c.l.s8.bf16 %v601
        %v678 = vunpack.c.l.s8.bf16 %v602
        %v679 = vunpack.c.l.s8.bf16 %v603
        %v680 = vunpack.c.h.s8.bf16 %v600
        %v681 = vunpack.c.h.s8.bf16 %v601
        %v682 = vunpack.c.h.s8.bf16 %v602
        %v683 = vunpack.c.h.s8.bf16 %v603
        %v684 = vunpack.c.l.s8.bf16 %v604
        %v685 = vunpack.c.l.s8.bf16 %v605
        %v686 = vunpack.c.l.s8.bf16 %v606
        %v687 = vunpack.c.l.s8.bf16 %v607
        %v688 = vunpack.c.h.s8.bf16 %v604
        %v689 = vunpack.c.h.s8.bf16 %v605
        %v690 = vunpack.c.h.s8.bf16 %v606
        %v691 = vunpack.c.h.s8.bf16 %v607
        %v692 = vunpack.c.l.s8.bf16 %v608
        %v693 = vunpack.c.l.s8.bf16 %v609
        %v694 = vunpack.c.l.s8.bf16 %v610
        %v695 = vunpack.c.l.s8.bf16 %v611
        %v696 = vunpack.c.h.s8.bf16 %v608
        %v697 = vunpack.c.h.s8.bf16 %v609
        %v698 = vunpack.c.h.s8.bf16 %v610
        %v699 = vunpack.c.h.s8.bf16 %v611
        %v700 = vunpack.c.l.s8.bf16 %v612
        %v701 = vunpack.c.l.s8.bf16 %v613
        %v702 = vunpack.c.l.s8.bf16 %v614
        %v703 = vunpack.c.l.s8.bf16 %v615
        %v704 = vunpack.c.h.s8.bf16 %v612
        %v705 = vunpack.c.h.s8.bf16 %v613
        %v706 = vunpack.c.h.s8.bf16 %v614
        %v707 = vunpack.c.h.s8.bf16 %v615
        %v708 = vunpack.c.l.s8.bf16 %v616
        %v709 = vunpack.c.l.s8.bf16 %v617
        %v710 = vunpack.c.l.s8.bf16 %v618
        %v711 = vunpack.c.l.s8.bf16 %v619
        %v712 = vunpack.c.h.s8.bf16 %v616
        %v713 = vunpack.c.h.s8.bf16 %v617
        %v714 = vunpack.c.h.s8.bf16 %v618
        %v715 = vunpack.c.h.s8.bf16 %v619
        %v716 = vunpack.c.l.s8.bf16 %v620
        %v717 = vunpack.c.l.s8.bf16 %v621
        %v718 = vunpack.c.l.s8.bf16 %v622
        %v719 = vunpack.c.l.s8.bf16 %v623
        %v720 = vunpack.c.h.s8.bf16 %v620
        %v721 = vunpack.c.h.s8.bf16 %v621
        %v722 = vunpack.c.h.s8.bf16 %v622
        %v723 = vunpack.c.h.s8.bf16 %v623
        %v724 = vunpack.c.l.s8.bf16 %v624
        %v725 = vunpack.c.l.s8.bf16 %v625
        %v726 = vunpack.c.l.s8.bf16 %v626
        %v727 = vunpack.c.l.s8.bf16 %v627
        %v728 = vunpack.c.h.s8.bf16 %v624
        %v729 = vunpack.c.h.s8.bf16 %v625
        %v730 = vunpack.c.h.s8.bf16 %v626
        %v731 = vunpack.c.h.s8.bf16 %v627
        %v732 = vunpack.c.l.s8.bf16 %v628
        %v733 = vunpack.c.l.s8.bf16 %v629
        %v734 = vunpack.c.l.s8.bf16 %v630
        %v735 = vunpack.c.l.s8.bf16 %v631
        %v736 = vunpack.c.h.s8.bf16 %v628
        %v737 = vunpack.c.h.s8.bf16 %v629
        %v738 = vunpack.c.h.s8.bf16 %v630
        %v739 = vunpack.c.h.s8.bf16 %v631
        %v740 = vunpack.c.l.s8.bf16 %v632
        %v741 = vunpack.c.l.s8.bf16 %v633
        %v742 = vunpack.c.l.s8.bf16 %v634
        %v743 = vunpack.c.l.s8.bf16 %v635
        %v744 = vunpack.c.h.s8.bf16 %v632
        %v745 = vunpack.c.h.s8.bf16 %v633
        %v746 = vunpack.c.h.s8.bf16 %v634
        %v747 = vunpack.c.h.s8.bf16 %v635
        %v748 = vunpack.c.l.s8.bf16 %v636
        %v749 = vunpack.c.l.s8.bf16 %v637
        %v750 = vunpack.c.l.s8.bf16 %v638
        %v751 = vunpack.c.l.s8.bf16 %v639
        %v752 = vunpack.c.h.s8.bf16 %v636
        %v753 = vunpack.c.h.s8.bf16 %v637
        %v754 = vunpack.c.h.s8.bf16 %v638
        %v755 = vunpack.c.h.s8.bf16 %v639
        %v756 = vunpack.c.l.s8.bf16 %v640
        %v757 = vunpack.c.l.s8.bf16 %v641
        %v758 = vunpack.c.l.s8.bf16 %v642
        %v759 = vunpack.c.l.s8.bf16 %v643
        %v760 = vunpack.c.h.s8.bf16 %v640
        %v761 = vunpack.c.h.s8.bf16 %v641
        %v762 = vunpack.c.h.s8.bf16 %v642
        %v763 = vunpack.c.h.s8.bf16 %v643
        %v764 = vunpack.c.l.s8.bf16 %v644
        %v765 = vunpack.c.l.s8.bf16 %v645
        %v766 = vunpack.c.l.s8.bf16 %v646
        %v767 = vunpack.c.l.s8.bf16 %v647
        %v768 = vunpack.c.h.s8.bf16 %v644
        %v769 = vunpack.c.h.s8.bf16 %v645
        %v770 = vunpack.c.h.s8.bf16 %v646
        %v771 = vunpack.c.h.s8.bf16 %v647
        %v772 = vunpack.c.l.s8.bf16 %v648
        %v773 = vunpack.c.l.s8.bf16 %v649
        %v774 = vunpack.c.l.s8.bf16 %v650
        %v775 = vunpack.c.l.s8.bf16 %v651
        %v776 = vunpack.c.h.s8.bf16 %v648
        %v777 = vunpack.c.h.s8.bf16 %v649
        %v778 = vunpack.c.h.s8.bf16 %v650
        %v779 = vunpack.c.h.s8.bf16 %v651
        %p780 = scmp.eq.s32.totalorder %s37, 0
        // Predicated region
        $region81: #{tpu_custom_call.1} parent=51 // pred_check
          %p781 = pneg %p780
        $region82: #{tpu_custom_call.1} parent=51 // pred_check_branch
          %783 = sbr.rel (%p781) target = $region84
        $region83: #{tpu_custom_call.1} parent=51 // pred_region
          %v784 = vld [vmem:[#allocation2] sm:$0xff]
          %v785 = vld [vmem:[#allocation2 + $0x8] sm:$0xff]
          %v786 = vld [vmem:[#allocation2 + $0x10] sm:$0xff]
          %v787 = vld [vmem:[#allocation2 + $0x18] sm:$0xff]
          %v788 = vld [vmem:[#allocation2 + $0x20] sm:$0xff]
          %v789 = vld [vmem:[#allocation2 + $0x28] sm:$0xff]
          %v790 = vld [vmem:[#allocation2 + $0x30] sm:$0xff]
          %v791 = vld [vmem:[#allocation2 + $0x38] sm:$0xff]
          %v792 = vld [vmem:[#allocation2 + $0x40] sm:$0xff]
          %v793 = vld [vmem:[#allocation2 + $0x48] sm:$0xff]
          %v794 = vld [vmem:[#allocation2 + $0x50] sm:$0xff]
          %v795 = vld [vmem:[#allocation2 + $0x58] sm:$0xff]
          %v796 = vld [vmem:[#allocation2 + $0x60] sm:$0xff]
          %v797 = vld [vmem:[#allocation2 + $0x68] sm:$0xff]
          %v798 = vld [vmem:[#allocation2 + $0x70] sm:$0xff]
          %v799 = vld [vmem:[#allocation2 + $0x78] sm:$0xff]
          %v800 = vld [vmem:[#allocation2 + $0x80] sm:$0xff]
          %v801 = vld [vmem:[#allocation2 + $0x88] sm:$0xff]
          %v802 = vld [vmem:[#allocation2 + $0x90] sm:$0xff]
          %v803 = vld [vmem:[#allocation2 + $0x98] sm:$0xff]
          %v804 = vld [vmem:[#allocation2 + $0xa0] sm:$0xff]
          %v805 = vld [vmem:[#allocation2 + $0xa8] sm:$0xff]
          %v806 = vld [vmem:[#allocation2 + $0xb0] sm:$0xff]
          %v807 = vld [vmem:[#allocation2 + $0xb8] sm:$0xff]
          %v808 = vld [vmem:[#allocation2 + $0xc0] sm:$0xff]
          %v809 = vld [vmem:[#allocation2 + $0xc8] sm:$0xff]
          %v810 = vld [vmem:[#allocation2 + $0xd0] sm:$0xff]
          %v811 = vld [vmem:[#allocation2 + $0xd8] sm:$0xff]
          %v812 = vld [vmem:[#allocation2 + $0xe0] sm:$0xff]
          %v813 = vld [vmem:[#allocation2 + $0xe8] sm:$0xff]
          %v814 = vld [vmem:[#allocation2 + $0xf0] sm:$0xff]
          %v815 = vld [vmem:[#allocation2 + $0xf8] sm:$0xff]
          %v816 = vld [vmem:[#allocation2 + $0x100] sm:$0xff]
          %v817 = vld [vmem:[#allocation2 + $0x108] sm:$0xff]
          %v818 = vld [vmem:[#allocation2 + $0x110] sm:$0xff]
          %v819 = vld [vmem:[#allocation2 + $0x118] sm:$0xff]
          %v820 = vld [vmem:[#allocation2 + $0x120] sm:$0xff]
          %v821 = vld [vmem:[#allocation2 + $0x128] sm:$0xff]
          %v822 = vld [vmem:[#allocation2 + $0x130] sm:$0xff]
          %v823 = vld [vmem:[#allocation2 + $0x138] sm:$0xff]
          %v824 = vld [vmem:[#allocation2 + $0x140] sm:$0xff]
          %v825 = vld [vmem:[#allocation2 + $0x148] sm:$0xff]
          %v826 = vld [vmem:[#allocation2 + $0x150] sm:$0xff]
          %v827 = vld [vmem:[#allocation2 + $0x158] sm:$0xff]
          %v828 = vld [vmem:[#allocation2 + $0x160] sm:$0xff]
          %v829 = vld [vmem:[#allocation2 + $0x168] sm:$0xff]
          %v830 = vld [vmem:[#allocation2 + $0x170] sm:$0xff]
          %v831 = vld [vmem:[#allocation2 + $0x178] sm:$0xff]
          %v832 = vld [vmem:[#allocation2 + $0x180] sm:$0xff]
          %v833 = vld [vmem:[#allocation2 + $0x188] sm:$0xff]
          %v834 = vld [vmem:[#allocation2 + $0x190] sm:$0xff]
          %v835 = vld [vmem:[#allocation2 + $0x198] sm:$0xff]
          %v836 = vld [vmem:[#allocation2 + $0x1a0] sm:$0xff]
          %v837 = vld [vmem:[#allocation2 + $0x1a8] sm:$0xff]
          %v838 = vld [vmem:[#allocation2 + $0x1b0] sm:$0xff]
          %v839 = vld [vmem:[#allocation2 + $0x1b8] sm:$0xff]
          %v840 = vld [vmem:[#allocation2 + $0x1c0] sm:$0xff]
          %v841 = vld [vmem:[#allocation2 + $0x1c8] sm:$0xff]
          %v842 = vld [vmem:[#allocation2 + $0x1d0] sm:$0xff]
          %v843 = vld [vmem:[#allocation2 + $0x1d8] sm:$0xff]
          %v844 = vld [vmem:[#allocation2 + $0x1e0] sm:$0xff]
          %v845 = vld [vmem:[#allocation2 + $0x1e8] sm:$0xff]
          %v846 = vld [vmem:[#allocation2 + $0x1f0] sm:$0xff]
          %v847 = vld [vmem:[#allocation2 + $0x1f8] sm:$0xff]
          %v848 = vld [vmem:[%s434] sm:$0xf]
          %v849 = vld [vmem:[%s434 + $0x4] sm:$0xf]
          %v850 = vld [vmem:[%s434 + $0x8] sm:$0xf]
          %v851 = vld [vmem:[%s434 + $0xc] sm:$0xf]
          %v852 = vld [vmem:[%s434 + $0x10] sm:$0xf]
          %v853 = vld [vmem:[%s434 + $0x14] sm:$0xf]
          %v854 = vld [vmem:[%s434 + $0x18] sm:$0xf]
          %v855 = vld [vmem:[%s434 + $0x1c] sm:$0xf]
          %v856 = vld [vmem:[%s434 + $0x20] sm:$0xf]
          %v857 = vld [vmem:[%s434 + $0x24] sm:$0xf]
          %v858 = vld [vmem:[%s434 + $0x28] sm:$0xf]
          %v859 = vld [vmem:[%s434 + $0x2c] sm:$0xf]
          %v860 = vld [vmem:[%s434 + $0x30] sm:$0xf]
          %v861 = vld [vmem:[%s434 + $0x34] sm:$0xf]
          %v862 = vld [vmem:[%s434 + $0x38] sm:$0xf]
          %v863 = vld [vmem:[%s434 + $0x3c] sm:$0xf]
          %v864 = vld [vmem:[%s434 + $0x40] sm:$0xf]
          %v865 = vld [vmem:[%s434 + $0x44] sm:$0xf]
          %v866 = vld [vmem:[%s434 + $0x48] sm:$0xf]
          %v867 = vld [vmem:[%s434 + $0x4c] sm:$0xf]
          %v868 = vld [vmem:[%s434 + $0x50] sm:$0xf]
          %v869 = vld [vmem:[%s434 + $0x54] sm:$0xf]
          %v870 = vld [vmem:[%s434 + $0x58] sm:$0xf]
          %v871 = vld [vmem:[%s434 + $0x5c] sm:$0xf]
          %v872 = vld [vmem:[%s434 + $0x60] sm:$0xf]
          %v873 = vld [vmem:[%s434 + $0x64] sm:$0xf]
          %v874 = vld [vmem:[%s434 + $0x68] sm:$0xf]
          %v875 = vld [vmem:[%s434 + $0x6c] sm:$0xf]
          %v876 = vld [vmem:[%s434 + $0x70] sm:$0xf]
          %v877 = vld [vmem:[%s434 + $0x74] sm:$0xf]
          %v878 = vld [vmem:[%s434 + $0x78] sm:$0xf]
          %v879 = vld [vmem:[%s434 + $0x7c] sm:$0xf]
          %v880 = vld [vmem:[%s434 + $0x80] sm:$0xf]
          %v881 = vld [vmem:[%s434 + $0x84] sm:$0xf]
          %v882 = vld [vmem:[%s434 + $0x88] sm:$0xf]
          %v883 = vld [vmem:[%s434 + $0x8c] sm:$0xf]
          %v884 = vld [vmem:[%s434 + $0x90] sm:$0xf]
          %v885 = vld [vmem:[%s434 + $0x94] sm:$0xf]
          %v886 = vld [vmem:[%s434 + $0x98] sm:$0xf]
          %v887 = vld [vmem:[%s434 + $0x9c] sm:$0xf]
          %v888 = vld [vmem:[%s434 + $0xa0] sm:$0xf]
          %v889 = vld [vmem:[%s434 + $0xa4] sm:$0xf]
          %v890 = vld [vmem:[%s434 + $0xa8] sm:$0xf]
          %v891 = vld [vmem:[%s434 + $0xac] sm:$0xf]
          %v892 = vld [vmem:[%s434 + $0xb0] sm:$0xf]
          %v893 = vld [vmem:[%s434 + $0xb4] sm:$0xf]
          %v894 = vld [vmem:[%s434 + $0xb8] sm:$0xf]
          %v895 = vld [vmem:[%s434 + $0xbc] sm:$0xf]
          %v896 = vld [vmem:[%s434 + $0xc0] sm:$0xf]
          %v897 = vld [vmem:[%s434 + $0xc4] sm:$0xf]
          %v898 = vld [vmem:[%s434 + $0xc8] sm:$0xf]
          %v899 = vld [vmem:[%s434 + $0xcc] sm:$0xf]
          %v900 = vld [vmem:[%s434 + $0xd0] sm:$0xf]
          %v901 = vld [vmem:[%s434 + $0xd4] sm:$0xf]
          %v902 = vld [vmem:[%s434 + $0xd8] sm:$0xf]
          %v903 = vld [vmem:[%s434 + $0xdc] sm:$0xf]
          %v904 = vld [vmem:[%s434 + $0xe0] sm:$0xf]
          %v905 = vld [vmem:[%s434 + $0xe4] sm:$0xf]
          %v906 = vld [vmem:[%s434 + $0xe8] sm:$0xf]
          %v907 = vld [vmem:[%s434 + $0xec] sm:$0xf]
          %v908 = vld [vmem:[%s434 + $0xf0] sm:$0xf]
          %v909 = vld [vmem:[%s434 + $0xf4] sm:$0xf]
          %v910 = vld [vmem:[%s434 + $0xf8] sm:$0xf]
          %v911 = vld [vmem:[%s434 + $0xfc] sm:$0xf]
          %v976 = vunpack.c.l.b16 %v848
          %v977 = vunpack.c.l.b16 %v849
          %v978 = vunpack.c.l.b16 %v850
          %v979 = vunpack.c.l.b16 %v851
          %v980 = vunpack.c.l.b16 %v852
          %v981 = vunpack.c.l.b16 %v853
          %v982 = vunpack.c.l.b16 %v854
          %v983 = vunpack.c.l.b16 %v855
          %v984 = vunpack.c.l.b16 %v856
          %v985 = vunpack.c.l.b16 %v857
          %v986 = vunpack.c.l.b16 %v858
          %v987 = vunpack.c.l.b16 %v859
          %v988 = vunpack.c.l.b16 %v860
          %v989 = vunpack.c.l.b16 %v861
          %v990 = vunpack.c.l.b16 %v862
          %v991 = vunpack.c.l.b16 %v863
          %v992 = vunpack.c.l.b16 %v864
          %v993 = vunpack.c.l.b16 %v865
          %v994 = vunpack.c.l.b16 %v866
          %v995 = vunpack.c.l.b16 %v867
          %v996 = vunpack.c.l.b16 %v868
          %v997 = vunpack.c.l.b16 %v869
          %v998 = vunpack.c.l.b16 %v870
          %v999 = vunpack.c.l.b16 %v871
          %v1000 = vunpack.c.l.b16 %v872
          %v1001 = vunpack.c.l.b16 %v873
          %v1002 = vunpack.c.l.b16 %v874
          %v1003 = vunpack.c.l.b16 %v875
          %v1004 = vunpack.c.l.b16 %v876
          %v1005 = vunpack.c.l.b16 %v877
          %v1006 = vunpack.c.l.b16 %v878
          %v1007 = vunpack.c.l.b16 %v879
          %v1008 = vunpack.c.l.b16 %v880
          %v1009 = vunpack.c.l.b16 %v881
          %v1010 = vunpack.c.l.b16 %v882
          %v1011 = vunpack.c.l.b16 %v883
          %v1012 = vunpack.c.l.b16 %v884
          %v1013 = vunpack.c.l.b16 %v885
          %v1014 = vunpack.c.l.b16 %v886
          %v1015 = vunpack.c.l.b16 %v887
          %v1016 = vunpack.c.l.b16 %v888
          %v1017 = vunpack.c.l.b16 %v889
          %v1018 = vunpack.c.l.b16 %v890
          %v1019 = vunpack.c.l.b16 %v891
          %v1020 = vunpack.c.l.b16 %v892
          %v1021 = vunpack.c.l.b16 %v893
          %v1022 = vunpack.c.l.b16 %v894
          %v1023 = vunpack.c.l.b16 %v895
          %v1024 = vunpack.c.l.b16 %v896
          %v1025 = vunpack.c.l.b16 %v897
          %v1026 = vunpack.c.l.b16 %v898
          %v1027 = vunpack.c.l.b16 %v899
          %v1028 = vunpack.c.l.b16 %v900
          %v1029 = vunpack.c.l.b16 %v901
          %v1030 = vunpack.c.l.b16 %v902
          %v1031 = vunpack.c.l.b16 %v903
          %v1032 = vunpack.c.l.b16 %v904
          %v1033 = vunpack.c.l.b16 %v905
          %v1034 = vunpack.c.l.b16 %v906
          %v1035 = vunpack.c.l.b16 %v907
          %v1036 = vunpack.c.l.b16 %v908
          %v1037 = vunpack.c.l.b16 %v909
          %v1038 = vunpack.c.l.b16 %v910
          %v1039 = vunpack.c.l.b16 %v911
          %v1040 = vpack.c.b16 %v977, %v976
          %v1041 = vpack.c.b16 %v979, %v978
          %v1042 = vpack.c.b16 %v981, %v980
          %v1043 = vpack.c.b16 %v983, %v982
          %v1044 = vpack.c.b16 %v985, %v984
          %v1045 = vpack.c.b16 %v987, %v986
          %v1046 = vpack.c.b16 %v989, %v988
          %v1047 = vpack.c.b16 %v991, %v990
          %v1048 = vpack.c.b16 %v993, %v992
          %v1049 = vpack.c.b16 %v995, %v994
          %v1050 = vpack.c.b16 %v997, %v996
          %v1051 = vpack.c.b16 %v999, %v998
          %v1052 = vpack.c.b16 %v1001, %v1000
          %v1053 = vpack.c.b16 %v1003, %v1002
          %v1054 = vpack.c.b16 %v1005, %v1004
          %v1055 = vpack.c.b16 %v1007, %v1006
          %v1056 = vpack.c.b16 %v1009, %v1008
          %v1057 = vpack.c.b16 %v1011, %v1010
          %v1058 = vpack.c.b16 %v1013, %v1012
          %v1059 = vpack.c.b16 %v1015, %v1014
          %v1060 = vpack.c.b16 %v1017, %v1016
          %v1061 = vpack.c.b16 %v1019, %v1018
          %v1062 = vpack.c.b16 %v1021, %v1020
          %v1063 = vpack.c.b16 %v1023, %v1022
          %v1064 = vpack.c.b16 %v1025, %v1024
          %v1065 = vpack.c.b16 %v1027, %v1026
          %v1066 = vpack.c.b16 %v1029, %v1028
          %v1067 = vpack.c.b16 %v1031, %v1030
          %v1068 = vpack.c.b16 %v1033, %v1032
          %v1069 = vpack.c.b16 %v1035, %v1034
          %v1070 = vpack.c.b16 %v1037, %v1036
          %v1071 = vpack.c.b16 %v1039, %v1038
          %1104 = vmatprep.subr.bf16.mxu0 0
          %1105 = vmatpush1.bf16.msra.mxu0 %v1040
          %1106 = vmatprep.subr.bf16.mxu0 0
          %1107 = vmatpush1.bf16.msra.mxu0 %v1041
          %1108 = vmatprep.subr.bf16.mxu0 0
          %1109 = vmatpush1.bf16.msra.mxu0 %v1042
          %1110 = vmatprep.subr.bf16.mxu0 0
          %1111 = vmatpush1.bf16.msra.mxu0 %v1043
          %1112 = vmatprep.subr.bf16.mxu0 0
          %1113 = vmatpush1.bf16.msra.mxu0 %v1044
          %1114 = vmatprep.subr.bf16.mxu0 0
          %1115 = vmatpush1.bf16.msra.mxu0 %v1045
          %1116 = vmatprep.subr.bf16.mxu0 0
          %1117 = vmatpush1.bf16.msra.mxu0 %v1046
          %1118 = vmatprep.subr.bf16.mxu0 0
          %1119 = vmatpush1.bf16.msra.mxu0 %v1047
          %1120 = vmatprep.subr.bf16.mxu0 0
          %1121 = vmatpush1.bf16.msra.mxu0 %v1048
          %1122 = vmatprep.subr.bf16.mxu0 0
          %1123 = vmatpush1.bf16.msra.mxu0 %v1049
          %1124 = vmatprep.subr.bf16.mxu0 0
          %1125 = vmatpush1.bf16.msra.mxu0 %v1050
          %1126 = vmatprep.subr.bf16.mxu0 0
          %1127 = vmatpush1.bf16.msra.mxu0 %v1051
          %1128 = vmatprep.subr.bf16.mxu0 0
          %1129 = vmatpush1.bf16.msra.mxu0 %v1052
          %1130 = vmatprep.subr.bf16.mxu0 0
          %1131 = vmatpush1.bf16.msra.mxu0 %v1053
          %1132 = vmatprep.subr.bf16.mxu0 0
          %1133 = vmatpush1.bf16.msra.mxu0 %v1054
          %1134 = vmatprep.subr.bf16.mxu0 0
          %1135 = vmatpush1.bf16.msra.mxu0 %v1055
          %1136 = vmatprep.mubr.bf16.mxu0 %v653
          %1137 = vmatmul.mubr.bf16.gmra.mrb[0].mxu0 %v652
          %v1138 = vpop.f32.mrb[0].mxu0
          %v1139 = vadd.f32 0.0, %v1138
          %v1140 = vpop.f32.mrb[0].mxu0
          %v1141 = vpop.f32.mrb[0].mxu0
          %v1142 = vadd.f32 0.0, %v1141
          %v1143 = vpop.f32.mrb[0].mxu0
          %1144 = vmatprep.mubr.bf16.mxu0 %v657
          %1145 = vmatmul.mubr.bf16.gmra.mrb[0].mxu0 %v656
          %v1146 = vpop.f32.mrb[0].mxu0
          %v1147 = vadd.f32 0.0, %v1146
          %v1148 = vpop.f32.mrb[0].mxu0
          %v1149 = vpop.f32.mrb[0].mxu0
          %v1150 = vadd.f32 0.0, %v1149
          %v1151 = vpop.f32.mrb[0].mxu0
          %1152 = vmatprep.mubr.bf16.mxu0 %v661
          %1153 = vmatmul.mubr.bf16.gmra.mrb[0].mxu0 %v660
          %v1154 = vpop.f32.mrb[0].mxu0
          %v1155 = vadd.f32 0.0, %v1154
          %v1156 = vpop.f32.mrb[0].mxu0
          %v1157 = vpop.f32.mrb[0].mxu0
          %v1158 = vadd.f32 0.0, %v1157
          %v1159 = vpop.f32.mrb[0].mxu0
          %1160 = vmatprep.mubr.bf16.mxu0 %v665
          %1161 = vmatmul.mubr.bf16.gmra.mrb[0].mxu0 %v664
          %v1162 = vpop.f32.mrb[0].mxu0
          %v1163 = vadd.f32 0.0, %v1162
          %v1164 = vpop.f32.mrb[0].mxu0
          %v1165 = vpop.f32.mrb[0].mxu0
          %v1166 = vadd.f32 0.0, %v1165
          %v1167 = vpop.f32.mrb[0].mxu0
          %1168 = vmatprep.mubr.bf16.mxu0 %v669
          %1169 = vmatmul.mubr.bf16.gmra.mrb[0].mxu0 %v668
          %v1170 = vpop.f32.mrb[0].mxu0
          %v1171 = vadd.f32 0.0, %v1170
          %v1172 = vpop.f32.mrb[0].mxu0
          %v1173 = vpop.f32.mrb[0].mxu0
          %v1174 = vadd.f32 0.0, %v1173
          %v1175 = vpop.f32.mrb[0].mxu0
          %1176 = vmatprep.mubr.bf16.mxu0 %v673
          %1177 = vmatmul.mubr.bf16.gmra.mrb[0].mxu0 %v672
          %v1178 = vpop.f32.mrb[0].mxu0
          %v1179 = vadd.f32 0.0, %v1178
          %v1180 = vpop.f32.mrb[0].mxu0
          %v1181 = vpop.f32.mrb[0].mxu0
          %v1182 = vadd.f32 0.0, %v1181
          %v1183 = vpop.f32.mrb[0].mxu0
          %1184 = vmatprep.mubr.bf16.mxu0 %v677
          %1185 = vmatmul.mubr.bf16.gmra.mrb[0].mxu0 %v676
          %v1186 = vpop.f32.mrb[0].mxu0
          %v1187 = vadd.f32 0.0, %v1186
          %v1188 = vpop.f32.mrb[0].mxu0
          %v1189 = vpop.f32.mrb[0].mxu0
          %v1190 = vadd.f32 0.0, %v1189
          %v1191 = vpop.f32.mrb[0].mxu0
          %1192 = vmatprep.mubr.bf16.mxu0 %v681
          %1193 = vmatmul.mubr.bf16.gmra.mrb[0].mxu0 %v680
          %v1194 = vpop.f32.mrb[0].mxu0
          %v1195 = vadd.f32 0.0, %v1194
          %v1196 = vpop.f32.mrb[0].mxu0
          %v1197 = vpop.f32.mrb[0].mxu0
          %v1198 = vadd.f32 0.0, %v1197
          %v1199 = vpop.f32.mrb[0].mxu0
          %1200 = vmatprep.mubr.bf16.mxu0 %v685
          %1201 = vmatmul.mubr.bf16.gmra.mrb[0].mxu0 %v684
          %v1202 = vpop.f32.mrb[0].mxu0
          %v1203 = vadd.f32 0.0, %v1202
          %v1204 = vpop.f32.mrb[0].mxu0
          %v1205 = vpop.f32.mrb[0].mxu0
          %v1206 = vadd.f32 0.0, %v1205
          %v1207 = vpop.f32.mrb[0].mxu0
          %1208 = vmatprep.mubr.bf16.mxu0 %v689
          %1209 = vmatmul.mubr.bf16.gmra.mrb[0].mxu0 %v688
          %v1210 = vpop.f32.mrb[0].mxu0
          %v1211 = vadd.f32 0.0, %v1210
          %v1212 = vpop.f32.mrb[0].mxu0
          %v1213 = vpop.f32.mrb[0].mxu0
          %v1214 = vadd.f32 0.0, %v1213
          %v1215 = vpop.f32.mrb[0].mxu0
          %1216 = vmatprep.mubr.bf16.mxu0 %v693
          %1217 = vmatmul.mubr.bf16.gmra.mrb[0].mxu0 %v692
          %v1218 = vpop.f32.mrb[0].mxu0
          %v1219 = vadd.f32 0.0, %v1218
          %v1220 = vpop.f32.mrb[0].mxu0
          %v1221 = vpop.f32.mrb[0].mxu0
          %v1222 = vadd.f32 0.0, %v1221
          %v1223 = vpop.f32.mrb[0].mxu0
          %1224 = vmatprep.mubr.bf16.mxu0 %v697
          %1225 = vmatmul.mubr.bf16.gmra.mrb[0].mxu0 %v696
          %v1226 = vpop.f32.mrb[0].mxu0
          %v1227 = vadd.f32 0.0, %v1226
          %v1228 = vpop.f32.mrb[0].mxu0
          %v1229 = vpop.f32.mrb[0].mxu0
          %v1230 = vadd.f32 0.0, %v1229
          %v1231 = vpop.f32.mrb[0].mxu0
          %1232 = vmatprep.mubr.bf16.mxu0 %v701
          %1233 = vmatmul.mubr.bf16.gmra.mrb[0].mxu0 %v700
          %v1234 = vpop.f32.mrb[0].mxu0
          %v1235 = vadd.f32 0.0, %v1234
          %v1236 = vpop.f32.mrb[0].mxu0
          %v1237 = vpop.f32.mrb[0].mxu0
          %v1238 = vadd.f32 0.0, %v1237
          %v1239 = vpop.f32.mrb[0].mxu0
          %1240 = vmatprep.mubr.bf16.mxu0 %v705
          %1241 = vmatmul.mubr.bf16.gmra.mrb[0].mxu0 %v704
          %v1242 = vpop.f32.mrb[0].mxu0
          %v1243 = vadd.f32 0.0, %v1242
          %v1244 = vpop.f32.mrb[0].mxu0
          %v1245 = vpop.f32.mrb[0].mxu0
          %v1246 = vadd.f32 0.0, %v1245
          %v1247 = vpop.f32.mrb[0].mxu0
          %1248 = vmatprep.mubr.bf16.mxu0 %v709
          %1249 = vmatmul.mubr.bf16.gmra.mrb[0].mxu0 %v708
          %v1250 = vpop.f32.mrb[0].mxu0
          %v1251 = vadd.f32 0.0, %v1250
          %v1252 = vpop.f32.mrb[0].mxu0
          %v1253 = vpop.f32.mrb[0].mxu0
          %v1254 = vadd.f32 0.0, %v1253
          %v1255 = vpop.f32.mrb[0].mxu0
          %1256 = vmatprep.mubr.bf16.mxu0 %v713
          %1257 = vmatmul.mubr.bf16.gmra.mrb[0].mxu0 %v712
          %v1258 = vpop.f32.mrb[0].mxu0
          %v1259 = vadd.f32 0.0, %v1258
          %v1260 = vpop.f32.mrb[0].mxu0
          %v1261 = vpop.f32.mrb[0].mxu0
          %v1262 = vadd.f32 0.0, %v1261
          %v1263 = vpop.f32.mrb[0].mxu0
          %1264 = vmatprep.mubr.bf16.mxu0 %v717
          %1265 = vmatmul.mubr.bf16.gmra.mrb[0].mxu0 %v716
          %v1266 = vpop.f32.mrb[0].mxu0
          %v1267 = vadd.f32 0.0, %v1266
          %v1268 = vpop.f32.mrb[0].mxu0
          %v1269 = vpop.f32.mrb[0].mxu0
          %v1270 = vadd.f32 0.0, %v1269
          %v1271 = vpop.f32.mrb[0].mxu0
          %1272 = vmatprep.mubr.bf16.mxu0 %v721
          %1273 = vmatmul.mubr.bf16.gmra.mrb[0].mxu0 %v720
          %v1274 = vpop.f32.mrb[0].mxu0
          %v1275 = vadd.f32 0.0, %v1274
          %v1276 = vpop.f32.mrb[0].mxu0
          %v1277 = vpop.f32.mrb[0].mxu0
          %v1278 = vadd.f32 0.0, %v1277
          %v1279 = vpop.f32.mrb[0].mxu0
          %1280 = vmatprep.mubr.bf16.mxu0 %v725
          %1281 = vmatmul.mubr.bf16.gmra.mrb[0].mxu0 %v724
          %v1282 = vpop.f32.mrb[0].mxu0
          %v1283 = vadd.f32 0.0, %v1282
          %v1284 = vpop.f32.mrb[0].mxu0
          %v1285 = vpop.f32.mrb[0].mxu0
          %v1286 = vadd.f32 0.0, %v1285
          %v1287 = vpop.f32.mrb[0].mxu0
          %1288 = vmatprep.mubr.bf16.mxu0 %v729
          %1289 = vmatmul.mubr.bf16.gmra.mrb[0].mxu0 %v728
          %v1290 = vpop.f32.mrb[0].mxu0
          %v1291 = vadd.f32 0.0, %v1290
          %v1292 = vpop.f32.mrb[0].mxu0
          %v1293 = vpop.f32.mrb[0].mxu0
          %v1294 = vadd.f32 0.0, %v1293
          %v1295 = vpop.f32.mrb[0].mxu0
          %1296 = vmatprep.mubr.bf16.mxu0 %v733
          %1297 = vmatmul.mubr.bf16.gmra.mrb[0].mxu0 %v732
          %v1298 = vpop.f32.mrb[0].mxu0
          %v1299 = vadd.f32 0.0, %v1298
          %v1300 = vpop.f32.mrb[0].mxu0
          %v1301 = vpop.f32.mrb[0].mxu0
          %v1302 = vadd.f32 0.0, %v1301
          %v1303 = vpop.f32.mrb[0].mxu0
          %1304 = vmatprep.mubr.bf16.mxu0 %v737
          %1305 = vmatmul.mubr.bf16.gmra.mrb[0].mxu0 %v736
          %v1306 = vpop.f32.mrb[0].mxu0
          %v1307 = vadd.f32 0.0, %v1306
          %v1308 = vpop.f32.mrb[0].mxu0
          %v1309 = vpop.f32.mrb[0].mxu0
          %v1310 = vadd.f32 0.0, %v1309
          %v1311 = vpop.f32.mrb[0].mxu0
          %1312 = vmatprep.mubr.bf16.mxu0 %v741
          %1313 = vmatmul.mubr.bf16.gmra.mrb[0].mxu0 %v740
          %v1314 = vpop.f32.mrb[0].mxu0
          %v1315 = vadd.f32 0.0, %v1314
          %v1316 = vpop.f32.mrb[0].mxu0
          %v1317 = vpop.f32.mrb[0].mxu0
          %v1318 = vadd.f32 0.0, %v1317
          %v1319 = vpop.f32.mrb[0].mxu0
          %1320 = vmatprep.mubr.bf16.mxu0 %v745
          %1321 = vmatmul.mubr.bf16.gmra.mrb[0].mxu0 %v744
          %v1322 = vpop.f32.mrb[0].mxu0
          %v1323 = vadd.f32 0.0, %v1322
          %v1324 = vpop.f32.mrb[0].mxu0
          %v1325 = vpop.f32.mrb[0].mxu0
          %v1326 = vadd.f32 0.0, %v1325
          %v1327 = vpop.f32.mrb[0].mxu0
          %1328 = vmatprep.mubr.bf16.mxu0 %v749
          %1329 = vmatmul.mubr.bf16.gmra.mrb[0].mxu0 %v748
          %v1330 = vpop.f32.mrb[0].mxu0
          %v1331 = vadd.f32 0.0, %v1330
          %v1332 = vpop.f32.mrb[0].mxu0
          %v1333 = vpop.f32.mrb[0].mxu0
          %v1334 = vadd.f32 0.0, %v1333
          %v1335 = vpop.f32.mrb[0].mxu0
          %1336 = vmatprep.mubr.bf16.mxu0 %v753
          %1337 = vmatmul.mubr.bf16.gmra.mrb[0].mxu0 %v752
          %v1338 = vpop.f32.mrb[0].mxu0
          %v1339 = vadd.f32 0.0, %v1338
          %v1340 = vpop.f32.mrb[0].mxu0
          %v1341 = vpop.f32.mrb[0].mxu0
          %v1342 = vadd.f32 0.0, %v1341
          %v1343 = vpop.f32.mrb[0].mxu0
          %1344 = vmatprep.mubr.bf16.mxu0 %v757
          %1345 = vmatmul.mubr.bf16.gmra.mrb[0].mxu0 %v756
          %v1346 = vpop.f32.mrb[0].mxu0
          %v1347 = vadd.f32 0.0, %v1346
          %v1348 = vpop.f32.mrb[0].mxu0
          %v1349 = vpop.f32.mrb[0].mxu0
          %v1350 = vadd.f32 0.0, %v1349
          %v1351 = vpop.f32.mrb[0].mxu0
          %1352 = vmatprep.mubr.bf16.mxu0 %v761
          %1353 = vmatmul.mubr.bf16.gmra.mrb[0].mxu0 %v760
          %v1354 = vpop.f32.mrb[0].mxu0
          %v1355 = vadd.f32 0.0, %v1354
          %v1356 = vpop.f32.mrb[0].mxu0
          %v1357 = vpop.f32.mrb[0].mxu0
          %v1358 = vadd.f32 0.0, %v1357
          %v1359 = vpop.f32.mrb[0].mxu0
          %1360 = vmatprep.mubr.bf16.mxu0 %v765
          %1361 = vmatmul.mubr.bf16.gmra.mrb[0].mxu0 %v764
          %v1362 = vpop.f32.mrb[0].mxu0
          %v1363 = vadd.f32 0.0, %v1362
          %v1364 = vpop.f32.mrb[0].mxu0
          %v1365 = vpop.f32.mrb[0].mxu0
          %v1366 = vadd.f32 0.0, %v1365
          %v1367 = vpop.f32.mrb[0].mxu0
          %1368 = vmatprep.mubr.bf16.mxu0 %v769
          %1369 = vmatmul.mubr.bf16.gmra.mrb[0].mxu0 %v768
          %v1370 = vpop.f32.mrb[0].mxu0
          %v1371 = vadd.f32 0.0, %v1370
          %v1372 = vpop.f32.mrb[0].mxu0
          %v1373 = vpop.f32.mrb[0].mxu0
          %v1374 = vadd.f32 0.0, %v1373
          %v1375 = vpop.f32.mrb[0].mxu0
          %1376 = vmatprep.mubr.bf16.mxu0 %v773
          %1377 = vmatmul.mubr.bf16.gmra.mrb[0].mxu0 %v772
          %v1378 = vpop.f32.mrb[0].mxu0
          %v1379 = vadd.f32 0.0, %v1378
          %v1380 = vpop.f32.mrb[0].mxu0
          %v1381 = vpop.f32.mrb[0].mxu0
          %v1382 = vadd.f32 0.0, %v1381
          %v1383 = vpop.f32.mrb[0].mxu0
          %1384 = vmatprep.mubr.bf16.mxu0 %v777
          %1385 = vmatmul.mubr.bf16.gmra.mrb[0].mxu0 %v776
          %v1386 = vpop.f32.mrb[0].mxu0
          %v1387 = vadd.f32 0.0, %v1386
          %v1388 = vpop.f32.mrb[0].mxu0
          %v1389 = vpop.f32.mrb[0].mxu0
          %v1390 = vadd.f32 0.0, %v1389
          %v1391 = vpop.f32.mrb[0].mxu0
          %1392 = vdwg.mxu0
          %1393 = vmatprep.subr.bf16.mxu0 0
          %1394 = vmatpush1.bf16.msra.mxu0 %v1056
          %1395 = vmatprep.subr.bf16.mxu0 0
          %1396 = vmatpush1.bf16.msra.mxu0 %v1057
          %1397 = vmatprep.subr.bf16.mxu0 0
          %1398 = vmatpush1.bf16.msra.mxu0 %v1058
          %1399 = vmatprep.subr.bf16.mxu0 0
          %1400 = vmatpush1.bf16.msra.mxu0 %v1059
          %1401 = vmatprep.subr.bf16.mxu0 0
          %1402 = vmatpush1.bf16.msra.mxu0 %v1060
          %1403 = vmatprep.subr.bf16.mxu0 0
          %1404 = vmatpush1.bf16.msra.mxu0 %v1061
          %1405 = vmatprep.subr.bf16.mxu0 0
          %1406 = vmatpush1.bf16.msra.mxu0 %v1062
          %1407 = vmatprep.subr.bf16.mxu0 0
          %1408 = vmatpush1.bf16.msra.mxu0 %v1063
          %1409 = vmatprep.subr.bf16.mxu0 0
          %1410 = vmatpush1.bf16.msra.mxu0 %v1064
          %1411 = vmatprep.subr.bf16.mxu0 0
          %1412 = vmatpush1.bf16.msra.mxu0 %v1065
          %1413 = vmatprep.subr.bf16.mxu0 0
          %1414 = vmatpush1.bf16.msra.mxu0 %v1066
          %1415 = vmatprep.subr.bf16.mxu0 0
          %1416 = vmatpush1.bf16.msra.mxu0 %v1067
          %1417 = vmatprep.subr.bf16.mxu0 0
          %1418 = vmatpush1.bf16.msra.mxu0 %v1068
          %1419 = vmatprep.subr.bf16.mxu0 0
          %1420 = vmatpush1.bf16.msra.mxu0 %v1069
          %1421 = vmatprep.subr.bf16.mxu0 0
          %1422 = vmatpush1.bf16.msra.mxu0 %v1070
          %1423 = vmatprep.subr.bf16.mxu0 0
          %1424 = vmatpush1.bf16.msra.mxu0 %v1071
          %1425 = vmatprep.mubr.bf16.mxu0 %v655
          %1426 = vmatmul.mubr.bf16.gmra.mrb[0].mxu0 %v654
          %v1427 = vpop.f32.mrb[0].mxu0
          %v1428 = vadd.f32 %v1139, %v1427
          %v1429 = vpop.f32.mrb[0].mxu0
          %v1430 = vpop.f32.mrb[0].mxu0
          %v1431 = vadd.f32 %v1142, %v1430
          %v1432 = vpop.f32.mrb[0].mxu0
          %1433 = vmatprep.mubr.bf16.mxu0 %v659
          %1434 = vmatmul.mubr.bf16.gmra.mrb[0].mxu0 %v658
          %v1435 = vpop.f32.mrb[0].mxu0
          %v1436 = vadd.f32 %v1147, %v1435
          %v1437 = vpop.f32.mrb[0].mxu0
          %v1438 = vpop.f32.mrb[0].mxu0
          %v1439 = vadd.f32 %v1150, %v1438
          %v1440 = vpop.f32.mrb[0].mxu0
          %1441 = vmatprep.mubr.bf16.mxu0 %v663
          %1442 = vmatmul.mubr.bf16.gmra.mrb[0].mxu0 %v662
          %v1443 = vpop.f32.mrb[0].mxu0
          %v1444 = vadd.f32 %v1155, %v1443
          %v1445 = vpop.f32.mrb[0].mxu0
          %v1446 = vpop.f32.mrb[0].mxu0
          %v1447 = vadd.f32 %v1158, %v1446
          %v1448 = vpop.f32.mrb[0].mxu0
          %1449 = vmatprep.mubr.bf16.mxu0 %v667
          %1450 = vmatmul.mubr.bf16.gmra.mrb[0].mxu0 %v666
          %v1451 = vpop.f32.mrb[0].mxu0
          %v1452 = vadd.f32 %v1163, %v1451
          %v1453 = vpop.f32.mrb[0].mxu0
          %v1454 = vpop.f32.mrb[0].mxu0
          %v1455 = vadd.f32 %v1166, %v1454
          %v1456 = vpop.f32.mrb[0].mxu0
          %1457 = vmatprep.mubr.bf16.mxu0 %v671
          %1458 = vmatmul.mubr.bf16.gmra.mrb[0].mxu0 %v670
          %v1459 = vpop.f32.mrb[0].mxu0
          %v1460 = vadd.f32 %v1171, %v1459
          %v1461 = vpop.f32.mrb[0].mxu0
          %v1462 = vpop.f32.mrb[0].mxu0
          %v1463 = vadd.f32 %v1174, %v1462
          %v1464 = vpop.f32.mrb[0].mxu0
          %1465 = vmatprep.mubr.bf16.mxu0 %v675
          %1466 = vmatmul.mubr.bf16.gmra.mrb[0].mxu0 %v674
          %v1467 = vpop.f32.mrb[0].mxu0
          %v1468 = vadd.f32 %v1179, %v1467
          %v1469 = vpop.f32.mrb[0].mxu0
          %v1470 = vpop.f32.mrb[0].mxu0
          %v1471 = vadd.f32 %v1182, %v1470
          %v1472 = vpop.f32.mrb[0].mxu0
          %1473 = vmatprep.mubr.bf16.mxu0 %v679
          %1474 = vmatmul.mubr.bf16.gmra.mrb[0].mxu0 %v678
          %v1475 = vpop.f32.mrb[0].mxu0
          %v1476 = vadd.f32 %v1187, %v1475
          %v1477 = vpop.f32.mrb[0].mxu0
          %v1478 = vpop.f32.mrb[0].mxu0
          %v1479 = vadd.f32 %v1190, %v1478
          %v1480 = vpop.f32.mrb[0].mxu0
          %1481 = vmatprep.mubr.bf16.mxu0 %v683
          %1482 = vmatmul.mubr.bf16.gmra.mrb[0].mxu0 %v682
          %v1483 = vpop.f32.mrb[0].mxu0
          %v1484 = vadd.f32 %v1195, %v1483
          %v1485 = vpop.f32.mrb[0].mxu0
          %v1486 = vpop.f32.mrb[0].mxu0
          %v1487 = vadd.f32 %v1198, %v1486
          %v1488 = vpop.f32.mrb[0].mxu0
          %1489 = vmatprep.mubr.bf16.mxu0 %v687
          %1490 = vmatmul.mubr.bf16.gmra.mrb[0].mxu0 %v686
          %v1491 = vpop.f32.mrb[0].mxu0
          %v1492 = vadd.f32 %v1203, %v1491
          %v1493 = vpop.f32.mrb[0].mxu0
          %v1494 = vpop.f32.mrb[0].mxu0
          %v1495 = vadd.f32 %v1206, %v1494
          %v1496 = vpop.f32.mrb[0].mxu0
          %1497 = vmatprep.mubr.bf16.mxu0 %v691
          %1498 = vmatmul.mubr.bf16.gmra.mrb[0].mxu0 %v690
          %v1499 = vpop.f32.mrb[0].mxu0
          %v1500 = vadd.f32 %v1211, %v1499
          %v1501 = vpop.f32.mrb[0].mxu0
          %v1502 = vpop.f32.mrb[0].mxu0
          %v1503 = vadd.f32 %v1214, %v1502
          %v1504 = vpop.f32.mrb[0].mxu0
          %1505 = vmatprep.mubr.bf16.mxu0 %v695
          %1506 = vmatmul.mubr.bf16.gmra.mrb[0].mxu0 %v694
          %v1507 = vpop.f32.mrb[0].mxu0
          %v1508 = vadd.f32 %v1219, %v1507
          %v1509 = vpop.f32.mrb[0].mxu0
          %v1510 = vpop.f32.mrb[0].mxu0
          %v1511 = vadd.f32 %v1222, %v1510
          %v1512 = vpop.f32.mrb[0].mxu0
          %1513 = vmatprep.mubr.bf16.mxu0 %v699
          %1514 = vmatmul.mubr.bf16.gmra.mrb[0].mxu0 %v698
          %v1515 = vpop.f32.mrb[0].mxu0
          %v1516 = vadd.f32 %v1227, %v1515
          %v1517 = vpop.f32.mrb[0].mxu0
          %v1518 = vpop.f32.mrb[0].mxu0
          %v1519 = vadd.f32 %v1230, %v1518
          %v1520 = vpop.f32.mrb[0].mxu0
          %1521 = vmatprep.mubr.bf16.mxu0 %v703
          %1522 = vmatmul.mubr.bf16.gmra.mrb[0].mxu0 %v702
          %v1523 = vpop.f32.mrb[0].mxu0
          %v1524 = vadd.f32 %v1235, %v1523
          %v1525 = vpop.f32.mrb[0].mxu0
          %v1526 = vpop.f32.mrb[0].mxu0
          %v1527 = vadd.f32 %v1238, %v1526
          %v1528 = vpop.f32.mrb[0].mxu0
          %1529 = vmatprep.mubr.bf16.mxu0 %v707
          %1530 = vmatmul.mubr.bf16.gmra.mrb[0].mxu0 %v706
          %v1531 = vpop.f32.mrb[0].mxu0
          %v1532 = vadd.f32 %v1243, %v1531
          %v1533 = vpop.f32.mrb[0].mxu0
          %v1534 = vpop.f32.mrb[0].mxu0
          %v1535 = vadd.f32 %v1246, %v1534
          %v1536 = vpop.f32.mrb[0].mxu0
          %1537 = vmatprep.mubr.bf16.mxu0 %v711
          %1538 = vmatmul.mubr.bf16.gmra.mrb[0].mxu0 %v710
          %v1539 = vpop.f32.mrb[0].mxu0
          %v1540 = vadd.f32 %v1251, %v1539
          %v1541 = vpop.f32.mrb[0].mxu0
          %v1542 = vpop.f32.mrb[0].mxu0
          %v1543 = vadd.f32 %v1254, %v1542
          %v1544 = vpop.f32.mrb[0].mxu0
          %1545 = vmatprep.mubr.bf16.mxu0 %v715
          %1546 = vmatmul.mubr.bf16.gmra.mrb[0].mxu0 %v714
          %v1547 = vpop.f32.mrb[0].mxu0
          %v1548 = vadd.f32 %v1259, %v1547
          %v1549 = vpop.f32.mrb[0].mxu0
          %v1550 = vpop.f32.mrb[0].mxu0
          %v1551 = vadd.f32 %v1262, %v1550
          %v1552 = vpop.f32.mrb[0].mxu0
          %1553 = vmatprep.mubr.bf16.mxu0 %v719
          %1554 = vmatmul.mubr.bf16.gmra.mrb[0].mxu0 %v718
          %v1555 = vpop.f32.mrb[0].mxu0
          %v1556 = vadd.f32 %v1267, %v1555
          %v1557 = vpop.f32.mrb[0].mxu0
          %v1558 = vpop.f32.mrb[0].mxu0
          %v1559 = vadd.f32 %v1270, %v1558
          %v1560 = vpop.f32.mrb[0].mxu0
          %1561 = vmatprep.mubr.bf16.mxu0 %v723
          %1562 = vmatmul.mubr.bf16.gmra.mrb[0].mxu0 %v722
          %v1563 = vpop.f32.mrb[0].mxu0
          %v1564 = vadd.f32 %v1275, %v1563
          %v1565 = vpop.f32.mrb[0].mxu0
          %v1566 = vpop.f32.mrb[0].mxu0
          %v1567 = vadd.f32 %v1278, %v1566
          %v1568 = vpop.f32.mrb[0].mxu0
          %1569 = vmatprep.mubr.bf16.mxu0 %v727
          %1570 = vmatmul.mubr.bf16.gmra.mrb[0].mxu0 %v726
          %v1571 = vpop.f32.mrb[0].mxu0
          %v1572 = vadd.f32 %v1283, %v1571
          %v1573 = vpop.f32.mrb[0].mxu0
          %v1574 = vpop.f32.mrb[0].mxu0
          %v1575 = vadd.f32 %v1286, %v1574
          %v1576 = vpop.f32.mrb[0].mxu0
          %1577 = vmatprep.mubr.bf16.mxu0 %v731
          %1578 = vmatmul.mubr.bf16.gmra.mrb[0].mxu0 %v730
          %v1579 = vpop.f32.mrb[0].mxu0
          %v1580 = vadd.f32 %v1291, %v1579
          %v1581 = vpop.f32.mrb[0].mxu0
          %v1582 = vpop.f32.mrb[0].mxu0
          %v1583 = vadd.f32 %v1294, %v1582
          %v1584 = vpop.f32.mrb[0].mxu0
          %1585 = vmatprep.mubr.bf16.mxu0 %v735
          %1586 = vmatmul.mubr.bf16.gmra.mrb[0].mxu0 %v734
          %v1587 = vpop.f32.mrb[0].mxu0
          %v1588 = vadd.f32 %v1299, %v1587
          %v1589 = vpop.f32.mrb[0].mxu0
          %v1590 = vpop.f32.mrb[0].mxu0
          %v1591 = vadd.f32 %v1302, %v1590
          %v1592 = vpop.f32.mrb[0].mxu0
          %1593 = vmatprep.mubr.bf16.mxu0 %v739
          %1594 = vmatmul.mubr.bf16.gmra.mrb[0].mxu0 %v738
          %v1595 = vpop.f32.mrb[0].mxu0
          %v1596 = vadd.f32 %v1307, %v1595
          %v1597 = vpop.f32.mrb[0].mxu0
          %v1598 = vpop.f32.mrb[0].mxu0
          %v1599 = vadd.f32 %v1310, %v1598
          %v1600 = vpop.f32.mrb[0].mxu0
          %1601 = vmatprep.mubr.bf16.mxu0 %v743
          %1602 = vmatmul.mubr.bf16.gmra.mrb[0].mxu0 %v742
          %v1603 = vpop.f32.mrb[0].mxu0
          %v1604 = vadd.f32 %v1315, %v1603
          %v1605 = vpop.f32.mrb[0].mxu0
          %v1606 = vpop.f32.mrb[0].mxu0
          %v1607 = vadd.f32 %v1318, %v1606
          %v1608 = vpop.f32.mrb[0].mxu0
          %1609 = vmatprep.mubr.bf16.mxu0 %v747
          %1610 = vmatmul.mubr.bf16.gmra.mrb[0].mxu0 %v746
          %v1611 = vpop.f32.mrb[0].mxu0
          %v1612 = vadd.f32 %v1323, %v1611
          %v1613 = vpop.f32.mrb[0].mxu0
          %v1614 = vpop.f32.mrb[0].mxu0
          %v1615 = vadd.f32 %v1326, %v1614
          %v1616 = vpop.f32.mrb[0].mxu0
          %1617 = vmatprep.mubr.bf16.mxu0 %v751
          %1618 = vmatmul.mubr.bf16.gmra.mrb[0].mxu0 %v750
          %v1619 = vpop.f32.mrb[0].mxu0
          %v1620 = vadd.f32 %v1331, %v1619
          %v1621 = vpop.f32.mrb[0].mxu0
          %v1622 = vpop.f32.mrb[0].mxu0
          %v1623 = vadd.f32 %v1334, %v1622
          %v1624 = vpop.f32.mrb[0].mxu0
          %1625 = vmatprep.mubr.bf16.mxu0 %v755
          %1626 = vmatmul.mubr.bf16.gmra.mrb[0].mxu0 %v754
          %v1627 = vpop.f32.mrb[0].mxu0
          %v1628 = vadd.f32 %v1339, %v1627
          %v1629 = vpop.f32.mrb[0].mxu0
          %v1630 = vpop.f32.mrb[0].mxu0
          %v1631 = vadd.f32 %v1342, %v1630
          %v1632 = vpop.f32.mrb[0].mxu0
          %1633 = vmatprep.mubr.bf16.mxu0 %v759
          %1634 = vmatmul.mubr.bf16.gmra.mrb[0].mxu0 %v758
          %v1635 = vpop.f32.mrb[0].mxu0
          %v1636 = vadd.f32 %v1347, %v1635
          %v1637 = vpop.f32.mrb[0].mxu0
          %v1638 = vpop.f32.mrb[0].mxu0
          %v1639 = vadd.f32 %v1350, %v1638
          %v1640 = vpop.f32.mrb[0].mxu0
          %1641 = vmatprep.mubr.bf16.mxu0 %v763
          %1642 = vmatmul.mubr.bf16.gmra.mrb[0].mxu0 %v762
          %v1643 = vpop.f32.mrb[0].mxu0
          %v1644 = vadd.f32 %v1355, %v1643
          %v1645 = vpop.f32.mrb[0].mxu0
          %v1646 = vpop.f32.mrb[0].mxu0
          %v1647 = vadd.f32 %v1358, %v1646
          %v1648 = vpop.f32.mrb[0].mxu0
          %1649 = vmatprep.mubr.bf16.mxu0 %v767
          %1650 = vmatmul.mubr.bf16.gmra.mrb[0].mxu0 %v766
          %v1651 = vpop.f32.mrb[0].mxu0
          %v1652 = vadd.f32 %v1363, %v1651
          %v1653 = vpop.f32.mrb[0].mxu0
          %v1654 = vpop.f32.mrb[0].mxu0
          %v1655 = vadd.f32 %v1366, %v1654
          %v1656 = vpop.f32.mrb[0].mxu0
          %1657 = vmatprep.mubr.bf16.mxu0 %v771
          %1658 = vmatmul.mubr.bf16.gmra.mrb[0].mxu0 %v770
          %v1659 = vpop.f32.mrb[0].mxu0
          %v1660 = vadd.f32 %v1371, %v1659
          %v1661 = vpop.f32.mrb[0].mxu0
          %v1662 = vpop.f32.mrb[0].mxu0
          %v1663 = vadd.f32 %v1374, %v1662
          %v1664 = vpop.f32.mrb[0].mxu0
          %1665 = vmatprep.mubr.bf16.mxu0 %v775
          %1666 = vmatmul.mubr.bf16.gmra.mrb[0].mxu0 %v774
          %v1667 = vpop.f32.mrb[0].mxu0
          %v1668 = vadd.f32 %v1379, %v1667
          %v1669 = vpop.f32.mrb[0].mxu0
          %v1670 = vpop.f32.mrb[0].mxu0
          %v1671 = vadd.f32 %v1382, %v1670
          %v1672 = vpop.f32.mrb[0].mxu0
          %1673 = vmatprep.mubr.bf16.mxu0 %v779
          %1674 = vmatmul.mubr.bf16.gmra.mrb[0].mxu0 %v778
          %v1675 = vpop.f32.mrb[0].mxu0
          %v1676 = vadd.f32 %v1387, %v1675
          %v1677 = vpop.f32.mrb[0].mxu0
          %v1678 = vpop.f32.mrb[0].mxu0
          %v1679 = vadd.f32 %v1390, %v1678
          %v1680 = vpop.f32.mrb[0].mxu0
          %1681 = vdwg.mxu0
          %v1682 = vadd.f32 %v784, %v1428
          %v1683 = vadd.f32 %v785, %v1431
          %v1684 = vadd.f32 %v786, %v1436
          %v1685 = vadd.f32 %v787, %v1439
          %v1686 = vadd.f32 %v788, %v1444
          %v1687 = vadd.f32 %v789, %v1447
          %v1688 = vadd.f32 %v790, %v1452
          %v1689 = vadd.f32 %v791, %v1455
          %v1690 = vadd.f32 %v792, %v1460
          %v1691 = vadd.f32 %v793, %v1463
          %v1692 = vadd.f32 %v794, %v1468
          %v1693 = vadd.f32 %v795, %v1471
          %v1694 = vadd.f32 %v796, %v1476
          %v1695 = vadd.f32 %v797, %v1479
          %v1696 = vadd.f32 %v798, %v1484
          %v1697 = vadd.f32 %v799, %v1487
          %v1698 = vadd.f32 %v800, %v1492
          %v1699 = vadd.f32 %v801, %v1495
          %v1700 = vadd.f32 %v802, %v1500
          %v1701 = vadd.f32 %v803, %v1503
          %v1702 = vadd.f32 %v804, %v1508
          %v1703 = vadd.f32 %v805, %v1511
          %v1704 = vadd.f32 %v806, %v1516
          %v1705 = vadd.f32 %v807, %v1519
          %v1706 = vadd.f32 %v808, %v1524
          %v1707 = vadd.f32 %v809, %v1527
          %v1708 = vadd.f32 %v810, %v1532
          %v1709 = vadd.f32 %v811, %v1535
          %v1710 = vadd.f32 %v812, %v1540
          %v1711 = vadd.f32 %v813, %v1543
          %v1712 = vadd.f32 %v814, %v1548
          %v1713 = vadd.f32 %v815, %v1551
          %v1714 = vadd.f32 %v816, %v1556
          %v1715 = vadd.f32 %v817, %v1559
          %v1716 = vadd.f32 %v818, %v1564
          %v1717 = vadd.f32 %v819, %v1567
          %v1718 = vadd.f32 %v820, %v1572
          %v1719 = vadd.f32 %v821, %v1575
          %v1720 = vadd.f32 %v822, %v1580
          %v1721 = vadd.f32 %v823, %v1583
          %v1722 = vadd.f32 %v824, %v1588
          %v1723 = vadd.f32 %v825, %v1591
          %v1724 = vadd.f32 %v826, %v1596
          %v1725 = vadd.f32 %v827, %v1599
          %v1726 = vadd.f32 %v828, %v1604
          %v1727 = vadd.f32 %v829, %v1607
          %v1728 = vadd.f32 %v830, %v1612
          %v1729 = vadd.f32 %v831, %v1615
          %v1730 = vadd.f32 %v832, %v1620
          %v1731 = vadd.f32 %v833, %v1623
          %v1732 = vadd.f32 %v834, %v1628
          %v1733 = vadd.f32 %v835, %v1631
          %v1734 = vadd.f32 %v836, %v1636
          %v1735 = vadd.f32 %v837, %v1639
          %v1736 = vadd.f32 %v838, %v1644
          %v1737 = vadd.f32 %v839, %v1647
          %v1738 = vadd.f32 %v840, %v1652
          %v1739 = vadd.f32 %v841, %v1655
          %v1740 = vadd.f32 %v842, %v1660
          %v1741 = vadd.f32 %v843, %v1663
          %v1742 = vadd.f32 %v844, %v1668
          %v1743 = vadd.f32 %v845, %v1671
          %v1744 = vadd.f32 %v846, %v1676
          %v1745 = vadd.f32 %v847, %v1679
          %1746 = vst [vmem:[#allocation2] sm:$0xff] %v1682
          %1747 = vst [vmem:[#allocation2 + $0x8] sm:$0xff] %v1683
          %1748 = vst [vmem:[#allocation2 + $0x10] sm:$0xff] %v1684
          %1749 = vst [vmem:[#allocation2 + $0x18] sm:$0xff] %v1685
          %1750 = vst [vmem:[#allocation2 + $0x20] sm:$0xff] %v1686
          %1751 = vst [vmem:[#allocation2 + $0x28] sm:$0xff] %v1687
          %1752 = vst [vmem:[#allocation2 + $0x30] sm:$0xff] %v1688
          %1753 = vst [vmem:[#allocation2 + $0x38] sm:$0xff] %v1689
          %1754 = vst [vmem:[#allocation2 + $0x40] sm:$0xff] %v1690
          %1755 = vst [vmem:[#allocation2 + $0x48] sm:$0xff] %v1691
          %1756 = vst [vmem:[#allocation2 + $0x50] sm:$0xff] %v1692
          %1757 = vst [vmem:[#allocation2 + $0x58] sm:$0xff] %v1693
          %1758 = vst [vmem:[#allocation2 + $0x60] sm:$0xff] %v1694
          %1759 = vst [vmem:[#allocation2 + $0x68] sm:$0xff] %v1695
          %1760 = vst [vmem:[#allocation2 + $0x70] sm:$0xff] %v1696
          %1761 = vst [vmem:[#allocation2 + $0x78] sm:$0xff] %v1697
          %1762 = vst [vmem:[#allocation2 + $0x80] sm:$0xff] %v1698
          %1763 = vst [vmem:[#allocation2 + $0x88] sm:$0xff] %v1699
          %1764 = vst [vmem:[#allocation2 + $0x90] sm:$0xff] %v1700
          %1765 = vst [vmem:[#allocation2 + $0x98] sm:$0xff] %v1701
          %1766 = vst [vmem:[#allocation2 + $0xa0] sm:$0xff] %v1702
          %1767 = vst [vmem:[#allocation2 + $0xa8] sm:$0xff] %v1703
          %1768 = vst [vmem:[#allocation2 + $0xb0] sm:$0xff] %v1704
          %1769 = vst [vmem:[#allocation2 + $0xb8] sm:$0xff] %v1705
          %1770 = vst [vmem:[#allocation2 + $0xc0] sm:$0xff] %v1706
          %1771 = vst [vmem:[#allocation2 + $0xc8] sm:$0xff] %v1707
          %1772 = vst [vmem:[#allocation2 + $0xd0] sm:$0xff] %v1708
          %1773 = vst [vmem:[#allocation2 + $0xd8] sm:$0xff] %v1709
          %1774 = vst [vmem:[#allocation2 + $0xe0] sm:$0xff] %v1710
          %1775 = vst [vmem:[#allocation2 + $0xe8] sm:$0xff] %v1711
          %1776 = vst [vmem:[#allocation2 + $0xf0] sm:$0xff] %v1712
          %1777 = vst [vmem:[#allocation2 + $0xf8] sm:$0xff] %v1713
          %1778 = vst [vmem:[#allocation2 + $0x100] sm:$0xff] %v1714
          %1779 = vst [vmem:[#allocation2 + $0x108] sm:$0xff] %v1715
          %1780 = vst [vmem:[#allocation2 + $0x110] sm:$0xff] %v1716
          %1781 = vst [vmem:[#allocation2 + $0x118] sm:$0xff] %v1717
          %1782 = vst [vmem:[#allocation2 + $0x120] sm:$0xff] %v1718
          %1783 = vst [vmem:[#allocation2 + $0x128] sm:$0xff] %v1719
          %1784 = vst [vmem:[#allocation2 + $0x130] sm:$0xff] %v1720
          %1785 = vst [vmem:[#allocation2 + $0x138] sm:$0xff] %v1721
          %1786 = vst [vmem:[#allocation2 + $0x140] sm:$0xff] %v1722
          %1787 = vst [vmem:[#allocation2 + $0x148] sm:$0xff] %v1723
          %1788 = vst [vmem:[#allocation2 + $0x150] sm:$0xff] %v1724
          %1789 = vst [vmem:[#allocation2 + $0x158] sm:$0xff] %v1725
          %1790 = vst [vmem:[#allocation2 + $0x160] sm:$0xff] %v1726
          %1791 = vst [vmem:[#allocation2 + $0x168] sm:$0xff] %v1727
          %1792 = vst [vmem:[#allocation2 + $0x170] sm:$0xff] %v1728
          %1793 = vst [vmem:[#allocation2 + $0x178] sm:$0xff] %v1729
          %1794 = vst [vmem:[#allocation2 + $0x180] sm:$0xff] %v1730
          %1795 = vst [vmem:[#allocation2 + $0x188] sm:$0xff] %v1731
          %1796 = vst [vmem:[#allocation2 + $0x190] sm:$0xff] %v1732
          %1797 = vst [vmem:[#allocation2 + $0x198] sm:$0xff] %v1733
          %1798 = vst [vmem:[#allocation2 + $0x1a0] sm:$0xff] %v1734
          %1799 = vst [vmem:[#allocation2 + $0x1a8] sm:$0xff] %v1735
          %1800 = vst [vmem:[#allocation2 + $0x1b0] sm:$0xff] %v1736
          %1801 = vst [vmem:[#allocation2 + $0x1b8] sm:$0xff] %v1737
          %1802 = vst [vmem:[#allocation2 + $0x1c0] sm:$0xff] %v1738
          %1803 = vst [vmem:[#allocation2 + $0x1c8] sm:$0xff] %v1739
          %1804 = vst [vmem:[#allocation2 + $0x1d0] sm:$0xff] %v1740
          %1805 = vst [vmem:[#allocation2 + $0x1d8] sm:$0xff] %v1741
          %1806 = vst [vmem:[#allocation2 + $0x1e0] sm:$0xff] %v1742
          %1807 = vst [vmem:[#allocation2 + $0x1e8] sm:$0xff] %v1743
          %1808 = vst [vmem:[#allocation2 + $0x1f0] sm:$0xff] %v1744
          %1809 = vst [vmem:[#allocation2 + $0x1f8] sm:$0xff] %v1745
        $region84: #{tpu_custom_call.1} parent=51 // pred_fallthru
          _
        %p1810 = scmp.eq.s32.totalorder %s37, 1
        // Predicated region
        $region85: #{tpu_custom_call.1} parent=51 // pred_check
          %p1811 = pneg %p1810
        $region86: #{tpu_custom_call.1} parent=51 // pred_check_branch
          %1813 = sbr.rel (%p1811) target = $region88
        $region87: #{tpu_custom_call.1} parent=51 // pred_region
          %s1814 = smul.u32 %s39, 512
          %v1815 = vld [vmem:[#allocation2] sm:$0xff]
          %v1816 = vld [vmem:[#allocation2 + $0x8] sm:$0xff]
          %v1817 = vld [vmem:[#allocation2 + $0x10] sm:$0xff]
          %v1818 = vld [vmem:[#allocation2 + $0x18] sm:$0xff]
          %v1819 = vld [vmem:[#allocation2 + $0x20] sm:$0xff]
          %v1820 = vld [vmem:[#allocation2 + $0x28] sm:$0xff]
          %v1821 = vld [vmem:[#allocation2 + $0x30] sm:$0xff]
          %v1822 = vld [vmem:[#allocation2 + $0x38] sm:$0xff]
          %v1823 = vld [vmem:[#allocation2 + $0x40] sm:$0xff]
          %v1824 = vld [vmem:[#allocation2 + $0x48] sm:$0xff]
          %v1825 = vld [vmem:[#allocation2 + $0x50] sm:$0xff]
          %v1826 = vld [vmem:[#allocation2 + $0x58] sm:$0xff]
          %v1827 = vld [vmem:[#allocation2 + $0x60] sm:$0xff]
          %v1828 = vld [vmem:[#allocation2 + $0x68] sm:$0xff]
          %v1829 = vld [vmem:[#allocation2 + $0x70] sm:$0xff]
          %v1830 = vld [vmem:[#allocation2 + $0x78] sm:$0xff]
          %v1831 = vld [vmem:[#allocation2 + $0x80] sm:$0xff]
          %v1832 = vld [vmem:[#allocation2 + $0x88] sm:$0xff]
          %v1833 = vld [vmem:[#allocation2 + $0x90] sm:$0xff]
          %v1834 = vld [vmem:[#allocation2 + $0x98] sm:$0xff]
          %v1835 = vld [vmem:[#allocation2 + $0xa0] sm:$0xff]
          %v1836 = vld [vmem:[#allocation2 + $0xa8] sm:$0xff]
          %v1837 = vld [vmem:[#allocation2 + $0xb0] sm:$0xff]
          %v1838 = vld [vmem:[#allocation2 + $0xb8] sm:$0xff]
          %v1839 = vld [vmem:[#allocation2 + $0xc0] sm:$0xff]
          %v1840 = vld [vmem:[#allocation2 + $0xc8] sm:$0xff]
          %v1841 = vld [vmem:[#allocation2 + $0xd0] sm:$0xff]
          %v1842 = vld [vmem:[#allocation2 + $0xd8] sm:$0xff]
          %v1843 = vld [vmem:[#allocation2 + $0xe0] sm:$0xff]
          %v1844 = vld [vmem:[#allocation2 + $0xe8] sm:$0xff]
          %v1845 = vld [vmem:[#allocation2 + $0xf0] sm:$0xff]
          %v1846 = vld [vmem:[#allocation2 + $0xf8] sm:$0xff]
          %v1847 = vld [vmem:[#allocation2 + $0x100] sm:$0xff]
          %v1848 = vld [vmem:[#allocation2 + $0x108] sm:$0xff]
          %v1849 = vld [vmem:[#allocation2 + $0x110] sm:$0xff]
          %v1850 = vld [vmem:[#allocation2 + $0x118] sm:$0xff]
          %v1851 = vld [vmem:[#allocation2 + $0x120] sm:$0xff]
          %v1852 = vld [vmem:[#allocation2 + $0x128] sm:$0xff]
          %v1853 = vld [vmem:[#allocation2 + $0x130] sm:$0xff]
          %v1854 = vld [vmem:[#allocation2 + $0x138] sm:$0xff]
          %v1855 = vld [vmem:[#allocation2 + $0x140] sm:$0xff]
          %v1856 = vld [vmem:[#allocation2 + $0x148] sm:$0xff]
          %v1857 = vld [vmem:[#allocation2 + $0x150] sm:$0xff]
          %v1858 = vld [vmem:[#allocation2 + $0x158] sm:$0xff]
          %v1859 = vld [vmem:[#allocation2 + $0x160] sm:$0xff]
          %v1860 = vld [vmem:[#allocation2 + $0x168] sm:$0xff]
          %v1861 = vld [vmem:[#allocation2 + $0x170] sm:$0xff]
          %v1862 = vld [vmem:[#allocation2 + $0x178] sm:$0xff]
          %v1863 = vld [vmem:[#allocation2 + $0x180] sm:$0xff]
          %v1864 = vld [vmem:[#allocation2 + $0x188] sm:$0xff]
          %v1865 = vld [vmem:[#allocation2 + $0x190] sm:$0xff]
          %v1866 = vld [vmem:[#allocation2 + $0x198] sm:$0xff]
          %v1867 = vld [vmem:[#allocation2 + $0x1a0] sm:$0xff]
          %v1868 = vld [vmem:[#allocation2 + $0x1a8] sm:$0xff]
          %v1869 = vld [vmem:[#allocation2 + $0x1b0] sm:$0xff]
          %v1870 = vld [vmem:[#allocation2 + $0x1b8] sm:$0xff]
          %v1871 = vld [vmem:[#allocation2 + $0x1c0] sm:$0xff]
          %v1872 = vld [vmem:[#allocation2 + $0x1c8] sm:$0xff]
          %v1873 = vld [vmem:[#allocation2 + $0x1d0] sm:$0xff]
          %v1874 = vld [vmem:[#allocation2 + $0x1d8] sm:$0xff]
          %v1875 = vld [vmem:[#allocation2 + $0x1e0] sm:$0xff]
          %v1876 = vld [vmem:[#allocation2 + $0x1e8] sm:$0xff]
          %v1877 = vld [vmem:[#allocation2 + $0x1f0] sm:$0xff]
          %v1878 = vld [vmem:[#allocation2 + $0x1f8] sm:$0xff]
          %s1879 = sshra.s32 %s1814, 4
          %s1880 = sand.u32 %s1814, 15
          %s1881 = smul.addr %s1879, 8
          %s1882 = scalar_lea.vmem [#allocation3], %s1881
          %v1883 = vld [vmem:[%s1882] sm:$0xff]
          %v1884 = vld [vmem:[%s1882 + $0x8] sm:$0xff]
          %v1885 = vld [vmem:[%s1882 + $0x10] sm:$0xff]
          %v1886 = vld [vmem:[%s1882 + $0x18] sm:$0xff]
          %v1887 = vld [vmem:[%s1882 + $0x20] sm:$0xff]
          %v1888 = vld [vmem:[%s1882 + $0x28] sm:$0xff]
          %v1889 = vld [vmem:[%s1882 + $0x30] sm:$0xff]
          %v1890 = vld [vmem:[%s1882 + $0x38] sm:$0xff]
          %v1891 = vld [vmem:[%s1882 + $0x40] sm:$0xff]
          %v1892 = vld [vmem:[%s1882 + $0x48] sm:$0xff]
          %v1893 = vld [vmem:[%s1882 + $0x50] sm:$0xff]
          %v1894 = vld [vmem:[%s1882 + $0x58] sm:$0xff]
          %v1895 = vld [vmem:[%s1882 + $0x60] sm:$0xff]
          %v1896 = vld [vmem:[%s1882 + $0x68] sm:$0xff]
          %v1897 = vld [vmem:[%s1882 + $0x70] sm:$0xff]
          %v1898 = vld [vmem:[%s1882 + $0x78] sm:$0xff]
          %v1899 = vld [vmem:[%s1882 + $0x80] sm:$0xff]
          %v1900 = vld [vmem:[%s1882 + $0x88] sm:$0xff]
          %v1901 = vld [vmem:[%s1882 + $0x90] sm:$0xff]
          %v1902 = vld [vmem:[%s1882 + $0x98] sm:$0xff]
          %v1903 = vld [vmem:[%s1882 + $0xa0] sm:$0xff]
          %v1904 = vld [vmem:[%s1882 + $0xa8] sm:$0xff]
          %v1905 = vld [vmem:[%s1882 + $0xb0] sm:$0xff]
          %v1906 = vld [vmem:[%s1882 + $0xb8] sm:$0xff]
          %v1907 = vld [vmem:[%s1882 + $0xc0] sm:$0xff]
          %v1908 = vld [vmem:[%s1882 + $0xc8] sm:$0xff]
          %v1909 = vld [vmem:[%s1882 + $0xd0] sm:$0xff]
          %v1910 = vld [vmem:[%s1882 + $0xd8] sm:$0xff]
          %v1911 = vld [vmem:[%s1882 + $0xe0] sm:$0xff]
          %v1912 = vld [vmem:[%s1882 + $0xe8] sm:$0xff]
          %v1913 = vld [vmem:[%s1882 + $0xf0] sm:$0xff]
          %v1914 = vld [vmem:[%s1882 + $0xf8] sm:$0xff]
          %1915 = vmatprep.subr.bf16.mxu0 0
          %1916 = vmatpush1.bf16.msra.mxu0 %v1883
          %1917 = vmatprep.subr.bf16.mxu0 0
          %1918 = vmatpush1.bf16.msra.mxu0 %v1884
          %1919 = vmatprep.subr.bf16.mxu0 0
          %1920 = vmatpush1.bf16.msra.mxu0 %v1885
          %1921 = vmatprep.subr.bf16.mxu0 0
          %1922 = vmatpush1.bf16.msra.mxu0 %v1886
          %1923 = vmatprep.subr.bf16.mxu0 0
          %1924 = vmatpush1.bf16.msra.mxu0 %v1887
          %1925 = vmatprep.subr.bf16.mxu0 0
          %1926 = vmatpush1.bf16.msra.mxu0 %v1888
          %1927 = vmatprep.subr.bf16.mxu0 0
          %1928 = vmatpush1.bf16.msra.mxu0 %v1889
          %1929 = vmatprep.subr.bf16.mxu0 0
          %1930 = vmatpush1.bf16.msra.mxu0 %v1890
          %1931 = vmatprep.subr.bf16.mxu0 0
          %1932 = vmatpush1.bf16.msra.mxu0 %v1891
          %1933 = vmatprep.subr.bf16.mxu0 0
          %1934 = vmatpush1.bf16.msra.mxu0 %v1892
          %1935 = vmatprep.subr.bf16.mxu0 0
          %1936 = vmatpush1.bf16.msra.mxu0 %v1893
          %1937 = vmatprep.subr.bf16.mxu0 0
          %1938 = vmatpush1.bf16.msra.mxu0 %v1894
          %1939 = vmatprep.subr.bf16.mxu0 0
          %1940 = vmatpush1.bf16.msra.mxu0 %v1895
          %1941 = vmatprep.subr.bf16.mxu0 0
          %1942 = vmatpush1.bf16.msra.mxu0 %v1896
          %1943 = vmatprep.subr.bf16.mxu0 0
          %1944 = vmatpush1.bf16.msra.mxu0 %v1897
          %1945 = vmatprep.subr.bf16.mxu0 0
          %1946 = vmatpush1.bf16.msra.mxu0 %v1898
          %1947 = vmatprep.mubr.bf16.mxu0 %v653
          %1948 = vmatmul.mubr.bf16.gmra.mrb[0].mxu0 %v652
          %v1949 = vpop.f32.mrb[0].mxu0
          %v1950 = vadd.f32 0.0, %v1949
          %v1951 = vpop.f32.mrb[0].mxu0
          %v1952 = vpop.f32.mrb[0].mxu0
          %v1953 = vadd.f32 0.0, %v1952
          %v1954 = vpop.f32.mrb[0].mxu0
          %1955 = vmatprep.mubr.bf16.mxu0 %v657
          %1956 = vmatmul.mubr.bf16.gmra.mrb[0].mxu0 %v656
          %v1957 = vpop.f32.mrb[0].mxu0
          %v1958 = vadd.f32 0.0, %v1957
          %v1959 = vpop.f32.mrb[0].mxu0
          %v1960 = vpop.f32.mrb[0].mxu0
          %v1961 = vadd.f32 0.0, %v1960
          %v1962 = vpop.f32.mrb[0].mxu0
          %1963 = vmatprep.mubr.bf16.mxu0 %v661
          %1964 = vmatmul.mubr.bf16.gmra.mrb[0].mxu0 %v660
          %v1965 = vpop.f32.mrb[0].mxu0
          %v1966 = vadd.f32 0.0, %v1965
          %v1967 = vpop.f32.mrb[0].mxu0
          %v1968 = vpop.f32.mrb[0].mxu0
          %v1969 = vadd.f32 0.0, %v1968
          %v1970 = vpop.f32.mrb[0].mxu0
          %1971 = vmatprep.mubr.bf16.mxu0 %v665
          %1972 = vmatmul.mubr.bf16.gmra.mrb[0].mxu0 %v664
          %v1973 = vpop.f32.mrb[0].mxu0
          %v1974 = vadd.f32 0.0, %v1973
          %v1975 = vpop.f32.mrb[0].mxu0
          %v1976 = vpop.f32.mrb[0].mxu0
          %v1977 = vadd.f32 0.0, %v1976
          %v1978 = vpop.f32.mrb[0].mxu0
          %1979 = vmatprep.mubr.bf16.mxu0 %v669
          %1980 = vmatmul.mubr.bf16.gmra.mrb[0].mxu0 %v668
          %v1981 = vpop.f32.mrb[0].mxu0
          %v1982 = vadd.f32 0.0, %v1981
          %v1983 = vpop.f32.mrb[0].mxu0
          %v1984 = vpop.f32.mrb[0].mxu0
          %v1985 = vadd.f32 0.0, %v1984
          %v1986 = vpop.f32.mrb[0].mxu0
          %1987 = vmatprep.mubr.bf16.mxu0 %v673
          %1988 = vmatmul.mubr.bf16.gmra.mrb[0].mxu0 %v672
          %v1989 = vpop.f32.mrb[0].mxu0
          %v1990 = vadd.f32 0.0, %v1989
          %v1991 = vpop.f32.mrb[0].mxu0
          %v1992 = vpop.f32.mrb[0].mxu0
          %v1993 = vadd.f32 0.0, %v1992
          %v1994 = vpop.f32.mrb[0].mxu0
          %1995 = vmatprep.mubr.bf16.mxu0 %v677
          %1996 = vmatmul.mubr.bf16.gmra.mrb[0].mxu0 %v676
          %v1997 = vpop.f32.mrb[0].mxu0
          %v1998 = vadd.f32 0.0, %v1997
          %v1999 = vpop.f32.mrb[0].mxu0
          %v2000 = vpop.f32.mrb[0].mxu0
          %v2001 = vadd.f32 0.0, %v2000
          %v2002 = vpop.f32.mrb[0].mxu0
          %2003 = vmatprep.mubr.bf16.mxu0 %v681
          %2004 = vmatmul.mubr.bf16.gmra.mrb[0].mxu0 %v680
          %v2005 = vpop.f32.mrb[0].mxu0
          %v2006 = vadd.f32 0.0, %v2005
          %v2007 = vpop.f32.mrb[0].mxu0
          %v2008 = vpop.f32.mrb[0].mxu0
          %v2009 = vadd.f32 0.0, %v2008
          %v2010 = vpop.f32.mrb[0].mxu0
          %2011 = vmatprep.mubr.bf16.mxu0 %v685
          %2012 = vmatmul.mubr.bf16.gmra.mrb[0].mxu0 %v684
          %v2013 = vpop.f32.mrb[0].mxu0
          %v2014 = vadd.f32 0.0, %v2013
          %v2015 = vpop.f32.mrb[0].mxu0
          %v2016 = vpop.f32.mrb[0].mxu0
          %v2017 = vadd.f32 0.0, %v2016
          %v2018 = vpop.f32.mrb[0].mxu0
          %2019 = vmatprep.mubr.bf16.mxu0 %v689
          %2020 = vmatmul.mubr.bf16.gmra.mrb[0].mxu0 %v688
          %v2021 = vpop.f32.mrb[0].mxu0
          %v2022 = vadd.f32 0.0, %v2021
          %v2023 = vpop.f32.mrb[0].mxu0
          %v2024 = vpop.f32.mrb[0].mxu0
          %v2025 = vadd.f32 0.0, %v2024
          %v2026 = vpop.f32.mrb[0].mxu0
          %2027 = vmatprep.mubr.bf16.mxu0 %v693
          %2028 = vmatmul.mubr.bf16.gmra.mrb[0].mxu0 %v692
          %v2029 = vpop.f32.mrb[0].mxu0
          %v2030 = vadd.f32 0.0, %v2029
          %v2031 = vpop.f32.mrb[0].mxu0
          %v2032 = vpop.f32.mrb[0].mxu0
          %v2033 = vadd.f32 0.0, %v2032
          %v2034 = vpop.f32.mrb[0].mxu0
          %2035 = vmatprep.mubr.bf16.mxu0 %v697
          %2036 = vmatmul.mubr.bf16.gmra.mrb[0].mxu0 %v696
          %v2037 = vpop.f32.mrb[0].mxu0
          %v2038 = vadd.f32 0.0, %v2037
          %v2039 = vpop.f32.mrb[0].mxu0
          %v2040 = vpop.f32.mrb[0].mxu0
          %v2041 = vadd.f32 0.0, %v2040
          %v2042 = vpop.f32.mrb[0].mxu0
          %2043 = vmatprep.mubr.bf16.mxu0 %v701
          %2044 = vmatmul.mubr.bf16.gmra.mrb[0].mxu0 %v700
          %v2045 = vpop.f32.mrb[0].mxu0
          %v2046 = vadd.f32 0.0, %v2045
          %v2047 = vpop.f32.mrb[0].mxu0
          %v2048 = vpop.f32.mrb[0].mxu0
          %v2049 = vadd.f32 0.0, %v2048
          %v2050 = vpop.f32.mrb[0].mxu0
          %2051 = vmatprep.mubr.bf16.mxu0 %v705
          %2052 = vmatmul.mubr.bf16.gmra.mrb[0].mxu0 %v704
          %v2053 = vpop.f32.mrb[0].mxu0
          %v2054 = vadd.f32 0.0, %v2053
          %v2055 = vpop.f32.mrb[0].mxu0
          %v2056 = vpop.f32.mrb[0].mxu0
          %v2057 = vadd.f32 0.0, %v2056
          %v2058 = vpop.f32.mrb[0].mxu0
          %2059 = vmatprep.mubr.bf16.mxu0 %v709
          %2060 = vmatmul.mubr.bf16.gmra.mrb[0].mxu0 %v708
          %v2061 = vpop.f32.mrb[0].mxu0
          %v2062 = vadd.f32 0.0, %v2061
          %v2063 = vpop.f32.mrb[0].mxu0
          %v2064 = vpop.f32.mrb[0].mxu0
          %v2065 = vadd.f32 0.0, %v2064
          %v2066 = vpop.f32.mrb[0].mxu0
          %2067 = vmatprep.mubr.bf16.mxu0 %v713
          %2068 = vmatmul.mubr.bf16.gmra.mrb[0].mxu0 %v712
          %v2069 = vpop.f32.mrb[0].mxu0
          %v2070 = vadd.f32 0.0, %v2069
          %v2071 = vpop.f32.mrb[0].mxu0
          %v2072 = vpop.f32.mrb[0].mxu0
          %v2073 = vadd.f32 0.0, %v2072
          %v2074 = vpop.f32.mrb[0].mxu0
          %2075 = vmatprep.mubr.bf16.mxu0 %v717
          %2076 = vmatmul.mubr.bf16.gmra.mrb[0].mxu0 %v716
          %v2077 = vpop.f32.mrb[0].mxu0
          %v2078 = vadd.f32 0.0, %v2077
          %v2079 = vpop.f32.mrb[0].mxu0
          %v2080 = vpop.f32.mrb[0].mxu0
          %v2081 = vadd.f32 0.0, %v2080
          %v2082 = vpop.f32.mrb[0].mxu0
          %2083 = vmatprep.mubr.bf16.mxu0 %v721
          %2084 = vmatmul.mubr.bf16.gmra.mrb[0].mxu0 %v720
          %v2085 = vpop.f32.mrb[0].mxu0
          %v2086 = vadd.f32 0.0, %v2085
          %v2087 = vpop.f32.mrb[0].mxu0
          %v2088 = vpop.f32.mrb[0].mxu0
          %v2089 = vadd.f32 0.0, %v2088
          %v2090 = vpop.f32.mrb[0].mxu0
          %2091 = vmatprep.mubr.bf16.mxu0 %v725
          %2092 = vmatmul.mubr.bf16.gmra.mrb[0].mxu0 %v724
          %v2093 = vpop.f32.mrb[0].mxu0
          %v2094 = vadd.f32 0.0, %v2093
          %v2095 = vpop.f32.mrb[0].mxu0
          %v2096 = vpop.f32.mrb[0].mxu0
          %v2097 = vadd.f32 0.0, %v2096
          %v2098 = vpop.f32.mrb[0].mxu0
          %2099 = vmatprep.mubr.bf16.mxu0 %v729
          %2100 = vmatmul.mubr.bf16.gmra.mrb[0].mxu0 %v728
          %v2101 = vpop.f32.mrb[0].mxu0
          %v2102 = vadd.f32 0.0, %v2101
          %v2103 = vpop.f32.mrb[0].mxu0
          %v2104 = vpop.f32.mrb[0].mxu0
          %v2105 = vadd.f32 0.0, %v2104
          %v2106 = vpop.f32.mrb[0].mxu0
          %2107 = vmatprep.mubr.bf16.mxu0 %v733
          %2108 = vmatmul.mubr.bf16.gmra.mrb[0].mxu0 %v732
          %v2109 = vpop.f32.mrb[0].mxu0
          %v2110 = vadd.f32 0.0, %v2109
          %v2111 = vpop.f32.mrb[0].mxu0
          %v2112 = vpop.f32.mrb[0].mxu0
          %v2113 = vadd.f32 0.0, %v2112
          %v2114 = vpop.f32.mrb[0].mxu0
          %2115 = vmatprep.mubr.bf16.mxu0 %v737
          %2116 = vmatmul.mubr.bf16.gmra.mrb[0].mxu0 %v736
          %v2117 = vpop.f32.mrb[0].mxu0
          %v2118 = vadd.f32 0.0, %v2117
          %v2119 = vpop.f32.mrb[0].mxu0
          %v2120 = vpop.f32.mrb[0].mxu0
          %v2121 = vadd.f32 0.0, %v2120
          %v2122 = vpop.f32.mrb[0].mxu0
          %2123 = vmatprep.mubr.bf16.mxu0 %v741
          %2124 = vmatmul.mubr.bf16.gmra.mrb[0].mxu0 %v740
          %v2125 = vpop.f32.mrb[0].mxu0
          %v2126 = vadd.f32 0.0, %v2125
          %v2127 = vpop.f32.mrb[0].mxu0
          %v2128 = vpop.f32.mrb[0].mxu0
          %v2129 = vadd.f32 0.0, %v2128
          %v2130 = vpop.f32.mrb[0].mxu0
          %2131 = vmatprep.mubr.bf16.mxu0 %v745
          %2132 = vmatmul.mubr.bf16.gmra.mrb[0].mxu0 %v744
          %v2133 = vpop.f32.mrb[0].mxu0
          %v2134 = vadd.f32 0.0, %v2133
          %v2135 = vpop.f32.mrb[0].mxu0
          %v2136 = vpop.f32.mrb[0].mxu0
          %v2137 = vadd.f32 0.0, %v2136
          %v2138 = vpop.f32.mrb[0].mxu0
          %2139 = vmatprep.mubr.bf16.mxu0 %v749
          %2140 = vmatmul.mubr.bf16.gmra.mrb[0].mxu0 %v748
          %v2141 = vpop.f32.mrb[0].mxu0
          %v2142 = vadd.f32 0.0, %v2141
          %v2143 = vpop.f32.mrb[0].mxu0
          %v2144 = vpop.f32.mrb[0].mxu0
          %v2145 = vadd.f32 0.0, %v2144
          %v2146 = vpop.f32.mrb[0].mxu0
          %2147 = vmatprep.mubr.bf16.mxu0 %v753
          %2148 = vmatmul.mubr.bf16.gmra.mrb[0].mxu0 %v752
          %v2149 = vpop.f32.mrb[0].mxu0
          %v2150 = vadd.f32 0.0, %v2149
          %v2151 = vpop.f32.mrb[0].mxu0
          %v2152 = vpop.f32.mrb[0].mxu0
          %v2153 = vadd.f32 0.0, %v2152
          %v2154 = vpop.f32.mrb[0].mxu0
          %2155 = vmatprep.mubr.bf16.mxu0 %v757
          %2156 = vmatmul.mubr.bf16.gmra.mrb[0].mxu0 %v756
          %v2157 = vpop.f32.mrb[0].mxu0
          %v2158 = vadd.f32 0.0, %v2157
          %v2159 = vpop.f32.mrb[0].mxu0
          %v2160 = vpop.f32.mrb[0].mxu0
          %v2161 = vadd.f32 0.0, %v2160
          %v2162 = vpop.f32.mrb[0].mxu0
          %2163 = vmatprep.mubr.bf16.mxu0 %v761
          %2164 = vmatmul.mubr.bf16.gmra.mrb[0].mxu0 %v760
          %v2165 = vpop.f32.mrb[0].mxu0
          %v2166 = vadd.f32 0.0, %v2165
          %v2167 = vpop.f32.mrb[0].mxu0
          %v2168 = vpop.f32.mrb[0].mxu0
          %v2169 = vadd.f32 0.0, %v2168
          %v2170 = vpop.f32.mrb[0].mxu0
          %2171 = vmatprep.mubr.bf16.mxu0 %v765
          %2172 = vmatmul.mubr.bf16.gmra.mrb[0].mxu0 %v764
          %v2173 = vpop.f32.mrb[0].mxu0
          %v2174 = vadd.f32 0.0, %v2173
          %v2175 = vpop.f32.mrb[0].mxu0
          %v2176 = vpop.f32.mrb[0].mxu0
          %v2177 = vadd.f32 0.0, %v2176
          %v2178 = vpop.f32.mrb[0].mxu0
          %2179 = vmatprep.mubr.bf16.mxu0 %v769
          %2180 = vmatmul.mubr.bf16.gmra.mrb[0].mxu0 %v768
          %v2181 = vpop.f32.mrb[0].mxu0
          %v2182 = vadd.f32 0.0, %v2181
          %v2183 = vpop.f32.mrb[0].mxu0
          %v2184 = vpop.f32.mrb[0].mxu0
          %v2185 = vadd.f32 0.0, %v2184
          %v2186 = vpop.f32.mrb[0].mxu0
          %2187 = vmatprep.mubr.bf16.mxu0 %v773
          %2188 = vmatmul.mubr.bf16.gmra.mrb[0].mxu0 %v772
          %v2189 = vpop.f32.mrb[0].mxu0
          %v2190 = vadd.f32 0.0, %v2189
          %v2191 = vpop.f32.mrb[0].mxu0
          %v2192 = vpop.f32.mrb[0].mxu0
          %v2193 = vadd.f32 0.0, %v2192
          %v2194 = vpop.f32.mrb[0].mxu0
          %2195 = vmatprep.mubr.bf16.mxu0 %v777
          %2196 = vmatmul.mubr.bf16.gmra.mrb[0].mxu0 %v776
          %v2197 = vpop.f32.mrb[0].mxu0
          %v2198 = vadd.f32 0.0, %v2197
          %v2199 = vpop.f32.mrb[0].mxu0
          %v2200 = vpop.f32.mrb[0].mxu0
          %v2201 = vadd.f32 0.0, %v2200
          %v2202 = vpop.f32.mrb[0].mxu0
          %2203 = vdwg.mxu0
          %2204 = vmatprep.subr.bf16.mxu0 0
          %2205 = vmatpush1.bf16.msra.mxu0 %v1899
          %2206 = vmatprep.subr.bf16.mxu0 0
          %2207 = vmatpush1.bf16.msra.mxu0 %v1900
          %2208 = vmatprep.subr.bf16.mxu0 0
          %2209 = vmatpush1.bf16.msra.mxu0 %v1901
          %2210 = vmatprep.subr.bf16.mxu0 0
          %2211 = vmatpush1.bf16.msra.mxu0 %v1902
          %2212 = vmatprep.subr.bf16.mxu0 0
          %2213 = vmatpush1.bf16.msra.mxu0 %v1903
          %2214 = vmatprep.subr.bf16.mxu0 0
          %2215 = vmatpush1.bf16.msra.mxu0 %v1904
          %2216 = vmatprep.subr.bf16.mxu0 0
          %2217 = vmatpush1.bf16.msra.mxu0 %v1905
          %2218 = vmatprep.subr.bf16.mxu0 0
          %2219 = vmatpush1.bf16.msra.mxu0 %v1906
          %2220 = vmatprep.subr.bf16.mxu0 0
          %2221 = vmatpush1.bf16.msra.mxu0 %v1907
          %2222 = vmatprep.subr.bf16.mxu0 0
          %2223 = vmatpush1.bf16.msra.mxu0 %v1908
          %2224 = vmatprep.subr.bf16.mxu0 0
          %2225 = vmatpush1.bf16.msra.mxu0 %v1909
          %2226 = vmatprep.subr.bf16.mxu0 0
          %2227 = vmatpush1.bf16.msra.mxu0 %v1910
          %2228 = vmatprep.subr.bf16.mxu0 0
          %2229 = vmatpush1.bf16.msra.mxu0 %v1911
          %2230 = vmatprep.subr.bf16.mxu0 0
          %2231 = vmatpush1.bf16.msra.mxu0 %v1912
          %2232 = vmatprep.subr.bf16.mxu0 0
          %2233 = vmatpush1.bf16.msra.mxu0 %v1913
          %2234 = vmatprep.subr.bf16.mxu0 0
          %2235 = vmatpush1.bf16.msra.mxu0 %v1914
          %2236 = vmatprep.mubr.bf16.mxu0 %v655
          %2237 = vmatmul.mubr.bf16.gmra.mrb[0].mxu0 %v654
          %v2238 = vpop.f32.mrb[0].mxu0
          %v2239 = vadd.f32 %v1950, %v2238
          %v2240 = vpop.f32.mrb[0].mxu0
          %v2241 = vpop.f32.mrb[0].mxu0
          %v2242 = vadd.f32 %v1953, %v2241
          %v2243 = vpop.f32.mrb[0].mxu0
          %2244 = vmatprep.mubr.bf16.mxu0 %v659
          %2245 = vmatmul.mubr.bf16.gmra.mrb[0].mxu0 %v658
          %v2246 = vpop.f32.mrb[0].mxu0
          %v2247 = vadd.f32 %v1958, %v2246
          %v2248 = vpop.f32.mrb[0].mxu0
          %v2249 = vpop.f32.mrb[0].mxu0
          %v2250 = vadd.f32 %v1961, %v2249
          %v2251 = vpop.f32.mrb[0].mxu0
          %2252 = vmatprep.mubr.bf16.mxu0 %v663
          %2253 = vmatmul.mubr.bf16.gmra.mrb[0].mxu0 %v662
          %v2254 = vpop.f32.mrb[0].mxu0
          %v2255 = vadd.f32 %v1966, %v2254
          %v2256 = vpop.f32.mrb[0].mxu0
          %v2257 = vpop.f32.mrb[0].mxu0
          %v2258 = vadd.f32 %v1969, %v2257
          %v2259 = vpop.f32.mrb[0].mxu0
          %2260 = vmatprep.mubr.bf16.mxu0 %v667
          %2261 = vmatmul.mubr.bf16.gmra.mrb[0].mxu0 %v666
          %v2262 = vpop.f32.mrb[0].mxu0
          %v2263 = vadd.f32 %v1974, %v2262
          %v2264 = vpop.f32.mrb[0].mxu0
          %v2265 = vpop.f32.mrb[0].mxu0
          %v2266 = vadd.f32 %v1977, %v2265
          %v2267 = vpop.f32.mrb[0].mxu0
          %2268 = vmatprep.mubr.bf16.mxu0 %v671
          %2269 = vmatmul.mubr.bf16.gmra.mrb[0].mxu0 %v670
          %v2270 = vpop.f32.mrb[0].mxu0
          %v2271 = vadd.f32 %v1982, %v2270
          %v2272 = vpop.f32.mrb[0].mxu0
          %v2273 = vpop.f32.mrb[0].mxu0
          %v2274 = vadd.f32 %v1985, %v2273
          %v2275 = vpop.f32.mrb[0].mxu0
          %2276 = vmatprep.mubr.bf16.mxu0 %v675
          %2277 = vmatmul.mubr.bf16.gmra.mrb[0].mxu0 %v674
          %v2278 = vpop.f32.mrb[0].mxu0
          %v2279 = vadd.f32 %v1990, %v2278
          %v2280 = vpop.f32.mrb[0].mxu0
          %v2281 = vpop.f32.mrb[0].mxu0
          %v2282 = vadd.f32 %v1993, %v2281
          %v2283 = vpop.f32.mrb[0].mxu0
          %2284 = vmatprep.mubr.bf16.mxu0 %v679
          %2285 = vmatmul.mubr.bf16.gmra.mrb[0].mxu0 %v678
          %v2286 = vpop.f32.mrb[0].mxu0
          %v2287 = vadd.f32 %v1998, %v2286
          %v2288 = vpop.f32.mrb[0].mxu0
          %v2289 = vpop.f32.mrb[0].mxu0
          %v2290 = vadd.f32 %v2001, %v2289
          %v2291 = vpop.f32.mrb[0].mxu0
          %2292 = vmatprep.mubr.bf16.mxu0 %v683
          %2293 = vmatmul.mubr.bf16.gmra.mrb[0].mxu0 %v682
          %v2294 = vpop.f32.mrb[0].mxu0
          %v2295 = vadd.f32 %v2006, %v2294
          %v2296 = vpop.f32.mrb[0].mxu0
          %v2297 = vpop.f32.mrb[0].mxu0
          %v2298 = vadd.f32 %v2009, %v2297
          %v2299 = vpop.f32.mrb[0].mxu0
          %2300 = vmatprep.mubr.bf16.mxu0 %v687
          %2301 = vmatmul.mubr.bf16.gmra.mrb[0].mxu0 %v686
          %v2302 = vpop.f32.mrb[0].mxu0
          %v2303 = vadd.f32 %v2014, %v2302
          %v2304 = vpop.f32.mrb[0].mxu0
          %v2305 = vpop.f32.mrb[0].mxu0
          %v2306 = vadd.f32 %v2017, %v2305
          %v2307 = vpop.f32.mrb[0].mxu0
          %2308 = vmatprep.mubr.bf16.mxu0 %v691
          %2309 = vmatmul.mubr.bf16.gmra.mrb[0].mxu0 %v690
          %v2310 = vpop.f32.mrb[0].mxu0
          %v2311 = vadd.f32 %v2022, %v2310
          %v2312 = vpop.f32.mrb[0].mxu0
          %v2313 = vpop.f32.mrb[0].mxu0
          %v2314 = vadd.f32 %v2025, %v2313
          %v2315 = vpop.f32.mrb[0].mxu0
          %2316 = vmatprep.mubr.bf16.mxu0 %v695
          %2317 = vmatmul.mubr.bf16.gmra.mrb[0].mxu0 %v694
          %v2318 = vpop.f32.mrb[0].mxu0
          %v2319 = vadd.f32 %v2030, %v2318
          %v2320 = vpop.f32.mrb[0].mxu0
          %v2321 = vpop.f32.mrb[0].mxu0
          %v2322 = vadd.f32 %v2033, %v2321
          %v2323 = vpop.f32.mrb[0].mxu0
          %2324 = vmatprep.mubr.bf16.mxu0 %v699
          %2325 = vmatmul.mubr.bf16.gmra.mrb[0].mxu0 %v698
          %v2326 = vpop.f32.mrb[0].mxu0
          %v2327 = vadd.f32 %v2038, %v2326
          %v2328 = vpop.f32.mrb[0].mxu0
          %v2329 = vpop.f32.mrb[0].mxu0
          %v2330 = vadd.f32 %v2041, %v2329
          %v2331 = vpop.f32.mrb[0].mxu0
          %2332 = vmatprep.mubr.bf16.mxu0 %v703
          %2333 = vmatmul.mubr.bf16.gmra.mrb[0].mxu0 %v702
          %v2334 = vpop.f32.mrb[0].mxu0
          %v2335 = vadd.f32 %v2046, %v2334
          %v2336 = vpop.f32.mrb[0].mxu0
          %v2337 = vpop.f32.mrb[0].mxu0
          %v2338 = vadd.f32 %v2049, %v2337
          %v2339 = vpop.f32.mrb[0].mxu0
          %2340 = vmatprep.mubr.bf16.mxu0 %v707
          %2341 = vmatmul.mubr.bf16.gmra.mrb[0].mxu0 %v706
          %v2342 = vpop.f32.mrb[0].mxu0
          %v2343 = vadd.f32 %v2054, %v2342
          %v2344 = vpop.f32.mrb[0].mxu0
          %v2345 = vpop.f32.mrb[0].mxu0
          %v2346 = vadd.f32 %v2057, %v2345
          %v2347 = vpop.f32.mrb[0].mxu0
          %2348 = vmatprep.mubr.bf16.mxu0 %v711
          %2349 = vmatmul.mubr.bf16.gmra.mrb[0].mxu0 %v710
          %v2350 = vpop.f32.mrb[0].mxu0
          %v2351 = vadd.f32 %v2062, %v2350
          %v2352 = vpop.f32.mrb[0].mxu0
          %v2353 = vpop.f32.mrb[0].mxu0
          %v2354 = vadd.f32 %v2065, %v2353
          %v2355 = vpop.f32.mrb[0].mxu0
          %2356 = vmatprep.mubr.bf16.mxu0 %v715
          %2357 = vmatmul.mubr.bf16.gmra.mrb[0].mxu0 %v714
          %v2358 = vpop.f32.mrb[0].mxu0
          %v2359 = vadd.f32 %v2070, %v2358
          %v2360 = vpop.f32.mrb[0].mxu0
          %v2361 = vpop.f32.mrb[0].mxu0
          %v2362 = vadd.f32 %v2073, %v2361
          %v2363 = vpop.f32.mrb[0].mxu0
          %2364 = vmatprep.mubr.bf16.mxu0 %v719
          %2365 = vmatmul.mubr.bf16.gmra.mrb[0].mxu0 %v718
          %v2366 = vpop.f32.mrb[0].mxu0
          %v2367 = vadd.f32 %v2078, %v2366
          %v2368 = vpop.f32.mrb[0].mxu0
          %v2369 = vpop.f32.mrb[0].mxu0
          %v2370 = vadd.f32 %v2081, %v2369
          %v2371 = vpop.f32.mrb[0].mxu0
          %2372 = vmatprep.mubr.bf16.mxu0 %v723
          %2373 = vmatmul.mubr.bf16.gmra.mrb[0].mxu0 %v722
          %v2374 = vpop.f32.mrb[0].mxu0
          %v2375 = vadd.f32 %v2086, %v2374
          %v2376 = vpop.f32.mrb[0].mxu0
          %v2377 = vpop.f32.mrb[0].mxu0
          %v2378 = vadd.f32 %v2089, %v2377
          %v2379 = vpop.f32.mrb[0].mxu0
          %2380 = vmatprep.mubr.bf16.mxu0 %v727
          %2381 = vmatmul.mubr.bf16.gmra.mrb[0].mxu0 %v726
          %v2382 = vpop.f32.mrb[0].mxu0
          %v2383 = vadd.f32 %v2094, %v2382
          %v2384 = vpop.f32.mrb[0].mxu0
          %v2385 = vpop.f32.mrb[0].mxu0
          %v2386 = vadd.f32 %v2097, %v2385
          %v2387 = vpop.f32.mrb[0].mxu0
          %2388 = vmatprep.mubr.bf16.mxu0 %v731
          %2389 = vmatmul.mubr.bf16.gmra.mrb[0].mxu0 %v730
          %v2390 = vpop.f32.mrb[0].mxu0
          %v2391 = vadd.f32 %v2102, %v2390
          %v2392 = vpop.f32.mrb[0].mxu0
          %v2393 = vpop.f32.mrb[0].mxu0
          %v2394 = vadd.f32 %v2105, %v2393
          %v2395 = vpop.f32.mrb[0].mxu0
          %2396 = vmatprep.mubr.bf16.mxu0 %v735
          %2397 = vmatmul.mubr.bf16.gmra.mrb[0].mxu0 %v734
          %v2398 = vpop.f32.mrb[0].mxu0
          %v2399 = vadd.f32 %v2110, %v2398
          %v2400 = vpop.f32.mrb[0].mxu0
          %v2401 = vpop.f32.mrb[0].mxu0
          %v2402 = vadd.f32 %v2113, %v2401
          %v2403 = vpop.f32.mrb[0].mxu0
          %2404 = vmatprep.mubr.bf16.mxu0 %v739
          %2405 = vmatmul.mubr.bf16.gmra.mrb[0].mxu0 %v738
          %v2406 = vpop.f32.mrb[0].mxu0
          %v2407 = vadd.f32 %v2118, %v2406
          %v2408 = vpop.f32.mrb[0].mxu0
          %v2409 = vpop.f32.mrb[0].mxu0
          %v2410 = vadd.f32 %v2121, %v2409
          %v2411 = vpop.f32.mrb[0].mxu0
          %2412 = vmatprep.mubr.bf16.mxu0 %v743
          %2413 = vmatmul.mubr.bf16.gmra.mrb[0].mxu0 %v742
          %v2414 = vpop.f32.mrb[0].mxu0
          %v2415 = vadd.f32 %v2126, %v2414
          %v2416 = vpop.f32.mrb[0].mxu0
          %v2417 = vpop.f32.mrb[0].mxu0
          %v2418 = vadd.f32 %v2129, %v2417
          %v2419 = vpop.f32.mrb[0].mxu0
          %2420 = vmatprep.mubr.bf16.mxu0 %v747
          %2421 = vmatmul.mubr.bf16.gmra.mrb[0].mxu0 %v746
          %v2422 = vpop.f32.mrb[0].mxu0
          %v2423 = vadd.f32 %v2134, %v2422
          %v2424 = vpop.f32.mrb[0].mxu0
          %v2425 = vpop.f32.mrb[0].mxu0
          %v2426 = vadd.f32 %v2137, %v2425
          %v2427 = vpop.f32.mrb[0].mxu0
          %2428 = vmatprep.mubr.bf16.mxu0 %v751
          %2429 = vmatmul.mubr.bf16.gmra.mrb[0].mxu0 %v750
          %v2430 = vpop.f32.mrb[0].mxu0
          %v2431 = vadd.f32 %v2142, %v2430
          %v2432 = vpop.f32.mrb[0].mxu0
          %v2433 = vpop.f32.mrb[0].mxu0
          %v2434 = vadd.f32 %v2145, %v2433
          %v2435 = vpop.f32.mrb[0].mxu0
          %2436 = vmatprep.mubr.bf16.mxu0 %v755
          %2437 = vmatmul.mubr.bf16.gmra.mrb[0].mxu0 %v754
          %v2438 = vpop.f32.mrb[0].mxu0
          %v2439 = vadd.f32 %v2150, %v2438
          %v2440 = vpop.f32.mrb[0].mxu0
          %v2441 = vpop.f32.mrb[0].mxu0
          %v2442 = vadd.f32 %v2153, %v2441
          %v2443 = vpop.f32.mrb[0].mxu0
          %2444 = vmatprep.mubr.bf16.mxu0 %v759
          %2445 = vmatmul.mubr.bf16.gmra.mrb[0].mxu0 %v758
          %v2446 = vpop.f32.mrb[0].mxu0
          %v2447 = vadd.f32 %v2158, %v2446
          %v2448 = vpop.f32.mrb[0].mxu0
          %v2449 = vpop.f32.mrb[0].mxu0
          %v2450 = vadd.f32 %v2161, %v2449
          %v2451 = vpop.f32.mrb[0].mxu0
          %2452 = vmatprep.mubr.bf16.mxu0 %v763
          %2453 = vmatmul.mubr.bf16.gmra.mrb[0].mxu0 %v762
          %v2454 = vpop.f32.mrb[0].mxu0
          %v2455 = vadd.f32 %v2166, %v2454
          %v2456 = vpop.f32.mrb[0].mxu0
          %v2457 = vpop.f32.mrb[0].mxu0
          %v2458 = vadd.f32 %v2169, %v2457
          %v2459 = vpop.f32.mrb[0].mxu0
          %2460 = vmatprep.mubr.bf16.mxu0 %v767
          %2461 = vmatmul.mubr.bf16.gmra.mrb[0].mxu0 %v766
          %v2462 = vpop.f32.mrb[0].mxu0
          %v2463 = vadd.f32 %v2174, %v2462
          %v2464 = vpop.f32.mrb[0].mxu0
          %v2465 = vpop.f32.mrb[0].mxu0
          %v2466 = vadd.f32 %v2177, %v2465
          %v2467 = vpop.f32.mrb[0].mxu0
          %2468 = vmatprep.mubr.bf16.mxu0 %v771
          %2469 = vmatmul.mubr.bf16.gmra.mrb[0].mxu0 %v770
          %v2470 = vpop.f32.mrb[0].mxu0
          %v2471 = vadd.f32 %v2182, %v2470
          %v2472 = vpop.f32.mrb[0].mxu0
          %v2473 = vpop.f32.mrb[0].mxu0
          %v2474 = vadd.f32 %v2185, %v2473
          %v2475 = vpop.f32.mrb[0].mxu0
          %2476 = vmatprep.mubr.bf16.mxu0 %v775
          %2477 = vmatmul.mubr.bf16.gmra.mrb[0].mxu0 %v774
          %v2478 = vpop.f32.mrb[0].mxu0
          %v2479 = vadd.f32 %v2190, %v2478
          %v2480 = vpop.f32.mrb[0].mxu0
          %v2481 = vpop.f32.mrb[0].mxu0
          %v2482 = vadd.f32 %v2193, %v2481
          %v2483 = vpop.f32.mrb[0].mxu0
          %2484 = vmatprep.mubr.bf16.mxu0 %v779
          %2485 = vmatmul.mubr.bf16.gmra.mrb[0].mxu0 %v778
          %v2486 = vpop.f32.mrb[0].mxu0
          %v2487 = vadd.f32 %v2198, %v2486
          %v2488 = vpop.f32.mrb[0].mxu0
          %v2489 = vpop.f32.mrb[0].mxu0
          %v2490 = vadd.f32 %v2201, %v2489
          %v2491 = vpop.f32.mrb[0].mxu0
          %2492 = vdwg.mxu0
          %v2493 = vadd.f32 %v1815, %v2239
          %v2494 = vadd.f32 %v1816, %v2242
          %v2495 = vadd.f32 %v1817, %v2247
          %v2496 = vadd.f32 %v1818, %v2250
          %v2497 = vadd.f32 %v1819, %v2255
          %v2498 = vadd.f32 %v1820, %v2258
          %v2499 = vadd.f32 %v1821, %v2263
          %v2500 = vadd.f32 %v1822, %v2266
          %v2501 = vadd.f32 %v1823, %v2271
          %v2502 = vadd.f32 %v1824, %v2274
          %v2503 = vadd.f32 %v1825, %v2279
          %v2504 = vadd.f32 %v1826, %v2282
          %v2505 = vadd.f32 %v1827, %v2287
          %v2506 = vadd.f32 %v1828, %v2290
          %v2507 = vadd.f32 %v1829, %v2295
          %v2508 = vadd.f32 %v1830, %v2298
          %v2509 = vadd.f32 %v1831, %v2303
          %v2510 = vadd.f32 %v1832, %v2306
          %v2511 = vadd.f32 %v1833, %v2311
          %v2512 = vadd.f32 %v1834, %v2314
          %v2513 = vadd.f32 %v1835, %v2319
          %v2514 = vadd.f32 %v1836, %v2322
          %v2515 = vadd.f32 %v1837, %v2327
          %v2516 = vadd.f32 %v1838, %v2330
          %v2517 = vadd.f32 %v1839, %v2335
          %v2518 = vadd.f32 %v1840, %v2338
          %v2519 = vadd.f32 %v1841, %v2343
          %v2520 = vadd.f32 %v1842, %v2346
          %v2521 = vadd.f32 %v1843, %v2351
          %v2522 = vadd.f32 %v1844, %v2354
          %v2523 = vadd.f32 %v1845, %v2359
          %v2524 = vadd.f32 %v1846, %v2362
          %v2525 = vadd.f32 %v1847, %v2367
          %v2526 = vadd.f32 %v1848, %v2370
          %v2527 = vadd.f32 %v1849, %v2375
          %v2528 = vadd.f32 %v1850, %v2378
          %v2529 = vadd.f32 %v1851, %v2383
          %v2530 = vadd.f32 %v1852, %v2386
          %v2531 = vadd.f32 %v1853, %v2391
          %v2532 = vadd.f32 %v1854, %v2394
          %v2533 = vadd.f32 %v1855, %v2399
          %v2534 = vadd.f32 %v1856, %v2402
          %v2535 = vadd.f32 %v1857, %v2407
          %v2536 = vadd.f32 %v1858, %v2410
          %v2537 = vadd.f32 %v1859, %v2415
          %v2538 = vadd.f32 %v1860, %v2418
          %v2539 = vadd.f32 %v1861, %v2423
          %v2540 = vadd.f32 %v1862, %v2426
          %v2541 = vadd.f32 %v1863, %v2431
          %v2542 = vadd.f32 %v1864, %v2434
          %v2543 = vadd.f32 %v1865, %v2439
          %v2544 = vadd.f32 %v1866, %v2442
          %v2545 = vadd.f32 %v1867, %v2447
          %v2546 = vadd.f32 %v1868, %v2450
          %v2547 = vadd.f32 %v1869, %v2455
          %v2548 = vadd.f32 %v1870, %v2458
          %v2549 = vadd.f32 %v1871, %v2463
          %v2550 = vadd.f32 %v1872, %v2466
          %v2551 = vadd.f32 %v1873, %v2471
          %v2552 = vadd.f32 %v1874, %v2474
          %v2553 = vadd.f32 %v1875, %v2479
          %v2554 = vadd.f32 %v1876, %v2482
          %v2555 = vadd.f32 %v1877, %v2487
          %v2556 = vadd.f32 %v1878, %v2490
          %2557 = vst [vmem:[#allocation2] sm:$0xff] %v2493
          %2558 = vst [vmem:[#allocation2 + $0x8] sm:$0xff] %v2494
          %2559 = vst [vmem:[#allocation2 + $0x10] sm:$0xff] %v2495
          %2560 = vst [vmem:[#allocation2 + $0x18] sm:$0xff] %v2496
          %2561 = vst [vmem:[#allocation2 + $0x20] sm:$0xff] %v2497
          %2562 = vst [vmem:[#allocation2 + $0x28] sm:$0xff] %v2498
          %2563 = vst [vmem:[#allocation2 + $0x30] sm:$0xff] %v2499
          %2564 = vst [vmem:[#allocation2 + $0x38] sm:$0xff] %v2500
          %2565 = vst [vmem:[#allocation2 + $0x40] sm:$0xff] %v2501
          %2566 = vst [vmem:[#allocation2 + $0x48] sm:$0xff] %v2502
          %2567 = vst [vmem:[#allocation2 + $0x50] sm:$0xff] %v2503
          %2568 = vst [vmem:[#allocation2 + $0x58] sm:$0xff] %v2504
          %2569 = vst [vmem:[#allocation2 + $0x60] sm:$0xff] %v2505
          %2570 = vst [vmem:[#allocation2 + $0x68] sm:$0xff] %v2506
          %2571 = vst [vmem:[#allocation2 + $0x70] sm:$0xff] %v2507
          %2572 = vst [vmem:[#allocation2 + $0x78] sm:$0xff] %v2508
          %2573 = vst [vmem:[#allocation2 + $0x80] sm:$0xff] %v2509
          %2574 = vst [vmem:[#allocation2 + $0x88] sm:$0xff] %v2510
          %2575 = vst [vmem:[#allocation2 + $0x90] sm:$0xff] %v2511
          %2576 = vst [vmem:[#allocation2 + $0x98] sm:$0xff] %v2512
          %2577 = vst [vmem:[#allocation2 + $0xa0] sm:$0xff] %v2513
          %2578 = vst [vmem:[#allocation2 + $0xa8] sm:$0xff] %v2514
          %2579 = vst [vmem:[#allocation2 + $0xb0] sm:$0xff] %v2515
          %2580 = vst [vmem:[#allocation2 + $0xb8] sm:$0xff] %v2516
          %2581 = vst [vmem:[#allocation2 + $0xc0] sm:$0xff] %v2517
          %2582 = vst [vmem:[#allocation2 + $0xc8] sm:$0xff] %v2518
          %2583 = vst [vmem:[#allocation2 + $0xd0] sm:$0xff] %v2519
          %2584 = vst [vmem:[#allocation2 + $0xd8] sm:$0xff] %v2520
          %2585 = vst [vmem:[#allocation2 + $0xe0] sm:$0xff] %v2521
          %2586 = vst [vmem:[#allocation2 + $0xe8] sm:$0xff] %v2522
          %2587 = vst [vmem:[#allocation2 + $0xf0] sm:$0xff] %v2523
          %2588 = vst [vmem:[#allocation2 + $0xf8] sm:$0xff] %v2524
          %2589 = vst [vmem:[#allocation2 + $0x100] sm:$0xff] %v2525
          %2590 = vst [vmem:[#allocation2 + $0x108] sm:$0xff] %v2526
          %2591 = vst [vmem:[#allocation2 + $0x110] sm:$0xff] %v2527
          %2592 = vst [vmem:[#allocation2 + $0x118] sm:$0xff] %v2528
          %2593 = vst [vmem:[#allocation2 + $0x120] sm:$0xff] %v2529
          %2594 = vst [vmem:[#allocation2 + $0x128] sm:$0xff] %v2530
          %2595 = vst [vmem:[#allocation2 + $0x130] sm:$0xff] %v2531
          %2596 = vst [vmem:[#allocation2 + $0x138] sm:$0xff] %v2532
          %2597 = vst [vmem:[#allocation2 + $0x140] sm:$0xff] %v2533
          %2598 = vst [vmem:[#allocation2 + $0x148] sm:$0xff] %v2534
          %2599 = vst [vmem:[#allocation2 + $0x150] sm:$0xff] %v2535
          %2600 = vst [vmem:[#allocation2 + $0x158] sm:$0xff] %v2536
          %2601 = vst [vmem:[#allocation2 + $0x160] sm:$0xff] %v2537
          %2602 = vst [vmem:[#allocation2 + $0x168] sm:$0xff] %v2538
          %2603 = vst [vmem:[#allocation2 + $0x170] sm:$0xff] %v2539
          %2604 = vst [vmem:[#allocation2 + $0x178] sm:$0xff] %v2540
          %2605 = vst [vmem:[#allocation2 + $0x180] sm:$0xff] %v2541
          %2606 = vst [vmem:[#allocation2 + $0x188] sm:$0xff] %v2542
          %2607 = vst [vmem:[#allocation2 + $0x190] sm:$0xff] %v2543
          %2608 = vst [vmem:[#allocation2 + $0x198] sm:$0xff] %v2544
          %2609 = vst [vmem:[#allocation2 + $0x1a0] sm:$0xff] %v2545
          %2610 = vst [vmem:[#allocation2 + $0x1a8] sm:$0xff] %v2546
          %2611 = vst [vmem:[#allocation2 + $0x1b0] sm:$0xff] %v2547
          %2612 = vst [vmem:[#allocation2 + $0x1b8] sm:$0xff] %v2548
          %2613 = vst [vmem:[#allocation2 + $0x1c0] sm:$0xff] %v2549
          %2614 = vst [vmem:[#allocation2 + $0x1c8] sm:$0xff] %v2550
          %2615 = vst [vmem:[#allocation2 + $0x1d0] sm:$0xff] %v2551
          %2616 = vst [vmem:[#allocation2 + $0x1d8] sm:$0xff] %v2552
          %2617 = vst [vmem:[#allocation2 + $0x1e0] sm:$0xff] %v2553
          %2618 = vst [vmem:[#allocation2 + $0x1e8] sm:$0xff] %v2554
          %2619 = vst [vmem:[#allocation2 + $0x1f0] sm:$0xff] %v2555
          %2620 = vst [vmem:[#allocation2 + $0x1f8] sm:$0xff] %v2556
        $region88: #{tpu_custom_call.1} parent=51 // pred_fallthru
          _
        %p2621 = scmp.eq.s32.totalorder %s39, 1
        %p2622 = pnand %p780, %p2621
        %p2623 = pneg %p2622
        // Predicated region
        $region89: #{tpu_custom_call.1} parent=51 // pred_check
          _
        $region90: #{tpu_custom_call.1} parent=51 // pred_check_branch
          %2625 = sbr.rel (%p2622) target = $region92
        $region91: #{tpu_custom_call.1} parent=51 // pred_region
          %v2626 = vld [vmem:[%s452] sm:$0xff]
          %v2627 = vld [vmem:[%s452 + $0x8] sm:$0xff]
          %v2628 = vld [vmem:[%s452 + $0x10] sm:$0xff]
          %v2629 = vld [vmem:[%s452 + $0x18] sm:$0xff]
          %v2630 = vld [vmem:[%s452 + $0x20] sm:$0xff]
          %v2631 = vld [vmem:[%s452 + $0x28] sm:$0xff]
          %v2632 = vld [vmem:[%s452 + $0x30] sm:$0xff]
          %v2633 = vld [vmem:[%s452 + $0x38] sm:$0xff]
          %v2634 = vld [vmem:[%s452 + $0x40] sm:$0xff]
          %v2635 = vld [vmem:[%s452 + $0x48] sm:$0xff]
          %v2636 = vld [vmem:[%s452 + $0x50] sm:$0xff]
          %v2637 = vld [vmem:[%s452 + $0x58] sm:$0xff]
          %v2638 = vld [vmem:[%s452 + $0x60] sm:$0xff]
          %v2639 = vld [vmem:[%s452 + $0x68] sm:$0xff]
          %v2640 = vld [vmem:[%s452 + $0x70] sm:$0xff]
          %v2641 = vld [vmem:[%s452 + $0x78] sm:$0xff]
          %v2642 = vld [vmem:[%s452 + $0x80] sm:$0xff]
          %v2643 = vld [vmem:[%s452 + $0x88] sm:$0xff]
          %v2644 = vld [vmem:[%s452 + $0x90] sm:$0xff]
          %v2645 = vld [vmem:[%s452 + $0x98] sm:$0xff]
          %v2646 = vld [vmem:[%s452 + $0xa0] sm:$0xff]
          %v2647 = vld [vmem:[%s452 + $0xa8] sm:$0xff]
          %v2648 = vld [vmem:[%s452 + $0xb0] sm:$0xff]
          %v2649 = vld [vmem:[%s452 + $0xb8] sm:$0xff]
          %v2650 = vld [vmem:[%s452 + $0xc0] sm:$0xff]
          %v2651 = vld [vmem:[%s452 + $0xc8] sm:$0xff]
          %v2652 = vld [vmem:[%s452 + $0xd0] sm:$0xff]
          %v2653 = vld [vmem:[%s452 + $0xd8] sm:$0xff]
          %v2654 = vld [vmem:[%s452 + $0xe0] sm:$0xff]
          %v2655 = vld [vmem:[%s452 + $0xe8] sm:$0xff]
          %v2656 = vld [vmem:[%s452 + $0xf0] sm:$0xff]
          %v2657 = vld [vmem:[%s452 + $0xf8] sm:$0xff]
          %v2658 = vld [vmem:[%s452 + $0x100] sm:$0xff]
          %v2659 = vld [vmem:[%s452 + $0x108] sm:$0xff]
          %v2660 = vld [vmem:[%s452 + $0x110] sm:$0xff]
          %v2661 = vld [vmem:[%s452 + $0x118] sm:$0xff]
          %v2662 = vld [vmem:[%s452 + $0x120] sm:$0xff]
          %v2663 = vld [vmem:[%s452 + $0x128] sm:$0xff]
          %v2664 = vld [vmem:[%s452 + $0x130] sm:$0xff]
          %v2665 = vld [vmem:[%s452 + $0x138] sm:$0xff]
          %v2666 = vld [vmem:[%s452 + $0x140] sm:$0xff]
          %v2667 = vld [vmem:[%s452 + $0x148] sm:$0xff]
          %v2668 = vld [vmem:[%s452 + $0x150] sm:$0xff]
          %v2669 = vld [vmem:[%s452 + $0x158] sm:$0xff]
          %v2670 = vld [vmem:[%s452 + $0x160] sm:$0xff]
          %v2671 = vld [vmem:[%s452 + $0x168] sm:$0xff]
          %v2672 = vld [vmem:[%s452 + $0x170] sm:$0xff]
          %v2673 = vld [vmem:[%s452 + $0x178] sm:$0xff]
          %v2674 = vld [vmem:[%s452 + $0x180] sm:$0xff]
          %v2675 = vld [vmem:[%s452 + $0x188] sm:$0xff]
          %v2676 = vld [vmem:[%s452 + $0x190] sm:$0xff]
          %v2677 = vld [vmem:[%s452 + $0x198] sm:$0xff]
          %v2678 = vld [vmem:[%s452 + $0x1a0] sm:$0xff]
          %v2679 = vld [vmem:[%s452 + $0x1a8] sm:$0xff]
          %v2680 = vld [vmem:[%s452 + $0x1b0] sm:$0xff]
          %v2681 = vld [vmem:[%s452 + $0x1b8] sm:$0xff]
          %v2682 = vld [vmem:[%s452 + $0x1c0] sm:$0xff]
          %v2683 = vld [vmem:[%s452 + $0x1c8] sm:$0xff]
          %v2684 = vld [vmem:[%s452 + $0x1d0] sm:$0xff]
          %v2685 = vld [vmem:[%s452 + $0x1d8] sm:$0xff]
          %v2686 = vld [vmem:[%s452 + $0x1e0] sm:$0xff]
          %v2687 = vld [vmem:[%s452 + $0x1e8] sm:$0xff]
          %v2688 = vld [vmem:[%s452 + $0x1f0] sm:$0xff]
          %v2689 = vld [vmem:[%s452 + $0x1f8] sm:$0xff]
          %v2690 = vld [vmem:[%s443] sm:$0xff]
          %v2691 = vld [vmem:[%s443 + $0x8] sm:$0xff]
          %v2692 = vld [vmem:[%s443 + $0x10] sm:$0xff]
          %v2693 = vld [vmem:[%s443 + $0x18] sm:$0xff]
          %v2694 = vld [vmem:[%s443 + $0x20] sm:$0xff]
          %v2695 = vld [vmem:[%s443 + $0x28] sm:$0xff]
          %v2696 = vld [vmem:[%s443 + $0x30] sm:$0xff]
          %v2697 = vld [vmem:[%s443 + $0x38] sm:$0xff]
          %v2698 = vld [vmem:[%s443 + $0x40] sm:$0xff]
          %v2699 = vld [vmem:[%s443 + $0x48] sm:$0xff]
          %v2700 = vld [vmem:[%s443 + $0x50] sm:$0xff]
          %v2701 = vld [vmem:[%s443 + $0x58] sm:$0xff]
          %v2702 = vld [vmem:[%s443 + $0x60] sm:$0xff]
          %v2703 = vld [vmem:[%s443 + $0x68] sm:$0xff]
          %v2704 = vld [vmem:[%s443 + $0x70] sm:$0xff]
          %v2705 = vld [vmem:[%s443 + $0x78] sm:$0xff]
          %v2706 = vld [vmem:[%s443 + $0x80] sm:$0xff]
          %v2707 = vld [vmem:[%s443 + $0x88] sm:$0xff]
          %v2708 = vld [vmem:[%s443 + $0x90] sm:$0xff]
          %v2709 = vld [vmem:[%s443 + $0x98] sm:$0xff]
          %v2710 = vld [vmem:[%s443 + $0xa0] sm:$0xff]
          %v2711 = vld [vmem:[%s443 + $0xa8] sm:$0xff]
          %v2712 = vld [vmem:[%s443 + $0xb0] sm:$0xff]
          %v2713 = vld [vmem:[%s443 + $0xb8] sm:$0xff]
          %v2714 = vld [vmem:[%s443 + $0xc0] sm:$0xff]
          %v2715 = vld [vmem:[%s443 + $0xc8] sm:$0xff]
          %v2716 = vld [vmem:[%s443 + $0xd0] sm:$0xff]
          %v2717 = vld [vmem:[%s443 + $0xd8] sm:$0xff]
          %v2718 = vld [vmem:[%s443 + $0xe0] sm:$0xff]
          %v2719 = vld [vmem:[%s443 + $0xe8] sm:$0xff]
          %v2720 = vld [vmem:[%s443 + $0xf0] sm:$0xff]
          %v2721 = vld [vmem:[%s443 + $0xf8] sm:$0xff]
          %v2722 = vld [vmem:[%s443 + $0x100] sm:$0xff]
          %v2723 = vld [vmem:[%s443 + $0x108] sm:$0xff]
          %v2724 = vld [vmem:[%s443 + $0x110] sm:$0xff]
          %v2725 = vld [vmem:[%s443 + $0x118] sm:$0xff]
          %v2726 = vld [vmem:[%s443 + $0x120] sm:$0xff]
          %v2727 = vld [vmem:[%s443 + $0x128] sm:$0xff]
          %v2728 = vld [vmem:[%s443 + $0x130] sm:$0xff]
          %v2729 = vld [vmem:[%s443 + $0x138] sm:$0xff]
          %v2730 = vld [vmem:[%s443 + $0x140] sm:$0xff]
          %v2731 = vld [vmem:[%s443 + $0x148] sm:$0xff]
          %v2732 = vld [vmem:[%s443 + $0x150] sm:$0xff]
          %v2733 = vld [vmem:[%s443 + $0x158] sm:$0xff]
          %v2734 = vld [vmem:[%s443 + $0x160] sm:$0xff]
          %v2735 = vld [vmem:[%s443 + $0x168] sm:$0xff]
          %v2736 = vld [vmem:[%s443 + $0x170] sm:$0xff]
          %v2737 = vld [vmem:[%s443 + $0x178] sm:$0xff]
          %v2738 = vld [vmem:[%s443 + $0x180] sm:$0xff]
          %v2739 = vld [vmem:[%s443 + $0x188] sm:$0xff]
          %v2740 = vld [vmem:[%s443 + $0x190] sm:$0xff]
          %v2741 = vld [vmem:[%s443 + $0x198] sm:$0xff]
          %v2742 = vld [vmem:[%s443 + $0x1a0] sm:$0xff]
          %v2743 = vld [vmem:[%s443 + $0x1a8] sm:$0xff]
          %v2744 = vld [vmem:[%s443 + $0x1b0] sm:$0xff]
          %v2745 = vld [vmem:[%s443 + $0x1b8] sm:$0xff]
          %v2746 = vld [vmem:[%s443 + $0x1c0] sm:$0xff]
          %v2747 = vld [vmem:[%s443 + $0x1c8] sm:$0xff]
          %v2748 = vld [vmem:[%s443 + $0x1d0] sm:$0xff]
          %v2749 = vld [vmem:[%s443 + $0x1d8] sm:$0xff]
          %v2750 = vld [vmem:[%s443 + $0x1e0] sm:$0xff]
          %v2751 = vld [vmem:[%s443 + $0x1e8] sm:$0xff]
          %v2752 = vld [vmem:[%s443 + $0x1f0] sm:$0xff]
          %v2753 = vld [vmem:[%s443 + $0x1f8] sm:$0xff]
          %v2754 = vld [vmem:[#allocation2] sm:$0xff]
          %v2755 = vld [vmem:[#allocation2 + $0x8] sm:$0xff]
          %v2756 = vld [vmem:[#allocation2 + $0x10] sm:$0xff]
          %v2757 = vld [vmem:[#allocation2 + $0x18] sm:$0xff]
          %v2758 = vld [vmem:[#allocation2 + $0x20] sm:$0xff]
          %v2759 = vld [vmem:[#allocation2 + $0x28] sm:$0xff]
          %v2760 = vld [vmem:[#allocation2 + $0x30] sm:$0xff]
          %v2761 = vld [vmem:[#allocation2 + $0x38] sm:$0xff]
          %v2762 = vld [vmem:[#allocation2 + $0x40] sm:$0xff]
          %v2763 = vld [vmem:[#allocation2 + $0x48] sm:$0xff]
          %v2764 = vld [vmem:[#allocation2 + $0x50] sm:$0xff]
          %v2765 = vld [vmem:[#allocation2 + $0x58] sm:$0xff]
          %v2766 = vld [vmem:[#allocation2 + $0x60] sm:$0xff]
          %v2767 = vld [vmem:[#allocation2 + $0x68] sm:$0xff]
          %v2768 = vld [vmem:[#allocation2 + $0x70] sm:$0xff]
          %v2769 = vld [vmem:[#allocation2 + $0x78] sm:$0xff]
          %v2770 = vld [vmem:[#allocation2 + $0x80] sm:$0xff]
          %v2771 = vld [vmem:[#allocation2 + $0x88] sm:$0xff]
          %v2772 = vld [vmem:[#allocation2 + $0x90] sm:$0xff]
          %v2773 = vld [vmem:[#allocation2 + $0x98] sm:$0xff]
          %v2774 = vld [vmem:[#allocation2 + $0xa0] sm:$0xff]
          %v2775 = vld [vmem:[#allocation2 + $0xa8] sm:$0xff]
          %v2776 = vld [vmem:[#allocation2 + $0xb0] sm:$0xff]
          %v2777 = vld [vmem:[#allocation2 + $0xb8] sm:$0xff]
          %v2778 = vld [vmem:[#allocation2 + $0xc0] sm:$0xff]
          %v2779 = vld [vmem:[#allocation2 + $0xc8] sm:$0xff]
          %v2780 = vld [vmem:[#allocation2 + $0xd0] sm:$0xff]
          %v2781 = vld [vmem:[#allocation2 + $0xd8] sm:$0xff]
          %v2782 = vld [vmem:[#allocation2 + $0xe0] sm:$0xff]
          %v2783 = vld [vmem:[#allocation2 + $0xe8] sm:$0xff]
          %v2784 = vld [vmem:[#allocation2 + $0xf0] sm:$0xff]
          %v2785 = vld [vmem:[#allocation2 + $0xf8] sm:$0xff]
          %v2786 = vld [vmem:[#allocation2 + $0x100] sm:$0xff]
          %v2787 = vld [vmem:[#allocation2 + $0x108] sm:$0xff]
          %v2788 = vld [vmem:[#allocation2 + $0x110] sm:$0xff]
          %v2789 = vld [vmem:[#allocation2 + $0x118] sm:$0xff]
          %v2790 = vld [vmem:[#allocation2 + $0x120] sm:$0xff]
          %v2791 = vld [vmem:[#allocation2 + $0x128] sm:$0xff]
          %v2792 = vld [vmem:[#allocation2 + $0x130] sm:$0xff]
          %v2793 = vld [vmem:[#allocation2 + $0x138] sm:$0xff]
          %v2794 = vld [vmem:[#allocation2 + $0x140] sm:$0xff]
          %v2795 = vld [vmem:[#allocation2 + $0x148] sm:$0xff]
          %v2796 = vld [vmem:[#allocation2 + $0x150] sm:$0xff]
          %v2797 = vld [vmem:[#allocation2 + $0x158] sm:$0xff]
          %v2798 = vld [vmem:[#allocation2 + $0x160] sm:$0xff]
          %v2799 = vld [vmem:[#allocation2 + $0x168] sm:$0xff]
          %v2800 = vld [vmem:[#allocation2 + $0x170] sm:$0xff]
          %v2801 = vld [vmem:[#allocation2 + $0x178] sm:$0xff]
          %v2802 = vld [vmem:[#allocation2 + $0x180] sm:$0xff]
          %v2803 = vld [vmem:[#allocation2 + $0x188] sm:$0xff]
          %v2804 = vld [vmem:[#allocation2 + $0x190] sm:$0xff]
          %v2805 = vld [vmem:[#allocation2 + $0x198] sm:$0xff]
          %v2806 = vld [vmem:[#allocation2 + $0x1a0] sm:$0xff]
          %v2807 = vld [vmem:[#allocation2 + $0x1a8] sm:$0xff]
          %v2808 = vld [vmem:[#allocation2 + $0x1b0] sm:$0xff]
          %v2809 = vld [vmem:[#allocation2 + $0x1b8] sm:$0xff]
          %v2810 = vld [vmem:[#allocation2 + $0x1c0] sm:$0xff]
          %v2811 = vld [vmem:[#allocation2 + $0x1c8] sm:$0xff]
          %v2812 = vld [vmem:[#allocation2 + $0x1d0] sm:$0xff]
          %v2813 = vld [vmem:[#allocation2 + $0x1d8] sm:$0xff]
          %v2814 = vld [vmem:[#allocation2 + $0x1e0] sm:$0xff]
          %v2815 = vld [vmem:[#allocation2 + $0x1e8] sm:$0xff]
          %v2816 = vld [vmem:[#allocation2 + $0x1f0] sm:$0xff]
          %v2817 = vld [vmem:[#allocation2 + $0x1f8] sm:$0xff]
          %2819 = vset.pattern.permute.xlu0 0
          %2820 = vperm.xlu0 %2819, %v2626
          %v2821 = vpop.permute.xlu0 %2820
          %2824 = vset.pattern.permute.xlu0 0
          %2825 = vperm.xlu0 %2824, %v2627
          %v2826 = vpop.permute.xlu0 %2825
          %2829 = vset.pattern.permute.xlu0 0
          %2830 = vperm.xlu0 %2829, %v2628
          %v2831 = vpop.permute.xlu0 %2830
          %2834 = vset.pattern.permute.xlu0 0
          %2835 = vperm.xlu0 %2834, %v2629
          %v2836 = vpop.permute.xlu0 %2835
          %2839 = vset.pattern.permute.xlu0 0
          %2840 = vperm.xlu0 %2839, %v2630
          %v2841 = vpop.permute.xlu0 %2840
          %2844 = vset.pattern.permute.xlu0 0
          %2845 = vperm.xlu0 %2844, %v2631
          %v2846 = vpop.permute.xlu0 %2845
          %2849 = vset.pattern.permute.xlu0 0
          %2850 = vperm.xlu0 %2849, %v2632
          %v2851 = vpop.permute.xlu0 %2850
          %2854 = vset.pattern.permute.xlu0 0
          %2855 = vperm.xlu0 %2854, %v2633
          %v2856 = vpop.permute.xlu0 %2855
          %2859 = vset.pattern.permute.xlu0 0
          %2860 = vperm.xlu0 %2859, %v2634
          %v2861 = vpop.permute.xlu0 %2860
          %2864 = vset.pattern.permute.xlu0 0
          %2865 = vperm.xlu0 %2864, %v2635
          %v2866 = vpop.permute.xlu0 %2865
          %2869 = vset.pattern.permute.xlu0 0
          %2870 = vperm.xlu0 %2869, %v2636
          %v2871 = vpop.permute.xlu0 %2870
          %2874 = vset.pattern.permute.xlu0 0
          %2875 = vperm.xlu0 %2874, %v2637
          %v2876 = vpop.permute.xlu0 %2875
          %2879 = vset.pattern.permute.xlu0 0
          %2880 = vperm.xlu0 %2879, %v2638
          %v2881 = vpop.permute.xlu0 %2880
          %2884 = vset.pattern.permute.xlu0 0
          %2885 = vperm.xlu0 %2884, %v2639
          %v2886 = vpop.permute.xlu0 %2885
          %2889 = vset.pattern.permute.xlu0 0
          %2890 = vperm.xlu0 %2889, %v2640
          %v2891 = vpop.permute.xlu0 %2890
          %2894 = vset.pattern.permute.xlu0 0
          %2895 = vperm.xlu0 %2894, %v2641
          %v2896 = vpop.permute.xlu0 %2895
          %2899 = vset.pattern.permute.xlu0 0
          %2900 = vperm.xlu0 %2899, %v2642
          %v2901 = vpop.permute.xlu0 %2900
          %2904 = vset.pattern.permute.xlu0 0
          %2905 = vperm.xlu0 %2904, %v2643
          %v2906 = vpop.permute.xlu0 %2905
          %2909 = vset.pattern.permute.xlu0 0
          %2910 = vperm.xlu0 %2909, %v2644
          %v2911 = vpop.permute.xlu0 %2910
          %2914 = vset.pattern.permute.xlu0 0
          %2915 = vperm.xlu0 %2914, %v2645
          %v2916 = vpop.permute.xlu0 %2915
          %2919 = vset.pattern.permute.xlu0 0
          %2920 = vperm.xlu0 %2919, %v2646
          %v2921 = vpop.permute.xlu0 %2920
          %2924 = vset.pattern.permute.xlu0 0
          %2925 = vperm.xlu0 %2924, %v2647
          %v2926 = vpop.permute.xlu0 %2925
          %2929 = vset.pattern.permute.xlu0 0
          %2930 = vperm.xlu0 %2929, %v2648
          %v2931 = vpop.permute.xlu0 %2930
          %2934 = vset.pattern.permute.xlu0 0
          %2935 = vperm.xlu0 %2934, %v2649
          %v2936 = vpop.permute.xlu0 %2935
          %2939 = vset.pattern.permute.xlu0 0
          %2940 = vperm.xlu0 %2939, %v2650
          %v2941 = vpop.permute.xlu0 %2940
          %2944 = vset.pattern.permute.xlu0 0
          %2945 = vperm.xlu0 %2944, %v2651
          %v2946 = vpop.permute.xlu0 %2945
          %2949 = vset.pattern.permute.xlu0 0
          %2950 = vperm.xlu0 %2949, %v2652
          %v2951 = vpop.permute.xlu0 %2950
          %2954 = vset.pattern.permute.xlu0 0
          %2955 = vperm.xlu0 %2954, %v2653
          %v2956 = vpop.permute.xlu0 %2955
          %2959 = vset.pattern.permute.xlu0 0
          %2960 = vperm.xlu0 %2959, %v2654
          %v2961 = vpop.permute.xlu0 %2960
          %2964 = vset.pattern.permute.xlu0 0
          %2965 = vperm.xlu0 %2964, %v2655
          %v2966 = vpop.permute.xlu0 %2965
          %2969 = vset.pattern.permute.xlu0 0
          %2970 = vperm.xlu0 %2969, %v2656
          %v2971 = vpop.permute.xlu0 %2970
          %2974 = vset.pattern.permute.xlu0 0
          %2975 = vperm.xlu0 %2974, %v2657
          %v2976 = vpop.permute.xlu0 %2975
          %2979 = vset.pattern.permute.xlu0 0
          %2980 = vperm.xlu0 %2979, %v2658
          %v2981 = vpop.permute.xlu0 %2980
          %2984 = vset.pattern.permute.xlu0 0
          %2985 = vperm.xlu0 %2984, %v2659
          %v2986 = vpop.permute.xlu0 %2985
          %2989 = vset.pattern.permute.xlu0 0
          %2990 = vperm.xlu0 %2989, %v2660
          %v2991 = vpop.permute.xlu0 %2990
          %2994 = vset.pattern.permute.xlu0 0
          %2995 = vperm.xlu0 %2994, %v2661
          %v2996 = vpop.permute.xlu0 %2995
          %2999 = vset.pattern.permute.xlu0 0
          %3000 = vperm.xlu0 %2999, %v2662
          %v3001 = vpop.permute.xlu0 %3000
          %3004 = vset.pattern.permute.xlu0 0
          %3005 = vperm.xlu0 %3004, %v2663
          %v3006 = vpop.permute.xlu0 %3005
          %3009 = vset.pattern.permute.xlu0 0
          %3010 = vperm.xlu0 %3009, %v2664
          %v3011 = vpop.permute.xlu0 %3010
          %3014 = vset.pattern.permute.xlu0 0
          %3015 = vperm.xlu0 %3014, %v2665
          %v3016 = vpop.permute.xlu0 %3015
          %3019 = vset.pattern.permute.xlu0 0
          %3020 = vperm.xlu0 %3019, %v2666
          %v3021 = vpop.permute.xlu0 %3020
          %3024 = vset.pattern.permute.xlu0 0
          %3025 = vperm.xlu0 %3024, %v2667
          %v3026 = vpop.permute.xlu0 %3025
          %3029 = vset.pattern.permute.xlu0 0
          %3030 = vperm.xlu0 %3029, %v2668
          %v3031 = vpop.permute.xlu0 %3030
          %3034 = vset.pattern.permute.xlu0 0
          %3035 = vperm.xlu0 %3034, %v2669
          %v3036 = vpop.permute.xlu0 %3035
          %3039 = vset.pattern.permute.xlu0 0
          %3040 = vperm.xlu0 %3039, %v2670
          %v3041 = vpop.permute.xlu0 %3040
          %3044 = vset.pattern.permute.xlu0 0
          %3045 = vperm.xlu0 %3044, %v2671
          %v3046 = vpop.permute.xlu0 %3045
          %3049 = vset.pattern.permute.xlu0 0
          %3050 = vperm.xlu0 %3049, %v2672
          %v3051 = vpop.permute.xlu0 %3050
          %3054 = vset.pattern.permute.xlu0 0
          %3055 = vperm.xlu0 %3054, %v2673
          %v3056 = vpop.permute.xlu0 %3055
          %3059 = vset.pattern.permute.xlu0 0
          %3060 = vperm.xlu0 %3059, %v2674
          %v3061 = vpop.permute.xlu0 %3060
          %3064 = vset.pattern.permute.xlu0 0
          %3065 = vperm.xlu0 %3064, %v2675
          %v3066 = vpop.permute.xlu0 %3065
          %3069 = vset.pattern.permute.xlu0 0
          %3070 = vperm.xlu0 %3069, %v2676
          %v3071 = vpop.permute.xlu0 %3070
          %3074 = vset.pattern.permute.xlu0 0
          %3075 = vperm.xlu0 %3074, %v2677
          %v3076 = vpop.permute.xlu0 %3075
          %3079 = vset.pattern.permute.xlu0 0
          %3080 = vperm.xlu0 %3079, %v2678
          %v3081 = vpop.permute.xlu0 %3080
          %3084 = vset.pattern.permute.xlu0 0
          %3085 = vperm.xlu0 %3084, %v2679
          %v3086 = vpop.permute.xlu0 %3085
          %3089 = vset.pattern.permute.xlu0 0
          %3090 = vperm.xlu0 %3089, %v2680
          %v3091 = vpop.permute.xlu0 %3090
          %3094 = vset.pattern.permute.xlu0 0
          %3095 = vperm.xlu0 %3094, %v2681
          %v3096 = vpop.permute.xlu0 %3095
          %3099 = vset.pattern.permute.xlu0 0
          %3100 = vperm.xlu0 %3099, %v2682
          %v3101 = vpop.permute.xlu0 %3100
          %3104 = vset.pattern.permute.xlu0 0
          %3105 = vperm.xlu0 %3104, %v2683
          %v3106 = vpop.permute.xlu0 %3105
          %3109 = vset.pattern.permute.xlu0 0
          %3110 = vperm.xlu0 %3109, %v2684
          %v3111 = vpop.permute.xlu0 %3110
          %3114 = vset.pattern.permute.xlu0 0
          %3115 = vperm.xlu0 %3114, %v2685
          %v3116 = vpop.permute.xlu0 %3115
          %3119 = vset.pattern.permute.xlu0 0
          %3120 = vperm.xlu0 %3119, %v2686
          %v3121 = vpop.permute.xlu0 %3120
          %3124 = vset.pattern.permute.xlu0 0
          %3125 = vperm.xlu0 %3124, %v2687
          %v3126 = vpop.permute.xlu0 %3125
          %3129 = vset.pattern.permute.xlu0 0
          %3130 = vperm.xlu0 %3129, %v2688
          %v3131 = vpop.permute.xlu0 %3130
          %3134 = vset.pattern.permute.xlu0 0
          %3135 = vperm.xlu0 %3134, %v2689
          %v3136 = vpop.permute.xlu0 %3135
          %v3138 = vmul.f32 %v2821, %v2754
          %v3139 = vmul.f32 %v2826, %v2755
          %v3140 = vmul.f32 %v2831, %v2756
          %v3141 = vmul.f32 %v2836, %v2757
          %v3142 = vmul.f32 %v2841, %v2758
          %v3143 = vmul.f32 %v2846, %v2759
          %v3144 = vmul.f32 %v2851, %v2760
          %v3145 = vmul.f32 %v2856, %v2761
          %v3146 = vmul.f32 %v2861, %v2762
          %v3147 = vmul.f32 %v2866, %v2763
          %v3148 = vmul.f32 %v2871, %v2764
          %v3149 = vmul.f32 %v2876, %v2765
          %v3150 = vmul.f32 %v2881, %v2766
          %v3151 = vmul.f32 %v2886, %v2767
          %v3152 = vmul.f32 %v2891, %v2768
          %v3153 = vmul.f32 %v2896, %v2769
          %v3154 = vmul.f32 %v2901, %v2770
          %v3155 = vmul.f32 %v2906, %v2771
          %v3156 = vmul.f32 %v2911, %v2772
          %v3157 = vmul.f32 %v2916, %v2773
          %v3158 = vmul.f32 %v2921, %v2774
          %v3159 = vmul.f32 %v2926, %v2775
          %v3160 = vmul.f32 %v2931, %v2776
          %v3161 = vmul.f32 %v2936, %v2777
          %v3162 = vmul.f32 %v2941, %v2778
          %v3163 = vmul.f32 %v2946, %v2779
          %v3164 = vmul.f32 %v2951, %v2780
          %v3165 = vmul.f32 %v2956, %v2781
          %v3166 = vmul.f32 %v2961, %v2782
          %v3167 = vmul.f32 %v2966, %v2783
          %v3168 = vmul.f32 %v2971, %v2784
          %v3169 = vmul.f32 %v2976, %v2785
          %v3170 = vmul.f32 %v2981, %v2786
          %v3171 = vmul.f32 %v2986, %v2787
          %v3172 = vmul.f32 %v2991, %v2788
          %v3173 = vmul.f32 %v2996, %v2789
          %v3174 = vmul.f32 %v3001, %v2790
          %v3175 = vmul.f32 %v3006, %v2791
          %v3176 = vmul.f32 %v3011, %v2792
          %v3177 = vmul.f32 %v3016, %v2793
          %v3178 = vmul.f32 %v3021, %v2794
          %v3179 = vmul.f32 %v3026, %v2795
          %v3180 = vmul.f32 %v3031, %v2796
          %v3181 = vmul.f32 %v3036, %v2797
          %v3182 = vmul.f32 %v3041, %v2798
          %v3183 = vmul.f32 %v3046, %v2799
          %v3184 = vmul.f32 %v3051, %v2800
          %v3185 = vmul.f32 %v3056, %v2801
          %v3186 = vmul.f32 %v3061, %v2802
          %v3187 = vmul.f32 %v3066, %v2803
          %v3188 = vmul.f32 %v3071, %v2804
          %v3189 = vmul.f32 %v3076, %v2805
          %v3190 = vmul.f32 %v3081, %v2806
          %v3191 = vmul.f32 %v3086, %v2807
          %v3192 = vmul.f32 %v3091, %v2808
          %v3193 = vmul.f32 %v3096, %v2809
          %v3194 = vmul.f32 %v3101, %v2810
          %v3195 = vmul.f32 %v3106, %v2811
          %v3196 = vmul.f32 %v3111, %v2812
          %v3197 = vmul.f32 %v3116, %v2813
          %v3198 = vmul.f32 %v3121, %v2814
          %v3199 = vmul.f32 %v3126, %v2815
          %v3200 = vmul.f32 %v3131, %v2816
          %v3201 = vmul.f32 %v3136, %v2817
          %v3202 = vadd.f32 %v2690, %v3138
          %v3203 = vadd.f32 %v2691, %v3139
          %v3204 = vadd.f32 %v2692, %v3140
          %v3205 = vadd.f32 %v2693, %v3141
          %v3206 = vadd.f32 %v2694, %v3142
          %v3207 = vadd.f32 %v2695, %v3143
          %v3208 = vadd.f32 %v2696, %v3144
          %v3209 = vadd.f32 %v2697, %v3145
          %v3210 = vadd.f32 %v2698, %v3146
          %v3211 = vadd.f32 %v2699, %v3147
          %v3212 = vadd.f32 %v2700, %v3148
          %v3213 = vadd.f32 %v2701, %v3149
          %v3214 = vadd.f32 %v2702, %v3150
          %v3215 = vadd.f32 %v2703, %v3151
          %v3216 = vadd.f32 %v2704, %v3152
          %v3217 = vadd.f32 %v2705, %v3153
          %v3218 = vadd.f32 %v2706, %v3154
          %v3219 = vadd.f32 %v2707, %v3155
          %v3220 = vadd.f32 %v2708, %v3156
          %v3221 = vadd.f32 %v2709, %v3157
          %v3222 = vadd.f32 %v2710, %v3158
          %v3223 = vadd.f32 %v2711, %v3159
          %v3224 = vadd.f32 %v2712, %v3160
          %v3225 = vadd.f32 %v2713, %v3161
          %v3226 = vadd.f32 %v2714, %v3162
          %v3227 = vadd.f32 %v2715, %v3163
          %v3228 = vadd.f32 %v2716, %v3164
          %v3229 = vadd.f32 %v2717, %v3165
          %v3230 = vadd.f32 %v2718, %v3166
          %v3231 = vadd.f32 %v2719, %v3167
          %v3232 = vadd.f32 %v2720, %v3168
          %v3233 = vadd.f32 %v2721, %v3169
          %v3234 = vadd.f32 %v2722, %v3170
          %v3235 = vadd.f32 %v2723, %v3171
          %v3236 = vadd.f32 %v2724, %v3172
          %v3237 = vadd.f32 %v2725, %v3173
          %v3238 = vadd.f32 %v2726, %v3174
          %v3239 = vadd.f32 %v2727, %v3175
          %v3240 = vadd.f32 %v2728, %v3176
          %v3241 = vadd.f32 %v2729, %v3177
          %v3242 = vadd.f32 %v2730, %v3178
          %v3243 = vadd.f32 %v2731, %v3179
          %v3244 = vadd.f32 %v2732, %v3180
          %v3245 = vadd.f32 %v2733, %v3181
          %v3246 = vadd.f32 %v2734, %v3182
          %v3247 = vadd.f32 %v2735, %v3183
          %v3248 = vadd.f32 %v2736, %v3184
          %v3249 = vadd.f32 %v2737, %v3185
          %v3250 = vadd.f32 %v2738, %v3186
          %v3251 = vadd.f32 %v2739, %v3187
          %v3252 = vadd.f32 %v2740, %v3188
          %v3253 = vadd.f32 %v2741, %v3189
          %v3254 = vadd.f32 %v2742, %v3190
          %v3255 = vadd.f32 %v2743, %v3191
          %v3256 = vadd.f32 %v2744, %v3192
          %v3257 = vadd.f32 %v2745, %v3193
          %v3258 = vadd.f32 %v2746, %v3194
          %v3259 = vadd.f32 %v2747, %v3195
          %v3260 = vadd.f32 %v2748, %v3196
          %v3261 = vadd.f32 %v2749, %v3197
          %v3262 = vadd.f32 %v2750, %v3198
          %v3263 = vadd.f32 %v2751, %v3199
          %v3264 = vadd.f32 %v2752, %v3200
          %v3265 = vadd.f32 %v2753, %v3201
          %v3266 = vld [vmem:[%s6] sm:$0x1]
          %v3268 = vlaneseq
          %v3269 = vshrl.u32 %v3268, 7
          %v3270 = vsub.s32 0, %v3269
          %v3271 = vrot.slane %v3266, %v3270
          %v3273 = vadd.f32 %v3202, %v3271
          %v3274 = vadd.f32 %v3203, %v3271
          %v3275 = vadd.f32 %v3204, %v3271
          %v3276 = vadd.f32 %v3205, %v3271
          %v3277 = vadd.f32 %v3206, %v3271
          %v3278 = vadd.f32 %v3207, %v3271
          %v3279 = vadd.f32 %v3208, %v3271
          %v3280 = vadd.f32 %v3209, %v3271
          %v3281 = vadd.f32 %v3210, %v3271
          %v3282 = vadd.f32 %v3211, %v3271
          %v3283 = vadd.f32 %v3212, %v3271
          %v3284 = vadd.f32 %v3213, %v3271
          %v3285 = vadd.f32 %v3214, %v3271
          %v3286 = vadd.f32 %v3215, %v3271
          %v3287 = vadd.f32 %v3216, %v3271
          %v3288 = vadd.f32 %v3217, %v3271
          %v3289 = vadd.f32 %v3218, %v3271
          %v3290 = vadd.f32 %v3219, %v3271
          %v3291 = vadd.f32 %v3220, %v3271
          %v3292 = vadd.f32 %v3221, %v3271
          %v3293 = vadd.f32 %v3222, %v3271
          %v3294 = vadd.f32 %v3223, %v3271
          %v3295 = vadd.f32 %v3224, %v3271
          %v3296 = vadd.f32 %v3225, %v3271
          %v3297 = vadd.f32 %v3226, %v3271
          %v3298 = vadd.f32 %v3227, %v3271
          %v3299 = vadd.f32 %v3228, %v3271
          %v3300 = vadd.f32 %v3229, %v3271
          %v3301 = vadd.f32 %v3230, %v3271
          %v3302 = vadd.f32 %v3231, %v3271
          %v3303 = vadd.f32 %v3232, %v3271
          %v3304 = vadd.f32 %v3233, %v3271
          %v3305 = vadd.f32 %v3234, %v3271
          %v3306 = vadd.f32 %v3235, %v3271
          %v3307 = vadd.f32 %v3236, %v3271
          %v3308 = vadd.f32 %v3237, %v3271
          %v3309 = vadd.f32 %v3238, %v3271
          %v3310 = vadd.f32 %v3239, %v3271
          %v3311 = vadd.f32 %v3240, %v3271
          %v3312 = vadd.f32 %v3241, %v3271
          %v3313 = vadd.f32 %v3242, %v3271
          %v3314 = vadd.f32 %v3243, %v3271
          %v3315 = vadd.f32 %v3244, %v3271
          %v3316 = vadd.f32 %v3245, %v3271
          %v3317 = vadd.f32 %v3246, %v3271
          %v3318 = vadd.f32 %v3247, %v3271
          %v3319 = vadd.f32 %v3248, %v3271
          %v3320 = vadd.f32 %v3249, %v3271
          %v3321 = vadd.f32 %v3250, %v3271
          %v3322 = vadd.f32 %v3251, %v3271
          %v3323 = vadd.f32 %v3252, %v3271
          %v3324 = vadd.f32 %v3253, %v3271
          %v3325 = vadd.f32 %v3254, %v3271
          %v3326 = vadd.f32 %v3255, %v3271
          %v3327 = vadd.f32 %v3256, %v3271
          %v3328 = vadd.f32 %v3257, %v3271
          %v3329 = vadd.f32 %v3258, %v3271
          %v3330 = vadd.f32 %v3259, %v3271
          %v3331 = vadd.f32 %v3260, %v3271
          %v3332 = vadd.f32 %v3261, %v3271
          %v3333 = vadd.f32 %v3262, %v3271
          %v3334 = vadd.f32 %v3263, %v3271
          %v3335 = vadd.f32 %v3264, %v3271
          %v3336 = vadd.f32 %v3265, %v3271
          %v3337 = vmax.f32 %v3273, 0.0
          %v3338 = vmax.f32 %v3274, 0.0
          %v3339 = vmax.f32 %v3275, 0.0
          %v3340 = vmax.f32 %v3276, 0.0
          %v3341 = vmax.f32 %v3277, 0.0
          %v3342 = vmax.f32 %v3278, 0.0
          %v3343 = vmax.f32 %v3279, 0.0
          %v3344 = vmax.f32 %v3280, 0.0
          %v3345 = vmax.f32 %v3281, 0.0
          %v3346 = vmax.f32 %v3282, 0.0
          %v3347 = vmax.f32 %v3283, 0.0
          %v3348 = vmax.f32 %v3284, 0.0
          %v3349 = vmax.f32 %v3285, 0.0
          %v3350 = vmax.f32 %v3286, 0.0
          %v3351 = vmax.f32 %v3287, 0.0
          %v3352 = vmax.f32 %v3288, 0.0
          %v3353 = vmax.f32 %v3289, 0.0
          %v3354 = vmax.f32 %v3290, 0.0
          %v3355 = vmax.f32 %v3291, 0.0
          %v3356 = vmax.f32 %v3292, 0.0
          %v3357 = vmax.f32 %v3293, 0.0
          %v3358 = vmax.f32 %v3294, 0.0
          %v3359 = vmax.f32 %v3295, 0.0
          %v3360 = vmax.f32 %v3296, 0.0
          %v3361 = vmax.f32 %v3297, 0.0
          %v3362 = vmax.f32 %v3298, 0.0
          %v3363 = vmax.f32 %v3299, 0.0
          %v3364 = vmax.f32 %v3300, 0.0
          %v3365 = vmax.f32 %v3301, 0.0
          %v3366 = vmax.f32 %v3302, 0.0
          %v3367 = vmax.f32 %v3303, 0.0
          %v3368 = vmax.f32 %v3304, 0.0
          %v3369 = vmax.f32 %v3305, 0.0
          %v3370 = vmax.f32 %v3306, 0.0
          %v3371 = vmax.f32 %v3307, 0.0
          %v3372 = vmax.f32 %v3308, 0.0
          %v3373 = vmax.f32 %v3309, 0.0
          %v3374 = vmax.f32 %v3310, 0.0
          %v3375 = vmax.f32 %v3311, 0.0
          %v3376 = vmax.f32 %v3312, 0.0
          %v3377 = vmax.f32 %v3313, 0.0
          %v3378 = vmax.f32 %v3314, 0.0
          %v3379 = vmax.f32 %v3315, 0.0
          %v3380 = vmax.f32 %v3316, 0.0
          %v3381 = vmax.f32 %v3317, 0.0
          %v3382 = vmax.f32 %v3318, 0.0
          %v3383 = vmax.f32 %v3319, 0.0
          %v3384 = vmax.f32 %v3320, 0.0
          %v3385 = vmax.f32 %v3321, 0.0
          %v3386 = vmax.f32 %v3322, 0.0
          %v3387 = vmax.f32 %v3323, 0.0
          %v3388 = vmax.f32 %v3324, 0.0
          %v3389 = vmax.f32 %v3325, 0.0
          %v3390 = vmax.f32 %v3326, 0.0
          %v3391 = vmax.f32 %v3327, 0.0
          %v3392 = vmax.f32 %v3328, 0.0
          %v3393 = vmax.f32 %v3329, 0.0
          %v3394 = vmax.f32 %v3330, 0.0
          %v3395 = vmax.f32 %v3331, 0.0
          %v3396 = vmax.f32 %v3332, 0.0
          %v3397 = vmax.f32 %v3333, 0.0
          %v3398 = vmax.f32 %v3334, 0.0
          %v3399 = vmax.f32 %v3335, 0.0
          %v3400 = vmax.f32 %v3336, 0.0
          %s3401 = smul.u32 %s38, 512
          %v3402 = vpack.c.bf16 %v3338, %v3337
          %v3403 = vpack.c.bf16 %v3340, %v3339
          %v3404 = vpack.c.bf16 %v3342, %v3341
          %v3405 = vpack.c.bf16 %v3344, %v3343
          %v3406 = vpack.c.bf16 %v3346, %v3345
          %v3407 = vpack.c.bf16 %v3348, %v3347
          %v3408 = vpack.c.bf16 %v3350, %v3349
          %v3409 = vpack.c.bf16 %v3352, %v3351
          %v3410 = vpack.c.bf16 %v3354, %v3353
          %v3411 = vpack.c.bf16 %v3356, %v3355
          %v3412 = vpack.c.bf16 %v3358, %v3357
          %v3413 = vpack.c.bf16 %v3360, %v3359
          %v3414 = vpack.c.bf16 %v3362, %v3361
          %v3415 = vpack.c.bf16 %v3364, %v3363
          %v3416 = vpack.c.bf16 %v3366, %v3365
          %v3417 = vpack.c.bf16 %v3368, %v3367
          %v3418 = vpack.c.bf16 %v3370, %v3369
          %v3419 = vpack.c.bf16 %v3372, %v3371
          %v3420 = vpack.c.bf16 %v3374, %v3373
          %v3421 = vpack.c.bf16 %v3376, %v3375
          %v3422 = vpack.c.bf16 %v3378, %v3377
          %v3423 = vpack.c.bf16 %v3380, %v3379
          %v3424 = vpack.c.bf16 %v3382, %v3381
          %v3425 = vpack.c.bf16 %v3384, %v3383
          %v3426 = vpack.c.bf16 %v3386, %v3385
          %v3427 = vpack.c.bf16 %v3388, %v3387
          %v3428 = vpack.c.bf16 %v3390, %v3389
          %v3429 = vpack.c.bf16 %v3392, %v3391
          %v3430 = vpack.c.bf16 %v3394, %v3393
          %v3431 = vpack.c.bf16 %v3396, %v3395
          %v3432 = vpack.c.bf16 %v3398, %v3397
          %v3433 = vpack.c.bf16 %v3400, %v3399
          %s3434 = sshra.s32 %s3401, 4
          %s3435 = sand.u32 %s3401, 15
          %s3436 = smul.addr %s3434, 8
          %s3437 = scalar_lea.vmem [#allocation3], %s3436
          %3438 = vst [vmem:[%s3437] sm:$0xff] %v3402
          %3439 = vst [vmem:[%s3437 + $0x8] sm:$0xff] %v3403
          %3440 = vst [vmem:[%s3437 + $0x10] sm:$0xff] %v3404
          %3441 = vst [vmem:[%s3437 + $0x18] sm:$0xff] %v3405
          %3442 = vst [vmem:[%s3437 + $0x20] sm:$0xff] %v3406
          %3443 = vst [vmem:[%s3437 + $0x28] sm:$0xff] %v3407
          %3444 = vst [vmem:[%s3437 + $0x30] sm:$0xff] %v3408
          %3445 = vst [vmem:[%s3437 + $0x38] sm:$0xff] %v3409
          %3446 = vst [vmem:[%s3437 + $0x40] sm:$0xff] %v3410
          %3447 = vst [vmem:[%s3437 + $0x48] sm:$0xff] %v3411
          %3448 = vst [vmem:[%s3437 + $0x50] sm:$0xff] %v3412
          %3449 = vst [vmem:[%s3437 + $0x58] sm:$0xff] %v3413
          %3450 = vst [vmem:[%s3437 + $0x60] sm:$0xff] %v3414
          %3451 = vst [vmem:[%s3437 + $0x68] sm:$0xff] %v3415
          %3452 = vst [vmem:[%s3437 + $0x70] sm:$0xff] %v3416
          %3453 = vst [vmem:[%s3437 + $0x78] sm:$0xff] %v3417
          %3454 = vst [vmem:[%s3437 + $0x80] sm:$0xff] %v3418
          %3455 = vst [vmem:[%s3437 + $0x88] sm:$0xff] %v3419
          %3456 = vst [vmem:[%s3437 + $0x90] sm:$0xff] %v3420
          %3457 = vst [vmem:[%s3437 + $0x98] sm:$0xff] %v3421
          %3458 = vst [vmem:[%s3437 + $0xa0] sm:$0xff] %v3422
          %3459 = vst [vmem:[%s3437 + $0xa8] sm:$0xff] %v3423
          %3460 = vst [vmem:[%s3437 + $0xb0] sm:$0xff] %v3424
          %3461 = vst [vmem:[%s3437 + $0xb8] sm:$0xff] %v3425
          %3462 = vst [vmem:[%s3437 + $0xc0] sm:$0xff] %v3426
          %3463 = vst [vmem:[%s3437 + $0xc8] sm:$0xff] %v3427
          %3464 = vst [vmem:[%s3437 + $0xd0] sm:$0xff] %v3428
          %3465 = vst [vmem:[%s3437 + $0xd8] sm:$0xff] %v3429
          %3466 = vst [vmem:[%s3437 + $0xe0] sm:$0xff] %v3430
          %3467 = vst [vmem:[%s3437 + $0xe8] sm:$0xff] %v3431
          %3468 = vst [vmem:[%s3437 + $0xf0] sm:$0xff] %v3432
          %3469 = vst [vmem:[%s3437 + $0xf8] sm:$0xff] %v3433
        $region92: #{tpu_custom_call.1} parent=51 // pred_fallthru
          _
        %p3470 = pnand %p1810, %p2621
        %p3471 = pneg %p3470
        // Predicated region
        $region93: #{tpu_custom_call.1} parent=51 // pred_check
          _
        $region94: #{tpu_custom_call.1} parent=51 // pred_check_branch
          %3473 = sbr.rel (%p3470) target = $region96
        $region95: #{tpu_custom_call.1} parent=51 // pred_region
          %v3474 = vld [vmem:[%s452] sm:$0xff]
          %v3475 = vld [vmem:[%s452 + $0x8] sm:$0xff]
          %v3476 = vld [vmem:[%s452 + $0x10] sm:$0xff]
          %v3477 = vld [vmem:[%s452 + $0x18] sm:$0xff]
          %v3478 = vld [vmem:[%s452 + $0x20] sm:$0xff]
          %v3479 = vld [vmem:[%s452 + $0x28] sm:$0xff]
          %v3480 = vld [vmem:[%s452 + $0x30] sm:$0xff]
          %v3481 = vld [vmem:[%s452 + $0x38] sm:$0xff]
          %v3482 = vld [vmem:[%s452 + $0x40] sm:$0xff]
          %v3483 = vld [vmem:[%s452 + $0x48] sm:$0xff]
          %v3484 = vld [vmem:[%s452 + $0x50] sm:$0xff]
          %v3485 = vld [vmem:[%s452 + $0x58] sm:$0xff]
          %v3486 = vld [vmem:[%s452 + $0x60] sm:$0xff]
          %v3487 = vld [vmem:[%s452 + $0x68] sm:$0xff]
          %v3488 = vld [vmem:[%s452 + $0x70] sm:$0xff]
          %v3489 = vld [vmem:[%s452 + $0x78] sm:$0xff]
          %v3490 = vld [vmem:[%s452 + $0x80] sm:$0xff]
          %v3491 = vld [vmem:[%s452 + $0x88] sm:$0xff]
          %v3492 = vld [vmem:[%s452 + $0x90] sm:$0xff]
          %v3493 = vld [vmem:[%s452 + $0x98] sm:$0xff]
          %v3494 = vld [vmem:[%s452 + $0xa0] sm:$0xff]
          %v3495 = vld [vmem:[%s452 + $0xa8] sm:$0xff]
          %v3496 = vld [vmem:[%s452 + $0xb0] sm:$0xff]
          %v3497 = vld [vmem:[%s452 + $0xb8] sm:$0xff]
          %v3498 = vld [vmem:[%s452 + $0xc0] sm:$0xff]
          %v3499 = vld [vmem:[%s452 + $0xc8] sm:$0xff]
          %v3500 = vld [vmem:[%s452 + $0xd0] sm:$0xff]
          %v3501 = vld [vmem:[%s452 + $0xd8] sm:$0xff]
          %v3502 = vld [vmem:[%s452 + $0xe0] sm:$0xff]
          %v3503 = vld [vmem:[%s452 + $0xe8] sm:$0xff]
          %v3504 = vld [vmem:[%s452 + $0xf0] sm:$0xff]
          %v3505 = vld [vmem:[%s452 + $0xf8] sm:$0xff]
          %v3506 = vld [vmem:[%s452 + $0x100] sm:$0xff]
          %v3507 = vld [vmem:[%s452 + $0x108] sm:$0xff]
          %v3508 = vld [vmem:[%s452 + $0x110] sm:$0xff]
          %v3509 = vld [vmem:[%s452 + $0x118] sm:$0xff]
          %v3510 = vld [vmem:[%s452 + $0x120] sm:$0xff]
          %v3511 = vld [vmem:[%s452 + $0x128] sm:$0xff]
          %v3512 = vld [vmem:[%s452 + $0x130] sm:$0xff]
          %v3513 = vld [vmem:[%s452 + $0x138] sm:$0xff]
          %v3514 = vld [vmem:[%s452 + $0x140] sm:$0xff]
          %v3515 = vld [vmem:[%s452 + $0x148] sm:$0xff]
          %v3516 = vld [vmem:[%s452 + $0x150] sm:$0xff]
          %v3517 = vld [vmem:[%s452 + $0x158] sm:$0xff]
          %v3518 = vld [vmem:[%s452 + $0x160] sm:$0xff]
          %v3519 = vld [vmem:[%s452 + $0x168] sm:$0xff]
          %v3520 = vld [vmem:[%s452 + $0x170] sm:$0xff]
          %v3521 = vld [vmem:[%s452 + $0x178] sm:$0xff]
          %v3522 = vld [vmem:[%s452 + $0x180] sm:$0xff]
          %v3523 = vld [vmem:[%s452 + $0x188] sm:$0xff]
          %v3524 = vld [vmem:[%s452 + $0x190] sm:$0xff]
          %v3525 = vld [vmem:[%s452 + $0x198] sm:$0xff]
          %v3526 = vld [vmem:[%s452 + $0x1a0] sm:$0xff]
          %v3527 = vld [vmem:[%s452 + $0x1a8] sm:$0xff]
          %v3528 = vld [vmem:[%s452 + $0x1b0] sm:$0xff]
          %v3529 = vld [vmem:[%s452 + $0x1b8] sm:$0xff]
          %v3530 = vld [vmem:[%s452 + $0x1c0] sm:$0xff]
          %v3531 = vld [vmem:[%s452 + $0x1c8] sm:$0xff]
          %v3532 = vld [vmem:[%s452 + $0x1d0] sm:$0xff]
          %v3533 = vld [vmem:[%s452 + $0x1d8] sm:$0xff]
          %v3534 = vld [vmem:[%s452 + $0x1e0] sm:$0xff]
          %v3535 = vld [vmem:[%s452 + $0x1e8] sm:$0xff]
          %v3536 = vld [vmem:[%s452 + $0x1f0] sm:$0xff]
          %v3537 = vld [vmem:[%s452 + $0x1f8] sm:$0xff]
          %s3538 = smul.u32 %s38, 512
          %s3539 = sshra.s32 %s3538, 4
          %s3540 = sand.u32 %s3538, 15
          %s3541 = smul.addr %s3539, 8
          %s3542 = scalar_lea.vmem [#allocation3], %s3541
          %v3543 = vld [vmem:[%s3542] sm:$0xff]
          %v3544 = vld [vmem:[%s3542 + $0x8] sm:$0xff]
          %v3545 = vld [vmem:[%s3542 + $0x10] sm:$0xff]
          %v3546 = vld [vmem:[%s3542 + $0x18] sm:$0xff]
          %v3547 = vld [vmem:[%s3542 + $0x20] sm:$0xff]
          %v3548 = vld [vmem:[%s3542 + $0x28] sm:$0xff]
          %v3549 = vld [vmem:[%s3542 + $0x30] sm:$0xff]
          %v3550 = vld [vmem:[%s3542 + $0x38] sm:$0xff]
          %v3551 = vld [vmem:[%s3542 + $0x40] sm:$0xff]
          %v3552 = vld [vmem:[%s3542 + $0x48] sm:$0xff]
          %v3553 = vld [vmem:[%s3542 + $0x50] sm:$0xff]
          %v3554 = vld [vmem:[%s3542 + $0x58] sm:$0xff]
          %v3555 = vld [vmem:[%s3542 + $0x60] sm:$0xff]
          %v3556 = vld [vmem:[%s3542 + $0x68] sm:$0xff]
          %v3557 = vld [vmem:[%s3542 + $0x70] sm:$0xff]
          %v3558 = vld [vmem:[%s3542 + $0x78] sm:$0xff]
          %v3559 = vld [vmem:[%s3542 + $0x80] sm:$0xff]
          %v3560 = vld [vmem:[%s3542 + $0x88] sm:$0xff]
          %v3561 = vld [vmem:[%s3542 + $0x90] sm:$0xff]
          %v3562 = vld [vmem:[%s3542 + $0x98] sm:$0xff]
          %v3563 = vld [vmem:[%s3542 + $0xa0] sm:$0xff]
          %v3564 = vld [vmem:[%s3542 + $0xa8] sm:$0xff]
          %v3565 = vld [vmem:[%s3542 + $0xb0] sm:$0xff]
          %v3566 = vld [vmem:[%s3542 + $0xb8] sm:$0xff]
          %v3567 = vld [vmem:[%s3542 + $0xc0] sm:$0xff]
          %v3568 = vld [vmem:[%s3542 + $0xc8] sm:$0xff]
          %v3569 = vld [vmem:[%s3542 + $0xd0] sm:$0xff]
          %v3570 = vld [vmem:[%s3542 + $0xd8] sm:$0xff]
          %v3571 = vld [vmem:[%s3542 + $0xe0] sm:$0xff]
          %v3572 = vld [vmem:[%s3542 + $0xe8] sm:$0xff]
          %v3573 = vld [vmem:[%s3542 + $0xf0] sm:$0xff]
          %v3574 = vld [vmem:[%s3542 + $0xf8] sm:$0xff]
          %v3575 = vld [vmem:[#allocation2] sm:$0xff]
          %v3576 = vld [vmem:[#allocation2 + $0x8] sm:$0xff]
          %v3577 = vld [vmem:[#allocation2 + $0x10] sm:$0xff]
          %v3578 = vld [vmem:[#allocation2 + $0x18] sm:$0xff]
          %v3579 = vld [vmem:[#allocation2 + $0x20] sm:$0xff]
          %v3580 = vld [vmem:[#allocation2 + $0x28] sm:$0xff]
          %v3581 = vld [vmem:[#allocation2 + $0x30] sm:$0xff]
          %v3582 = vld [vmem:[#allocation2 + $0x38] sm:$0xff]
          %v3583 = vld [vmem:[#allocation2 + $0x40] sm:$0xff]
          %v3584 = vld [vmem:[#allocation2 + $0x48] sm:$0xff]
          %v3585 = vld [vmem:[#allocation2 + $0x50] sm:$0xff]
          %v3586 = vld [vmem:[#allocation2 + $0x58] sm:$0xff]
          %v3587 = vld [vmem:[#allocation2 + $0x60] sm:$0xff]
          %v3588 = vld [vmem:[#allocation2 + $0x68] sm:$0xff]
          %v3589 = vld [vmem:[#allocation2 + $0x70] sm:$0xff]
          %v3590 = vld [vmem:[#allocation2 + $0x78] sm:$0xff]
          %v3591 = vld [vmem:[#allocation2 + $0x80] sm:$0xff]
          %v3592 = vld [vmem:[#allocation2 + $0x88] sm:$0xff]
          %v3593 = vld [vmem:[#allocation2 + $0x90] sm:$0xff]
          %v3594 = vld [vmem:[#allocation2 + $0x98] sm:$0xff]
          %v3595 = vld [vmem:[#allocation2 + $0xa0] sm:$0xff]
          %v3596 = vld [vmem:[#allocation2 + $0xa8] sm:$0xff]
          %v3597 = vld [vmem:[#allocation2 + $0xb0] sm:$0xff]
          %v3598 = vld [vmem:[#allocation2 + $0xb8] sm:$0xff]
          %v3599 = vld [vmem:[#allocation2 + $0xc0] sm:$0xff]
          %v3600 = vld [vmem:[#allocation2 + $0xc8] sm:$0xff]
          %v3601 = vld [vmem:[#allocation2 + $0xd0] sm:$0xff]
          %v3602 = vld [vmem:[#allocation2 + $0xd8] sm:$0xff]
          %v3603 = vld [vmem:[#allocation2 + $0xe0] sm:$0xff]
          %v3604 = vld [vmem:[#allocation2 + $0xe8] sm:$0xff]
          %v3605 = vld [vmem:[#allocation2 + $0xf0] sm:$0xff]
          %v3606 = vld [vmem:[#allocation2 + $0xf8] sm:$0xff]
          %v3607 = vld [vmem:[#allocation2 + $0x100] sm:$0xff]
          %v3608 = vld [vmem:[#allocation2 + $0x108] sm:$0xff]
          %v3609 = vld [vmem:[#allocation2 + $0x110] sm:$0xff]
          %v3610 = vld [vmem:[#allocation2 + $0x118] sm:$0xff]
          %v3611 = vld [vmem:[#allocation2 + $0x120] sm:$0xff]
          %v3612 = vld [vmem:[#allocation2 + $0x128] sm:$0xff]
          %v3613 = vld [vmem:[#allocation2 + $0x130] sm:$0xff]
          %v3614 = vld [vmem:[#allocation2 + $0x138] sm:$0xff]
          %v3615 = vld [vmem:[#allocation2 + $0x140] sm:$0xff]
          %v3616 = vld [vmem:[#allocation2 + $0x148] sm:$0xff]
          %v3617 = vld [vmem:[#allocation2 + $0x150] sm:$0xff]
          %v3618 = vld [vmem:[#allocation2 + $0x158] sm:$0xff]
          %v3619 = vld [vmem:[#allocation2 + $0x160] sm:$0xff]
          %v3620 = vld [vmem:[#allocation2 + $0x168] sm:$0xff]
          %v3621 = vld [vmem:[#allocation2 + $0x170] sm:$0xff]
          %v3622 = vld [vmem:[#allocation2 + $0x178] sm:$0xff]
          %v3623 = vld [vmem:[#allocation2 + $0x180] sm:$0xff]
          %v3624 = vld [vmem:[#allocation2 + $0x188] sm:$0xff]
          %v3625 = vld [vmem:[#allocation2 + $0x190] sm:$0xff]
          %v3626 = vld [vmem:[#allocation2 + $0x198] sm:$0xff]
          %v3627 = vld [vmem:[#allocation2 + $0x1a0] sm:$0xff]
          %v3628 = vld [vmem:[#allocation2 + $0x1a8] sm:$0xff]
          %v3629 = vld [vmem:[#allocation2 + $0x1b0] sm:$0xff]
          %v3630 = vld [vmem:[#allocation2 + $0x1b8] sm:$0xff]
          %v3631 = vld [vmem:[#allocation2 + $0x1c0] sm:$0xff]
          %v3632 = vld [vmem:[#allocation2 + $0x1c8] sm:$0xff]
          %v3633 = vld [vmem:[#allocation2 + $0x1d0] sm:$0xff]
          %v3634 = vld [vmem:[#allocation2 + $0x1d8] sm:$0xff]
          %v3635 = vld [vmem:[#allocation2 + $0x1e0] sm:$0xff]
          %v3636 = vld [vmem:[#allocation2 + $0x1e8] sm:$0xff]
          %v3637 = vld [vmem:[#allocation2 + $0x1f0] sm:$0xff]
          %v3638 = vld [vmem:[#allocation2 + $0x1f8] sm:$0xff]
          %3640 = vset.pattern.permute.xlu0 0
          %3641 = vperm.xlu0 %3640, %v3474
          %v3642 = vpop.permute.xlu0 %3641
          %3645 = vset.pattern.permute.xlu0 0
          %3646 = vperm.xlu0 %3645, %v3475
          %v3647 = vpop.permute.xlu0 %3646
          %3650 = vset.pattern.permute.xlu0 0
          %3651 = vperm.xlu0 %3650, %v3476
          %v3652 = vpop.permute.xlu0 %3651
          %3655 = vset.pattern.permute.xlu0 0
          %3656 = vperm.xlu0 %3655, %v3477
          %v3657 = vpop.permute.xlu0 %3656
          %3660 = vset.pattern.permute.xlu0 0
          %3661 = vperm.xlu0 %3660, %v3478
          %v3662 = vpop.permute.xlu0 %3661
          %3665 = vset.pattern.permute.xlu0 0
          %3666 = vperm.xlu0 %3665, %v3479
          %v3667 = vpop.permute.xlu0 %3666
          %3670 = vset.pattern.permute.xlu0 0
          %3671 = vperm.xlu0 %3670, %v3480
          %v3672 = vpop.permute.xlu0 %3671
          %3675 = vset.pattern.permute.xlu0 0
          %3676 = vperm.xlu0 %3675, %v3481
          %v3677 = vpop.permute.xlu0 %3676
          %3680 = vset.pattern.permute.xlu0 0
          %3681 = vperm.xlu0 %3680, %v3482
          %v3682 = vpop.permute.xlu0 %3681
          %3685 = vset.pattern.permute.xlu0 0
          %3686 = vperm.xlu0 %3685, %v3483
          %v3687 = vpop.permute.xlu0 %3686
          %3690 = vset.pattern.permute.xlu0 0
          %3691 = vperm.xlu0 %3690, %v3484
          %v3692 = vpop.permute.xlu0 %3691
          %3695 = vset.pattern.permute.xlu0 0
          %3696 = vperm.xlu0 %3695, %v3485
          %v3697 = vpop.permute.xlu0 %3696
          %3700 = vset.pattern.permute.xlu0 0
          %3701 = vperm.xlu0 %3700, %v3486
          %v3702 = vpop.permute.xlu0 %3701
          %3705 = vset.pattern.permute.xlu0 0
          %3706 = vperm.xlu0 %3705, %v3487
          %v3707 = vpop.permute.xlu0 %3706
          %3710 = vset.pattern.permute.xlu0 0
          %3711 = vperm.xlu0 %3710, %v3488
          %v3712 = vpop.permute.xlu0 %3711
          %3715 = vset.pattern.permute.xlu0 0
          %3716 = vperm.xlu0 %3715, %v3489
          %v3717 = vpop.permute.xlu0 %3716
          %3720 = vset.pattern.permute.xlu0 0
          %3721 = vperm.xlu0 %3720, %v3490
          %v3722 = vpop.permute.xlu0 %3721
          %3725 = vset.pattern.permute.xlu0 0
          %3726 = vperm.xlu0 %3725, %v3491
          %v3727 = vpop.permute.xlu0 %3726
          %3730 = vset.pattern.permute.xlu0 0
          %3731 = vperm.xlu0 %3730, %v3492
          %v3732 = vpop.permute.xlu0 %3731
          %3735 = vset.pattern.permute.xlu0 0
          %3736 = vperm.xlu0 %3735, %v3493
          %v3737 = vpop.permute.xlu0 %3736
          %3740 = vset.pattern.permute.xlu0 0
          %3741 = vperm.xlu0 %3740, %v3494
          %v3742 = vpop.permute.xlu0 %3741
          %3745 = vset.pattern.permute.xlu0 0
          %3746 = vperm.xlu0 %3745, %v3495
          %v3747 = vpop.permute.xlu0 %3746
          %3750 = vset.pattern.permute.xlu0 0
          %3751 = vperm.xlu0 %3750, %v3496
          %v3752 = vpop.permute.xlu0 %3751
          %3755 = vset.pattern.permute.xlu0 0
          %3756 = vperm.xlu0 %3755, %v3497
          %v3757 = vpop.permute.xlu0 %3756
          %3760 = vset.pattern.permute.xlu0 0
          %3761 = vperm.xlu0 %3760, %v3498
          %v3762 = vpop.permute.xlu0 %3761
          %3765 = vset.pattern.permute.xlu0 0
          %3766 = vperm.xlu0 %3765, %v3499
          %v3767 = vpop.permute.xlu0 %3766
          %3770 = vset.pattern.permute.xlu0 0
          %3771 = vperm.xlu0 %3770, %v3500
          %v3772 = vpop.permute.xlu0 %3771
          %3775 = vset.pattern.permute.xlu0 0
          %3776 = vperm.xlu0 %3775, %v3501
          %v3777 = vpop.permute.xlu0 %3776
          %3780 = vset.pattern.permute.xlu0 0
          %3781 = vperm.xlu0 %3780, %v3502
          %v3782 = vpop.permute.xlu0 %3781
          %3785 = vset.pattern.permute.xlu0 0
          %3786 = vperm.xlu0 %3785, %v3503
          %v3787 = vpop.permute.xlu0 %3786
          %3790 = vset.pattern.permute.xlu0 0
          %3791 = vperm.xlu0 %3790, %v3504
          %v3792 = vpop.permute.xlu0 %3791
          %3795 = vset.pattern.permute.xlu0 0
          %3796 = vperm.xlu0 %3795, %v3505
          %v3797 = vpop.permute.xlu0 %3796
          %3800 = vset.pattern.permute.xlu0 0
          %3801 = vperm.xlu0 %3800, %v3506
          %v3802 = vpop.permute.xlu0 %3801
          %3805 = vset.pattern.permute.xlu0 0
          %3806 = vperm.xlu0 %3805, %v3507
          %v3807 = vpop.permute.xlu0 %3806
          %3810 = vset.pattern.permute.xlu0 0
          %3811 = vperm.xlu0 %3810, %v3508
          %v3812 = vpop.permute.xlu0 %3811
          %3815 = vset.pattern.permute.xlu0 0
          %3816 = vperm.xlu0 %3815, %v3509
          %v3817 = vpop.permute.xlu0 %3816
          %3820 = vset.pattern.permute.xlu0 0
          %3821 = vperm.xlu0 %3820, %v3510
          %v3822 = vpop.permute.xlu0 %3821
          %3825 = vset.pattern.permute.xlu0 0
          %3826 = vperm.xlu0 %3825, %v3511
          %v3827 = vpop.permute.xlu0 %3826
          %3830 = vset.pattern.permute.xlu0 0
          %3831 = vperm.xlu0 %3830, %v3512
          %v3832 = vpop.permute.xlu0 %3831
          %3835 = vset.pattern.permute.xlu0 0
          %3836 = vperm.xlu0 %3835, %v3513
          %v3837 = vpop.permute.xlu0 %3836
          %3840 = vset.pattern.permute.xlu0 0
          %3841 = vperm.xlu0 %3840, %v3514
          %v3842 = vpop.permute.xlu0 %3841
          %3845 = vset.pattern.permute.xlu0 0
          %3846 = vperm.xlu0 %3845, %v3515
          %v3847 = vpop.permute.xlu0 %3846
          %3850 = vset.pattern.permute.xlu0 0
          %3851 = vperm.xlu0 %3850, %v3516
          %v3852 = vpop.permute.xlu0 %3851
          %3855 = vset.pattern.permute.xlu0 0
          %3856 = vperm.xlu0 %3855, %v3517
          %v3857 = vpop.permute.xlu0 %3856
          %3860 = vset.pattern.permute.xlu0 0
          %3861 = vperm.xlu0 %3860, %v3518
          %v3862 = vpop.permute.xlu0 %3861
          %3865 = vset.pattern.permute.xlu0 0
          %3866 = vperm.xlu0 %3865, %v3519
          %v3867 = vpop.permute.xlu0 %3866
          %3870 = vset.pattern.permute.xlu0 0
          %3871 = vperm.xlu0 %3870, %v3520
          %v3872 = vpop.permute.xlu0 %3871
          %3875 = vset.pattern.permute.xlu0 0
          %3876 = vperm.xlu0 %3875, %v3521
          %v3877 = vpop.permute.xlu0 %3876
          %3880 = vset.pattern.permute.xlu0 0
          %3881 = vperm.xlu0 %3880, %v3522
          %v3882 = vpop.permute.xlu0 %3881
          %3885 = vset.pattern.permute.xlu0 0
          %3886 = vperm.xlu0 %3885, %v3523
          %v3887 = vpop.permute.xlu0 %3886
          %3890 = vset.pattern.permute.xlu0 0
          %3891 = vperm.xlu0 %3890, %v3524
          %v3892 = vpop.permute.xlu0 %3891
          %3895 = vset.pattern.permute.xlu0 0
          %3896 = vperm.xlu0 %3895, %v3525
          %v3897 = vpop.permute.xlu0 %3896
          %3900 = vset.pattern.permute.xlu0 0
          %3901 = vperm.xlu0 %3900, %v3526
          %v3902 = vpop.permute.xlu0 %3901
          %3905 = vset.pattern.permute.xlu0 0
          %3906 = vperm.xlu0 %3905, %v3527
          %v3907 = vpop.permute.xlu0 %3906
          %3910 = vset.pattern.permute.xlu0 0
          %3911 = vperm.xlu0 %3910, %v3528
          %v3912 = vpop.permute.xlu0 %3911
          %3915 = vset.pattern.permute.xlu0 0
          %3916 = vperm.xlu0 %3915, %v3529
          %v3917 = vpop.permute.xlu0 %3916
          %3920 = vset.pattern.permute.xlu0 0
          %3921 = vperm.xlu0 %3920, %v3530
          %v3922 = vpop.permute.xlu0 %3921
          %3925 = vset.pattern.permute.xlu0 0
          %3926 = vperm.xlu0 %3925, %v3531
          %v3927 = vpop.permute.xlu0 %3926
          %3930 = vset.pattern.permute.xlu0 0
          %3931 = vperm.xlu0 %3930, %v3532
          %v3932 = vpop.permute.xlu0 %3931
          %3935 = vset.pattern.permute.xlu0 0
          %3936 = vperm.xlu0 %3935, %v3533
          %v3937 = vpop.permute.xlu0 %3936
          %3940 = vset.pattern.permute.xlu0 0
          %3941 = vperm.xlu0 %3940, %v3534
          %v3942 = vpop.permute.xlu0 %3941
          %3945 = vset.pattern.permute.xlu0 0
          %3946 = vperm.xlu0 %3945, %v3535
          %v3947 = vpop.permute.xlu0 %3946
          %3950 = vset.pattern.permute.xlu0 0
          %3951 = vperm.xlu0 %3950, %v3536
          %v3952 = vpop.permute.xlu0 %3951
          %3955 = vset.pattern.permute.xlu0 0
          %3956 = vperm.xlu0 %3955, %v3537
          %v3957 = vpop.permute.xlu0 %3956
          %v3959 = vmul.f32 %v3642, %v3575
          %v3960 = vmul.f32 %v3647, %v3576
          %v3961 = vmul.f32 %v3652, %v3577
          %v3962 = vmul.f32 %v3657, %v3578
          %v3963 = vmul.f32 %v3662, %v3579
          %v3964 = vmul.f32 %v3667, %v3580
          %v3965 = vmul.f32 %v3672, %v3581
          %v3966 = vmul.f32 %v3677, %v3582
          %v3967 = vmul.f32 %v3682, %v3583
          %v3968 = vmul.f32 %v3687, %v3584
          %v3969 = vmul.f32 %v3692, %v3585
          %v3970 = vmul.f32 %v3697, %v3586
          %v3971 = vmul.f32 %v3702, %v3587
          %v3972 = vmul.f32 %v3707, %v3588
          %v3973 = vmul.f32 %v3712, %v3589
          %v3974 = vmul.f32 %v3717, %v3590
          %v3975 = vmul.f32 %v3722, %v3591
          %v3976 = vmul.f32 %v3727, %v3592
          %v3977 = vmul.f32 %v3732, %v3593
          %v3978 = vmul.f32 %v3737, %v3594
          %v3979 = vmul.f32 %v3742, %v3595
          %v3980 = vmul.f32 %v3747, %v3596
          %v3981 = vmul.f32 %v3752, %v3597
          %v3982 = vmul.f32 %v3757, %v3598
          %v3983 = vmul.f32 %v3762, %v3599
          %v3984 = vmul.f32 %v3767, %v3600
          %v3985 = vmul.f32 %v3772, %v3601
          %v3986 = vmul.f32 %v3777, %v3602
          %v3987 = vmul.f32 %v3782, %v3603
          %v3988 = vmul.f32 %v3787, %v3604
          %v3989 = vmul.f32 %v3792, %v3605
          %v3990 = vmul.f32 %v3797, %v3606
          %v3991 = vmul.f32 %v3802, %v3607
          %v3992 = vmul.f32 %v3807, %v3608
          %v3993 = vmul.f32 %v3812, %v3609
          %v3994 = vmul.f32 %v3817, %v3610
          %v3995 = vmul.f32 %v3822, %v3611
          %v3996 = vmul.f32 %v3827, %v3612
          %v3997 = vmul.f32 %v3832, %v3613
          %v3998 = vmul.f32 %v3837, %v3614
          %v3999 = vmul.f32 %v3842, %v3615
          %v4000 = vmul.f32 %v3847, %v3616
          %v4001 = vmul.f32 %v3852, %v3617
          %v4002 = vmul.f32 %v3857, %v3618
          %v4003 = vmul.f32 %v3862, %v3619
          %v4004 = vmul.f32 %v3867, %v3620
          %v4005 = vmul.f32 %v3872, %v3621
          %v4006 = vmul.f32 %v3877, %v3622
          %v4007 = vmul.f32 %v3882, %v3623
          %v4008 = vmul.f32 %v3887, %v3624
          %v4009 = vmul.f32 %v3892, %v3625
          %v4010 = vmul.f32 %v3897, %v3626
          %v4011 = vmul.f32 %v3902, %v3627
          %v4012 = vmul.f32 %v3907, %v3628
          %v4013 = vmul.f32 %v3912, %v3629
          %v4014 = vmul.f32 %v3917, %v3630
          %v4015 = vmul.f32 %v3922, %v3631
          %v4016 = vmul.f32 %v3927, %v3632
          %v4017 = vmul.f32 %v3932, %v3633
          %v4018 = vmul.f32 %v3937, %v3634
          %v4019 = vmul.f32 %v3942, %v3635
          %v4020 = vmul.f32 %v3947, %v3636
          %v4021 = vmul.f32 %v3952, %v3637
          %v4022 = vmul.f32 %v3957, %v3638
          %v4023 = vpack.c.bf16 %v3960, %v3959
          %v4024 = vpack.c.bf16 %v3962, %v3961
          %v4025 = vpack.c.bf16 %v3964, %v3963
          %v4026 = vpack.c.bf16 %v3966, %v3965
          %v4027 = vpack.c.bf16 %v3968, %v3967
          %v4028 = vpack.c.bf16 %v3970, %v3969
          %v4029 = vpack.c.bf16 %v3972, %v3971
          %v4030 = vpack.c.bf16 %v3974, %v3973
          %v4031 = vpack.c.bf16 %v3976, %v3975
          %v4032 = vpack.c.bf16 %v3978, %v3977
          %v4033 = vpack.c.bf16 %v3980, %v3979
          %v4034 = vpack.c.bf16 %v3982, %v3981
          %v4035 = vpack.c.bf16 %v3984, %v3983
          %v4036 = vpack.c.bf16 %v3986, %v3985
          %v4037 = vpack.c.bf16 %v3988, %v3987
          %v4038 = vpack.c.bf16 %v3990, %v3989
          %v4039 = vpack.c.bf16 %v3992, %v3991
          %v4040 = vpack.c.bf16 %v3994, %v3993
          %v4041 = vpack.c.bf16 %v3996, %v3995
          %v4042 = vpack.c.bf16 %v3998, %v3997
          %v4043 = vpack.c.bf16 %v4000, %v3999
          %v4044 = vpack.c.bf16 %v4002, %v4001
          %v4045 = vpack.c.bf16 %v4004, %v4003
          %v4046 = vpack.c.bf16 %v4006, %v4005
          %v4047 = vpack.c.bf16 %v4008, %v4007
          %v4048 = vpack.c.bf16 %v4010, %v4009
          %v4049 = vpack.c.bf16 %v4012, %v4011
          %v4050 = vpack.c.bf16 %v4014, %v4013
          %v4051 = vpack.c.bf16 %v4016, %v4015
          %v4052 = vpack.c.bf16 %v4018, %v4017
          %v4053 = vpack.c.bf16 %v4020, %v4019
          %v4054 = vpack.c.bf16 %v4022, %v4021
          %v4055 = vld [vmem:[#allocation12] sm:$0xf]
          %v4056 = vld [vmem:[#allocation12 + $0x4] sm:$0xf]
          %v4057 = vld [vmem:[#allocation12 + $0x8] sm:$0xf]
          %v4058 = vld [vmem:[#allocation12 + $0xc] sm:$0xf]
          %v4059 = vld [vmem:[#allocation12 + $0x10] sm:$0xf]
          %v4060 = vld [vmem:[#allocation12 + $0x14] sm:$0xf]
          %v4061 = vld [vmem:[#allocation12 + $0x18] sm:$0xf]
          %v4062 = vld [vmem:[#allocation12 + $0x1c] sm:$0xf]
          %v4063 = vld [vmem:[#allocation12 + $0x20] sm:$0xf]
          %v4064 = vld [vmem:[#allocation12 + $0x24] sm:$0xf]
          %v4065 = vld [vmem:[#allocation12 + $0x28] sm:$0xf]
          %v4066 = vld [vmem:[#allocation12 + $0x2c] sm:$0xf]
          %v4067 = vld [vmem:[#allocation12 + $0x30] sm:$0xf]
          %v4068 = vld [vmem:[#allocation12 + $0x34] sm:$0xf]
          %v4069 = vld [vmem:[#allocation12 + $0x38] sm:$0xf]
          %v4070 = vld [vmem:[#allocation12 + $0x3c] sm:$0xf]
          %v4071 = vld [vmem:[#allocation13] sm:$0xf]
          %v4072 = vld [vmem:[#allocation13 + $0x4] sm:$0xf]
          %v4073 = vld [vmem:[#allocation13 + $0x8] sm:$0xf]
          %v4074 = vld [vmem:[#allocation13 + $0xc] sm:$0xf]
          %v4075 = vld [vmem:[#allocation13 + $0x10] sm:$0xf]
          %v4076 = vld [vmem:[#allocation13 + $0x14] sm:$0xf]
          %v4077 = vld [vmem:[#allocation13 + $0x18] sm:$0xf]
          %v4078 = vld [vmem:[#allocation13 + $0x1c] sm:$0xf]
          %v4079 = vld [vmem:[#allocation13 + $0x20] sm:$0xf]
          %v4080 = vld [vmem:[#allocation13 + $0x24] sm:$0xf]
          %v4081 = vld [vmem:[#allocation13 + $0x28] sm:$0xf]
          %v4082 = vld [vmem:[#allocation13 + $0x2c] sm:$0xf]
          %v4083 = vld [vmem:[#allocation13 + $0x30] sm:$0xf]
          %v4084 = vld [vmem:[#allocation13 + $0x34] sm:$0xf]
          %v4085 = vld [vmem:[#allocation13 + $0x38] sm:$0xf]
          %v4086 = vld [vmem:[#allocation13 + $0x3c] sm:$0xf]
          %v4103 = vunpack.c.l.b16 %v4071
          %v4104 = vunpack.c.l.b16 %v4072
          %v4105 = vunpack.c.l.b16 %v4073
          %v4106 = vunpack.c.l.b16 %v4074
          %v4107 = vunpack.c.l.b16 %v4075
          %v4108 = vunpack.c.l.b16 %v4076
          %v4109 = vunpack.c.l.b16 %v4077
          %v4110 = vunpack.c.l.b16 %v4078
          %v4111 = vunpack.c.l.b16 %v4079
          %v4112 = vunpack.c.l.b16 %v4080
          %v4113 = vunpack.c.l.b16 %v4081
          %v4114 = vunpack.c.l.b16 %v4082
          %v4115 = vunpack.c.l.b16 %v4083
          %v4116 = vunpack.c.l.b16 %v4084
          %v4117 = vunpack.c.l.b16 %v4085
          %v4118 = vunpack.c.l.b16 %v4086
          %v4119 = vpack.c.b16 %v4104, %v4103
          %v4120 = vpack.c.b16 %v4106, %v4105
          %v4121 = vpack.c.b16 %v4108, %v4107
          %v4122 = vpack.c.b16 %v4110, %v4109
          %v4123 = vpack.c.b16 %v4112, %v4111
          %v4124 = vpack.c.b16 %v4114, %v4113
          %v4125 = vpack.c.b16 %v4116, %v4115
          %v4126 = vpack.c.b16 %v4118, %v4117
          %4135 = vmatprep.subr.bf16.mxu0 0
          %4136 = vmatpush1.bf16.msra.mxu0 %v4119
          %4137 = vmatprep.subr.bf16.mxu0 0
          %4138 = vmatpush1.bf16.msra.mxu0 %v4120
          %4139 = vmatprep.subr.bf16.mxu0 0
          %4140 = vmatpush1.bf16.msra.mxu0 %v4121
          %4141 = vmatprep.subr.bf16.mxu0 0
          %4142 = vmatpush1.bf16.msra.mxu0 %v4122
          %4143 = vmatprep.subr.bf16.mxu0 0
          %4144 = vmatpush1.bf16.msra.mxu0 %v4123
          %4145 = vmatprep.subr.bf16.mxu0 0
          %4146 = vmatpush1.bf16.msra.mxu0 %v4124
          %4147 = vmatprep.subr.bf16.mxu0 0
          %4148 = vmatpush1.bf16.msra.mxu0 %v4125
          %4149 = vmatprep.subr.bf16.mxu0 0
          %4150 = vmatpush1.bf16.msra.mxu0 %v4126
          %4151 = vmatprep.subr.bf16.mxu0 0
          %4152 = vmatpush1.bf16.msra.mxu0 0
          %4153 = vmatprep.subr.bf16.mxu0 0
          %4154 = vmatpush1.bf16.msra.mxu0 0
          %4155 = vmatprep.subr.bf16.mxu0 0
          %4156 = vmatpush1.bf16.msra.mxu0 0
          %4157 = vmatprep.subr.bf16.mxu0 0
          %4158 = vmatpush1.bf16.msra.mxu0 0
          %4159 = vmatprep.subr.bf16.mxu0 0
          %4160 = vmatpush1.bf16.msra.mxu0 0
          %4161 = vmatprep.subr.bf16.mxu0 0
          %4162 = vmatpush1.bf16.msra.mxu0 0
          %4163 = vmatprep.subr.bf16.mxu0 0
          %4164 = vmatpush1.bf16.msra.mxu0 0
          %4165 = vmatprep.subr.bf16.mxu0 0
          %4166 = vmatpush1.bf16.msra.mxu0 0
          %4167 = vmatprep.mubr.bf16.mxu0 0
          %4168 = vmatmul.mubr.bf16.gmra.mrb[0].mxu0 %v4023
          %v4169 = vpop.f32.mrb[0].mxu0
          %v4170 = vadd.f32 0.0, %v4169
          %v4171 = vpop.f32.mrb[0].mxu0
          %v4172 = vpop.f32.mrb[0].mxu0
          %v4173 = vadd.f32 0.0, %v4172
          %v4174 = vpop.f32.mrb[0].mxu0
          %4175 = vmatprep.mubr.bf16.mxu0 0
          %4176 = vmatmul.mubr.bf16.gmra.mrb[0].mxu0 %v4024
          %v4177 = vpop.f32.mrb[0].mxu0
          %v4178 = vadd.f32 0.0, %v4177
          %v4179 = vpop.f32.mrb[0].mxu0
          %v4180 = vpop.f32.mrb[0].mxu0
          %v4181 = vadd.f32 0.0, %v4180
          %v4182 = vpop.f32.mrb[0].mxu0
          %4183 = vmatprep.mubr.bf16.mxu0 0
          %4184 = vmatmul.mubr.bf16.gmra.mrb[0].mxu0 %v4025
          %v4185 = vpop.f32.mrb[0].mxu0
          %v4186 = vadd.f32 0.0, %v4185
          %v4187 = vpop.f32.mrb[0].mxu0
          %v4188 = vpop.f32.mrb[0].mxu0
          %v4189 = vadd.f32 0.0, %v4188
          %v4190 = vpop.f32.mrb[0].mxu0
          %4191 = vmatprep.mubr.bf16.mxu0 0
          %4192 = vmatmul.mubr.bf16.gmra.mrb[0].mxu0 %v4026
          %v4193 = vpop.f32.mrb[0].mxu0
          %v4194 = vadd.f32 0.0, %v4193
          %v4195 = vpop.f32.mrb[0].mxu0
          %v4196 = vpop.f32.mrb[0].mxu0
          %v4197 = vadd.f32 0.0, %v4196
          %v4198 = vpop.f32.mrb[0].mxu0
          %4199 = vmatprep.mubr.bf16.mxu0 0
          %4200 = vmatmul.mubr.bf16.gmra.mrb[0].mxu0 %v4027
          %v4201 = vpop.f32.mrb[0].mxu0
          %v4202 = vadd.f32 0.0, %v4201
          %v4203 = vpop.f32.mrb[0].mxu0
          %v4204 = vpop.f32.mrb[0].mxu0
          %v4205 = vadd.f32 0.0, %v4204
          %v4206 = vpop.f32.mrb[0].mxu0
          %4207 = vmatprep.mubr.bf16.mxu0 0
          %4208 = vmatmul.mubr.bf16.gmra.mrb[0].mxu0 %v4028
          %v4209 = vpop.f32.mrb[0].mxu0
          %v4210 = vadd.f32 0.0, %v4209
          %v4211 = vpop.f32.mrb[0].mxu0
          %v4212 = vpop.f32.mrb[0].mxu0
          %v4213 = vadd.f32 0.0, %v4212
          %v4214 = vpop.f32.mrb[0].mxu0
          %4215 = vmatprep.mubr.bf16.mxu0 0
          %4216 = vmatmul.mubr.bf16.gmra.mrb[0].mxu0 %v4029
          %v4217 = vpop.f32.mrb[0].mxu0
          %v4218 = vadd.f32 0.0, %v4217
          %v4219 = vpop.f32.mrb[0].mxu0
          %v4220 = vpop.f32.mrb[0].mxu0
          %v4221 = vadd.f32 0.0, %v4220
          %v4222 = vpop.f32.mrb[0].mxu0
          %4223 = vmatprep.mubr.bf16.mxu0 0
          %4224 = vmatmul.mubr.bf16.gmra.mrb[0].mxu0 %v4030
          %v4225 = vpop.f32.mrb[0].mxu0
          %v4226 = vadd.f32 0.0, %v4225
          %v4227 = vpop.f32.mrb[0].mxu0
          %v4228 = vpop.f32.mrb[0].mxu0
          %v4229 = vadd.f32 0.0, %v4228
          %v4230 = vpop.f32.mrb[0].mxu0
          %4231 = vmatprep.mubr.bf16.mxu0 0
          %4232 = vmatmul.mubr.bf16.gmra.mrb[0].mxu0 %v4031
          %v4233 = vpop.f32.mrb[0].mxu0
          %v4234 = vadd.f32 0.0, %v4233
          %v4235 = vpop.f32.mrb[0].mxu0
          %v4236 = vpop.f32.mrb[0].mxu0
          %v4237 = vadd.f32 0.0, %v4236
          %v4238 = vpop.f32.mrb[0].mxu0
          %4239 = vmatprep.mubr.bf16.mxu0 0
          %4240 = vmatmul.mubr.bf16.gmra.mrb[0].mxu0 %v4032
          %v4241 = vpop.f32.mrb[0].mxu0
          %v4242 = vadd.f32 0.0, %v4241
          %v4243 = vpop.f32.mrb[0].mxu0
          %v4244 = vpop.f32.mrb[0].mxu0
          %v4245 = vadd.f32 0.0, %v4244
          %v4246 = vpop.f32.mrb[0].mxu0
          %4247 = vmatprep.mubr.bf16.mxu0 0
          %4248 = vmatmul.mubr.bf16.gmra.mrb[0].mxu0 %v4033
          %v4249 = vpop.f32.mrb[0].mxu0
          %v4250 = vadd.f32 0.0, %v4249
          %v4251 = vpop.f32.mrb[0].mxu0
          %v4252 = vpop.f32.mrb[0].mxu0
          %v4253 = vadd.f32 0.0, %v4252
          %v4254 = vpop.f32.mrb[0].mxu0
          %4255 = vmatprep.mubr.bf16.mxu0 0
          %4256 = vmatmul.mubr.bf16.gmra.mrb[0].mxu0 %v4034
          %v4257 = vpop.f32.mrb[0].mxu0
          %v4258 = vadd.f32 0.0, %v4257
          %v4259 = vpop.f32.mrb[0].mxu0
          %v4260 = vpop.f32.mrb[0].mxu0
          %v4261 = vadd.f32 0.0, %v4260
          %v4262 = vpop.f32.mrb[0].mxu0
          %4263 = vmatprep.mubr.bf16.mxu0 0
          %4264 = vmatmul.mubr.bf16.gmra.mrb[0].mxu0 %v4035
          %v4265 = vpop.f32.mrb[0].mxu0
          %v4266 = vadd.f32 0.0, %v4265
          %v4267 = vpop.f32.mrb[0].mxu0
          %v4268 = vpop.f32.mrb[0].mxu0
          %v4269 = vadd.f32 0.0, %v4268
          %v4270 = vpop.f32.mrb[0].mxu0
          %4271 = vmatprep.mubr.bf16.mxu0 0
          %4272 = vmatmul.mubr.bf16.gmra.mrb[0].mxu0 %v4036
          %v4273 = vpop.f32.mrb[0].mxu0
          %v4274 = vadd.f32 0.0, %v4273
          %v4275 = vpop.f32.mrb[0].mxu0
          %v4276 = vpop.f32.mrb[0].mxu0
          %v4277 = vadd.f32 0.0, %v4276
          %v4278 = vpop.f32.mrb[0].mxu0
          %4279 = vmatprep.mubr.bf16.mxu0 0
          %4280 = vmatmul.mubr.bf16.gmra.mrb[0].mxu0 %v4037
          %v4281 = vpop.f32.mrb[0].mxu0
          %v4282 = vadd.f32 0.0, %v4281
          %v4283 = vpop.f32.mrb[0].mxu0
          %v4284 = vpop.f32.mrb[0].mxu0
          %v4285 = vadd.f32 0.0, %v4284
          %v4286 = vpop.f32.mrb[0].mxu0
          %4287 = vmatprep.mubr.bf16.mxu0 0
          %4288 = vmatmul.mubr.bf16.gmra.mrb[0].mxu0 %v4038
          %v4289 = vpop.f32.mrb[0].mxu0
          %v4290 = vadd.f32 0.0, %v4289
          %v4291 = vpop.f32.mrb[0].mxu0
          %v4292 = vpop.f32.mrb[0].mxu0
          %v4293 = vadd.f32 0.0, %v4292
          %v4294 = vpop.f32.mrb[0].mxu0
          %4295 = vmatprep.mubr.bf16.mxu0 0
          %4296 = vmatmul.mubr.bf16.gmra.mrb[0].mxu0 %v4039
          %v4297 = vpop.f32.mrb[0].mxu0
          %v4298 = vadd.f32 0.0, %v4297
          %v4299 = vpop.f32.mrb[0].mxu0
          %v4300 = vpop.f32.mrb[0].mxu0
          %v4301 = vadd.f32 0.0, %v4300
          %v4302 = vpop.f32.mrb[0].mxu0
          %4303 = vmatprep.mubr.bf16.mxu0 0
          %4304 = vmatmul.mubr.bf16.gmra.mrb[0].mxu0 %v4040
          %v4305 = vpop.f32.mrb[0].mxu0
          %v4306 = vadd.f32 0.0, %v4305
          %v4307 = vpop.f32.mrb[0].mxu0
          %v4308 = vpop.f32.mrb[0].mxu0
          %v4309 = vadd.f32 0.0, %v4308
          %v4310 = vpop.f32.mrb[0].mxu0
          %4311 = vmatprep.mubr.bf16.mxu0 0
          %4312 = vmatmul.mubr.bf16.gmra.mrb[0].mxu0 %v4041
          %v4313 = vpop.f32.mrb[0].mxu0
          %v4314 = vadd.f32 0.0, %v4313
          %v4315 = vpop.f32.mrb[0].mxu0
          %v4316 = vpop.f32.mrb[0].mxu0
          %v4317 = vadd.f32 0.0, %v4316
          %v4318 = vpop.f32.mrb[0].mxu0
          %4319 = vmatprep.mubr.bf16.mxu0 0
          %4320 = vmatmul.mubr.bf16.gmra.mrb[0].mxu0 %v4042
          %v4321 = vpop.f32.mrb[0].mxu0
          %v4322 = vadd.f32 0.0, %v4321
          %v4323 = vpop.f32.mrb[0].mxu0
          %v4324 = vpop.f32.mrb[0].mxu0
          %v4325 = vadd.f32 0.0, %v4324
          %v4326 = vpop.f32.mrb[0].mxu0
          %4327 = vmatprep.mubr.bf16.mxu0 0
          %4328 = vmatmul.mubr.bf16.gmra.mrb[0].mxu0 %v4043
          %v4329 = vpop.f32.mrb[0].mxu0
          %v4330 = vadd.f32 0.0, %v4329
          %v4331 = vpop.f32.mrb[0].mxu0
          %v4332 = vpop.f32.mrb[0].mxu0
          %v4333 = vadd.f32 0.0, %v4332
          %v4334 = vpop.f32.mrb[0].mxu0
          %4335 = vmatprep.mubr.bf16.mxu0 0
          %4336 = vmatmul.mubr.bf16.gmra.mrb[0].mxu0 %v4044
          %v4337 = vpop.f32.mrb[0].mxu0
          %v4338 = vadd.f32 0.0, %v4337
          %v4339 = vpop.f32.mrb[0].mxu0
          %v4340 = vpop.f32.mrb[0].mxu0
          %v4341 = vadd.f32 0.0, %v4340
          %v4342 = vpop.f32.mrb[0].mxu0
          %4343 = vmatprep.mubr.bf16.mxu0 0
          %4344 = vmatmul.mubr.bf16.gmra.mrb[0].mxu0 %v4045
          %v4345 = vpop.f32.mrb[0].mxu0
          %v4346 = vadd.f32 0.0, %v4345
          %v4347 = vpop.f32.mrb[0].mxu0
          %v4348 = vpop.f32.mrb[0].mxu0
          %v4349 = vadd.f32 0.0, %v4348
          %v4350 = vpop.f32.mrb[0].mxu0
          %4351 = vmatprep.mubr.bf16.mxu0 0
          %4352 = vmatmul.mubr.bf16.gmra.mrb[0].mxu0 %v4046
          %v4353 = vpop.f32.mrb[0].mxu0
          %v4354 = vadd.f32 0.0, %v4353
          %v4355 = vpop.f32.mrb[0].mxu0
          %v4356 = vpop.f32.mrb[0].mxu0
          %v4357 = vadd.f32 0.0, %v4356
          %v4358 = vpop.f32.mrb[0].mxu0
          %4359 = vmatprep.mubr.bf16.mxu0 0
          %4360 = vmatmul.mubr.bf16.gmra.mrb[0].mxu0 %v4047
          %v4361 = vpop.f32.mrb[0].mxu0
          %v4362 = vadd.f32 0.0, %v4361
          %v4363 = vpop.f32.mrb[0].mxu0
          %v4364 = vpop.f32.mrb[0].mxu0
          %v4365 = vadd.f32 0.0, %v4364
          %v4366 = vpop.f32.mrb[0].mxu0
          %4367 = vmatprep.mubr.bf16.mxu0 0
          %4368 = vmatmul.mubr.bf16.gmra.mrb[0].mxu0 %v4048
          %v4369 = vpop.f32.mrb[0].mxu0
          %v4370 = vadd.f32 0.0, %v4369
          %v4371 = vpop.f32.mrb[0].mxu0
          %v4372 = vpop.f32.mrb[0].mxu0
          %v4373 = vadd.f32 0.0, %v4372
          %v4374 = vpop.f32.mrb[0].mxu0
          %4375 = vmatprep.mubr.bf16.mxu0 0
          %4376 = vmatmul.mubr.bf16.gmra.mrb[0].mxu0 %v4049
          %v4377 = vpop.f32.mrb[0].mxu0
          %v4378 = vadd.f32 0.0, %v4377
          %v4379 = vpop.f32.mrb[0].mxu0
          %v4380 = vpop.f32.mrb[0].mxu0
          %v4381 = vadd.f32 0.0, %v4380
          %v4382 = vpop.f32.mrb[0].mxu0
          %4383 = vmatprep.mubr.bf16.mxu0 0
          %4384 = vmatmul.mubr.bf16.gmra.mrb[0].mxu0 %v4050
          %v4385 = vpop.f32.mrb[0].mxu0
          %v4386 = vadd.f32 0.0, %v4385
          %v4387 = vpop.f32.mrb[0].mxu0
          %v4388 = vpop.f32.mrb[0].mxu0
          %v4389 = vadd.f32 0.0, %v4388
          %v4390 = vpop.f32.mrb[0].mxu0
          %4391 = vmatprep.mubr.bf16.mxu0 0
          %4392 = vmatmul.mubr.bf16.gmra.mrb[0].mxu0 %v4051
          %v4393 = vpop.f32.mrb[0].mxu0
          %v4394 = vadd.f32 0.0, %v4393
          %v4395 = vpop.f32.mrb[0].mxu0
          %v4396 = vpop.f32.mrb[0].mxu0
          %v4397 = vadd.f32 0.0, %v4396
          %v4398 = vpop.f32.mrb[0].mxu0
          %4399 = vmatprep.mubr.bf16.mxu0 0
          %4400 = vmatmul.mubr.bf16.gmra.mrb[0].mxu0 %v4052
          %v4401 = vpop.f32.mrb[0].mxu0
          %v4402 = vadd.f32 0.0, %v4401
          %v4403 = vpop.f32.mrb[0].mxu0
          %v4404 = vpop.f32.mrb[0].mxu0
          %v4405 = vadd.f32 0.0, %v4404
          %v4406 = vpop.f32.mrb[0].mxu0
          %4407 = vmatprep.mubr.bf16.mxu0 0
          %4408 = vmatmul.mubr.bf16.gmra.mrb[0].mxu0 %v4053
          %v4409 = vpop.f32.mrb[0].mxu0
          %v4410 = vadd.f32 0.0, %v4409
          %v4411 = vpop.f32.mrb[0].mxu0
          %v4412 = vpop.f32.mrb[0].mxu0
          %v4413 = vadd.f32 0.0, %v4412
          %v4414 = vpop.f32.mrb[0].mxu0
          %4415 = vmatprep.mubr.bf16.mxu0 0
          %4416 = vmatmul.mubr.bf16.gmra.mrb[0].mxu0 %v4054
          %v4417 = vpop.f32.mrb[0].mxu0
          %v4418 = vadd.f32 0.0, %v4417
          %v4419 = vpop.f32.mrb[0].mxu0
          %v4420 = vpop.f32.mrb[0].mxu0
          %v4421 = vadd.f32 0.0, %v4420
          %v4422 = vpop.f32.mrb[0].mxu0
          %4423 = vdwg.mxu0
          %v4440 = vunpack.c.l.b16 %v4055
          %v4441 = vunpack.c.l.b16 %v4056
          %v4442 = vunpack.c.l.b16 %v4057
          %v4443 = vunpack.c.l.b16 %v4058
          %v4444 = vunpack.c.l.b16 %v4059
          %v4445 = vunpack.c.l.b16 %v4060
          %v4446 = vunpack.c.l.b16 %v4061
          %v4447 = vunpack.c.l.b16 %v4062
          %v4448 = vunpack.c.l.b16 %v4063
          %v4449 = vunpack.c.l.b16 %v4064
          %v4450 = vunpack.c.l.b16 %v4065
          %v4451 = vunpack.c.l.b16 %v4066
          %v4452 = vunpack.c.l.b16 %v4067
          %v4453 = vunpack.c.l.b16 %v4068
          %v4454 = vunpack.c.l.b16 %v4069
          %v4455 = vunpack.c.l.b16 %v4070
          %v4456 = vpack.c.b16 %v4441, %v4440
          %v4457 = vpack.c.b16 %v4443, %v4442
          %v4458 = vpack.c.b16 %v4445, %v4444
          %v4459 = vpack.c.b16 %v4447, %v4446
          %v4460 = vpack.c.b16 %v4449, %v4448
          %v4461 = vpack.c.b16 %v4451, %v4450
          %v4462 = vpack.c.b16 %v4453, %v4452
          %v4463 = vpack.c.b16 %v4455, %v4454
          %4472 = vmatprep.subr.bf16.mxu0 0
          %4473 = vmatpush1.bf16.msra.mxu0 %v4456
          %4474 = vmatprep.subr.bf16.mxu0 0
          %4475 = vmatpush1.bf16.msra.mxu0 %v4457
          %4476 = vmatprep.subr.bf16.mxu0 0
          %4477 = vmatpush1.bf16.msra.mxu0 %v4458
          %4478 = vmatprep.subr.bf16.mxu0 0
          %4479 = vmatpush1.bf16.msra.mxu0 %v4459
          %4480 = vmatprep.subr.bf16.mxu0 0
          %4481 = vmatpush1.bf16.msra.mxu0 %v4460
          %4482 = vmatprep.subr.bf16.mxu0 0
          %4483 = vmatpush1.bf16.msra.mxu0 %v4461
          %4484 = vmatprep.subr.bf16.mxu0 0
          %4485 = vmatpush1.bf16.msra.mxu0 %v4462
          %4486 = vmatprep.subr.bf16.mxu0 0
          %4487 = vmatpush1.bf16.msra.mxu0 %v4463
          %4488 = vmatprep.subr.bf16.mxu0 0
          %4489 = vmatpush1.bf16.msra.mxu0 0
          %4490 = vmatprep.subr.bf16.mxu0 0
          %4491 = vmatpush1.bf16.msra.mxu0 0
          %4492 = vmatprep.subr.bf16.mxu0 0
          %4493 = vmatpush1.bf16.msra.mxu0 0
          %4494 = vmatprep.subr.bf16.mxu0 0
          %4495 = vmatpush1.bf16.msra.mxu0 0
          %4496 = vmatprep.subr.bf16.mxu0 0
          %4497 = vmatpush1.bf16.msra.mxu0 0
          %4498 = vmatprep.subr.bf16.mxu0 0
          %4499 = vmatpush1.bf16.msra.mxu0 0
          %4500 = vmatprep.subr.bf16.mxu0 0
          %4501 = vmatpush1.bf16.msra.mxu0 0
          %4502 = vmatprep.subr.bf16.mxu0 0
          %4503 = vmatpush1.bf16.msra.mxu0 0
          %4504 = vmatprep.mubr.bf16.mxu0 0
          %4505 = vmatmul.mubr.bf16.gmra.mrb[0].mxu0 %v3543
          %v4506 = vpop.f32.mrb[0].mxu0
          %v4507 = vadd.f32 %v4170, %v4506
          %v4508 = vpop.f32.mrb[0].mxu0
          %v4509 = vpop.f32.mrb[0].mxu0
          %v4510 = vadd.f32 %v4173, %v4509
          %v4511 = vpop.f32.mrb[0].mxu0
          %4512 = vmatprep.mubr.bf16.mxu0 0
          %4513 = vmatmul.mubr.bf16.gmra.mrb[0].mxu0 %v3544
          %v4514 = vpop.f32.mrb[0].mxu0
          %v4515 = vadd.f32 %v4178, %v4514
          %v4516 = vpop.f32.mrb[0].mxu0
          %v4517 = vpop.f32.mrb[0].mxu0
          %v4518 = vadd.f32 %v4181, %v4517
          %v4519 = vpop.f32.mrb[0].mxu0
          %4520 = vmatprep.mubr.bf16.mxu0 0
          %4521 = vmatmul.mubr.bf16.gmra.mrb[0].mxu0 %v3545
          %v4522 = vpop.f32.mrb[0].mxu0
          %v4523 = vadd.f32 %v4186, %v4522
          %v4524 = vpop.f32.mrb[0].mxu0
          %v4525 = vpop.f32.mrb[0].mxu0
          %v4526 = vadd.f32 %v4189, %v4525
          %v4527 = vpop.f32.mrb[0].mxu0
          %4528 = vmatprep.mubr.bf16.mxu0 0
          %4529 = vmatmul.mubr.bf16.gmra.mrb[0].mxu0 %v3546
          %v4530 = vpop.f32.mrb[0].mxu0
          %v4531 = vadd.f32 %v4194, %v4530
          %v4532 = vpop.f32.mrb[0].mxu0
          %v4533 = vpop.f32.mrb[0].mxu0
          %v4534 = vadd.f32 %v4197, %v4533
          %v4535 = vpop.f32.mrb[0].mxu0
          %4536 = vmatprep.mubr.bf16.mxu0 0
          %4537 = vmatmul.mubr.bf16.gmra.mrb[0].mxu0 %v3547
          %v4538 = vpop.f32.mrb[0].mxu0
          %v4539 = vadd.f32 %v4202, %v4538
          %v4540 = vpop.f32.mrb[0].mxu0
          %v4541 = vpop.f32.mrb[0].mxu0
          %v4542 = vadd.f32 %v4205, %v4541
          %v4543 = vpop.f32.mrb[0].mxu0
          %4544 = vmatprep.mubr.bf16.mxu0 0
          %4545 = vmatmul.mubr.bf16.gmra.mrb[0].mxu0 %v3548
          %v4546 = vpop.f32.mrb[0].mxu0
          %v4547 = vadd.f32 %v4210, %v4546
          %v4548 = vpop.f32.mrb[0].mxu0
          %v4549 = vpop.f32.mrb[0].mxu0
          %v4550 = vadd.f32 %v4213, %v4549
          %v4551 = vpop.f32.mrb[0].mxu0
          %4552 = vmatprep.mubr.bf16.mxu0 0
          %4553 = vmatmul.mubr.bf16.gmra.mrb[0].mxu0 %v3549
          %v4554 = vpop.f32.mrb[0].mxu0
          %v4555 = vadd.f32 %v4218, %v4554
          %v4556 = vpop.f32.mrb[0].mxu0
          %v4557 = vpop.f32.mrb[0].mxu0
          %v4558 = vadd.f32 %v4221, %v4557
          %v4559 = vpop.f32.mrb[0].mxu0
          %4560 = vmatprep.mubr.bf16.mxu0 0
          %4561 = vmatmul.mubr.bf16.gmra.mrb[0].mxu0 %v3550
          %v4562 = vpop.f32.mrb[0].mxu0
          %v4563 = vadd.f32 %v4226, %v4562
          %v4564 = vpop.f32.mrb[0].mxu0
          %v4565 = vpop.f32.mrb[0].mxu0
          %v4566 = vadd.f32 %v4229, %v4565
          %v4567 = vpop.f32.mrb[0].mxu0
          %4568 = vmatprep.mubr.bf16.mxu0 0
          %4569 = vmatmul.mubr.bf16.gmra.mrb[0].mxu0 %v3551
          %v4570 = vpop.f32.mrb[0].mxu0
          %v4571 = vadd.f32 %v4234, %v4570
          %v4572 = vpop.f32.mrb[0].mxu0
          %v4573 = vpop.f32.mrb[0].mxu0
          %v4574 = vadd.f32 %v4237, %v4573
          %v4575 = vpop.f32.mrb[0].mxu0
          %4576 = vmatprep.mubr.bf16.mxu0 0
          %4577 = vmatmul.mubr.bf16.gmra.mrb[0].mxu0 %v3552
          %v4578 = vpop.f32.mrb[0].mxu0
          %v4579 = vadd.f32 %v4242, %v4578
          %v4580 = vpop.f32.mrb[0].mxu0
          %v4581 = vpop.f32.mrb[0].mxu0
          %v4582 = vadd.f32 %v4245, %v4581
          %v4583 = vpop.f32.mrb[0].mxu0
          %4584 = vmatprep.mubr.bf16.mxu0 0
          %4585 = vmatmul.mubr.bf16.gmra.mrb[0].mxu0 %v3553
          %v4586 = vpop.f32.mrb[0].mxu0
          %v4587 = vadd.f32 %v4250, %v4586
          %v4588 = vpop.f32.mrb[0].mxu0
          %v4589 = vpop.f32.mrb[0].mxu0
          %v4590 = vadd.f32 %v4253, %v4589
          %v4591 = vpop.f32.mrb[0].mxu0
          %4592 = vmatprep.mubr.bf16.mxu0 0
          %4593 = vmatmul.mubr.bf16.gmra.mrb[0].mxu0 %v3554
          %v4594 = vpop.f32.mrb[0].mxu0
          %v4595 = vadd.f32 %v4258, %v4594
          %v4596 = vpop.f32.mrb[0].mxu0
          %v4597 = vpop.f32.mrb[0].mxu0
          %v4598 = vadd.f32 %v4261, %v4597
          %v4599 = vpop.f32.mrb[0].mxu0
          %4600 = vmatprep.mubr.bf16.mxu0 0
          %4601 = vmatmul.mubr.bf16.gmra.mrb[0].mxu0 %v3555
          %v4602 = vpop.f32.mrb[0].mxu0
          %v4603 = vadd.f32 %v4266, %v4602
          %v4604 = vpop.f32.mrb[0].mxu0
          %v4605 = vpop.f32.mrb[0].mxu0
          %v4606 = vadd.f32 %v4269, %v4605
          %v4607 = vpop.f32.mrb[0].mxu0
          %4608 = vmatprep.mubr.bf16.mxu0 0
          %4609 = vmatmul.mubr.bf16.gmra.mrb[0].mxu0 %v3556
          %v4610 = vpop.f32.mrb[0].mxu0
          %v4611 = vadd.f32 %v4274, %v4610
          %v4612 = vpop.f32.mrb[0].mxu0
          %v4613 = vpop.f32.mrb[0].mxu0
          %v4614 = vadd.f32 %v4277, %v4613
          %v4615 = vpop.f32.mrb[0].mxu0
          %4616 = vmatprep.mubr.bf16.mxu0 0
          %4617 = vmatmul.mubr.bf16.gmra.mrb[0].mxu0 %v3557
          %v4618 = vpop.f32.mrb[0].mxu0
          %v4619 = vadd.f32 %v4282, %v4618
          %v4620 = vpop.f32.mrb[0].mxu0
          %v4621 = vpop.f32.mrb[0].mxu0
          %v4622 = vadd.f32 %v4285, %v4621
          %v4623 = vpop.f32.mrb[0].mxu0
          %4624 = vmatprep.mubr.bf16.mxu0 0
          %4625 = vmatmul.mubr.bf16.gmra.mrb[0].mxu0 %v3558
          %v4626 = vpop.f32.mrb[0].mxu0
          %v4627 = vadd.f32 %v4290, %v4626
          %v4628 = vpop.f32.mrb[0].mxu0
          %v4629 = vpop.f32.mrb[0].mxu0
          %v4630 = vadd.f32 %v4293, %v4629
          %v4631 = vpop.f32.mrb[0].mxu0
          %4632 = vmatprep.mubr.bf16.mxu0 0
          %4633 = vmatmul.mubr.bf16.gmra.mrb[0].mxu0 %v3559
          %v4634 = vpop.f32.mrb[0].mxu0
          %v4635 = vadd.f32 %v4298, %v4634
          %v4636 = vpop.f32.mrb[0].mxu0
          %v4637 = vpop.f32.mrb[0].mxu0
          %v4638 = vadd.f32 %v4301, %v4637
          %v4639 = vpop.f32.mrb[0].mxu0
          %4640 = vmatprep.mubr.bf16.mxu0 0
          %4641 = vmatmul.mubr.bf16.gmra.mrb[0].mxu0 %v3560
          %v4642 = vpop.f32.mrb[0].mxu0
          %v4643 = vadd.f32 %v4306, %v4642
          %v4644 = vpop.f32.mrb[0].mxu0
          %v4645 = vpop.f32.mrb[0].mxu0
          %v4646 = vadd.f32 %v4309, %v4645
          %v4647 = vpop.f32.mrb[0].mxu0
          %4648 = vmatprep.mubr.bf16.mxu0 0
          %4649 = vmatmul.mubr.bf16.gmra.mrb[0].mxu0 %v3561
          %v4650 = vpop.f32.mrb[0].mxu0
          %v4651 = vadd.f32 %v4314, %v4650
          %v4652 = vpop.f32.mrb[0].mxu0
          %v4653 = vpop.f32.mrb[0].mxu0
          %v4654 = vadd.f32 %v4317, %v4653
          %v4655 = vpop.f32.mrb[0].mxu0
          %4656 = vmatprep.mubr.bf16.mxu0 0
          %4657 = vmatmul.mubr.bf16.gmra.mrb[0].mxu0 %v3562
          %v4658 = vpop.f32.mrb[0].mxu0
          %v4659 = vadd.f32 %v4322, %v4658
          %v4660 = vpop.f32.mrb[0].mxu0
          %v4661 = vpop.f32.mrb[0].mxu0
          %v4662 = vadd.f32 %v4325, %v4661
          %v4663 = vpop.f32.mrb[0].mxu0
          %4664 = vmatprep.mubr.bf16.mxu0 0
          %4665 = vmatmul.mubr.bf16.gmra.mrb[0].mxu0 %v3563
          %v4666 = vpop.f32.mrb[0].mxu0
          %v4667 = vadd.f32 %v4330, %v4666
          %v4668 = vpop.f32.mrb[0].mxu0
          %v4669 = vpop.f32.mrb[0].mxu0
          %v4670 = vadd.f32 %v4333, %v4669
          %v4671 = vpop.f32.mrb[0].mxu0
          %4672 = vmatprep.mubr.bf16.mxu0 0
          %4673 = vmatmul.mubr.bf16.gmra.mrb[0].mxu0 %v3564
          %v4674 = vpop.f32.mrb[0].mxu0
          %v4675 = vadd.f32 %v4338, %v4674
          %v4676 = vpop.f32.mrb[0].mxu0
          %v4677 = vpop.f32.mrb[0].mxu0
          %v4678 = vadd.f32 %v4341, %v4677
          %v4679 = vpop.f32.mrb[0].mxu0
          %4680 = vmatprep.mubr.bf16.mxu0 0
          %4681 = vmatmul.mubr.bf16.gmra.mrb[0].mxu0 %v3565
          %v4682 = vpop.f32.mrb[0].mxu0
          %v4683 = vadd.f32 %v4346, %v4682
          %v4684 = vpop.f32.mrb[0].mxu0
          %v4685 = vpop.f32.mrb[0].mxu0
          %v4686 = vadd.f32 %v4349, %v4685
          %v4687 = vpop.f32.mrb[0].mxu0
          %4688 = vmatprep.mubr.bf16.mxu0 0
          %4689 = vmatmul.mubr.bf16.gmra.mrb[0].mxu0 %v3566
          %v4690 = vpop.f32.mrb[0].mxu0
          %v4691 = vadd.f32 %v4354, %v4690
          %v4692 = vpop.f32.mrb[0].mxu0
          %v4693 = vpop.f32.mrb[0].mxu0
          %v4694 = vadd.f32 %v4357, %v4693
          %v4695 = vpop.f32.mrb[0].mxu0
          %4696 = vmatprep.mubr.bf16.mxu0 0
          %4697 = vmatmul.mubr.bf16.gmra.mrb[0].mxu0 %v3567
          %v4698 = vpop.f32.mrb[0].mxu0
          %v4699 = vadd.f32 %v4362, %v4698
          %v4700 = vpop.f32.mrb[0].mxu0
          %v4701 = vpop.f32.mrb[0].mxu0
          %v4702 = vadd.f32 %v4365, %v4701
          %v4703 = vpop.f32.mrb[0].mxu0
          %4704 = vmatprep.mubr.bf16.mxu0 0
          %4705 = vmatmul.mubr.bf16.gmra.mrb[0].mxu0 %v3568
          %v4706 = vpop.f32.mrb[0].mxu0
          %v4707 = vadd.f32 %v4370, %v4706
          %v4708 = vpop.f32.mrb[0].mxu0
          %v4709 = vpop.f32.mrb[0].mxu0
          %v4710 = vadd.f32 %v4373, %v4709
          %v4711 = vpop.f32.mrb[0].mxu0
          %4712 = vmatprep.mubr.bf16.mxu0 0
          %4713 = vmatmul.mubr.bf16.gmra.mrb[0].mxu0 %v3569
          %v4714 = vpop.f32.mrb[0].mxu0
          %v4715 = vadd.f32 %v4378, %v4714
          %v4716 = vpop.f32.mrb[0].mxu0
          %v4717 = vpop.f32.mrb[0].mxu0
          %v4718 = vadd.f32 %v4381, %v4717
          %v4719 = vpop.f32.mrb[0].mxu0
          %4720 = vmatprep.mubr.bf16.mxu0 0
          %4721 = vmatmul.mubr.bf16.gmra.mrb[0].mxu0 %v3570
          %v4722 = vpop.f32.mrb[0].mxu0
          %v4723 = vadd.f32 %v4386, %v4722
          %v4724 = vpop.f32.mrb[0].mxu0
          %v4725 = vpop.f32.mrb[0].mxu0
          %v4726 = vadd.f32 %v4389, %v4725
          %v4727 = vpop.f32.mrb[0].mxu0
          %4728 = vmatprep.mubr.bf16.mxu0 0
          %4729 = vmatmul.mubr.bf16.gmra.mrb[0].mxu0 %v3571
          %v4730 = vpop.f32.mrb[0].mxu0
          %v4731 = vadd.f32 %v4394, %v4730
          %v4732 = vpop.f32.mrb[0].mxu0
          %v4733 = vpop.f32.mrb[0].mxu0
          %v4734 = vadd.f32 %v4397, %v4733
          %v4735 = vpop.f32.mrb[0].mxu0
          %4736 = vmatprep.mubr.bf16.mxu0 0
          %4737 = vmatmul.mubr.bf16.gmra.mrb[0].mxu0 %v3572
          %v4738 = vpop.f32.mrb[0].mxu0
          %v4739 = vadd.f32 %v4402, %v4738
          %v4740 = vpop.f32.mrb[0].mxu0
          %v4741 = vpop.f32.mrb[0].mxu0
          %v4742 = vadd.f32 %v4405, %v4741
          %v4743 = vpop.f32.mrb[0].mxu0
          %4744 = vmatprep.mubr.bf16.mxu0 0
          %4745 = vmatmul.mubr.bf16.gmra.mrb[0].mxu0 %v3573
          %v4746 = vpop.f32.mrb[0].mxu0
          %v4747 = vadd.f32 %v4410, %v4746
          %v4748 = vpop.f32.mrb[0].mxu0
          %v4749 = vpop.f32.mrb[0].mxu0
          %v4750 = vadd.f32 %v4413, %v4749
          %v4751 = vpop.f32.mrb[0].mxu0
          %4752 = vmatprep.mubr.bf16.mxu0 0
          %4753 = vmatmul.mubr.bf16.gmra.mrb[0].mxu0 %v3574
          %v4754 = vpop.f32.mrb[0].mxu0
          %v4755 = vadd.f32 %v4418, %v4754
          %v4756 = vpop.f32.mrb[0].mxu0
          %v4757 = vpop.f32.mrb[0].mxu0
          %v4758 = vadd.f32 %v4421, %v4757
          %v4759 = vpop.f32.mrb[0].mxu0
          %4760 = vdwg.mxu0
          %v4761 = vld [vmem:[%s7] sm:$0x1]
          %v4763 = vlaneseq
          %v4764 = vshrl.u32 %v4763, 7
          %v4765 = vsub.s32 0, %v4764
          %v4766 = vrot.slane %v4761, %v4765
          %v4768 = vadd.f32 %v4507, %v4766
          %v4769 = vadd.f32 %v4510, %v4766
          %v4770 = vadd.f32 %v4515, %v4766
          %v4771 = vadd.f32 %v4518, %v4766
          %v4772 = vadd.f32 %v4523, %v4766
          %v4773 = vadd.f32 %v4526, %v4766
          %v4774 = vadd.f32 %v4531, %v4766
          %v4775 = vadd.f32 %v4534, %v4766
          %v4776 = vadd.f32 %v4539, %v4766
          %v4777 = vadd.f32 %v4542, %v4766
          %v4778 = vadd.f32 %v4547, %v4766
          %v4779 = vadd.f32 %v4550, %v4766
          %v4780 = vadd.f32 %v4555, %v4766
          %v4781 = vadd.f32 %v4558, %v4766
          %v4782 = vadd.f32 %v4563, %v4766
          %v4783 = vadd.f32 %v4566, %v4766
          %v4784 = vadd.f32 %v4571, %v4766
          %v4785 = vadd.f32 %v4574, %v4766
          %v4786 = vadd.f32 %v4579, %v4766
          %v4787 = vadd.f32 %v4582, %v4766
          %v4788 = vadd.f32 %v4587, %v4766
          %v4789 = vadd.f32 %v4590, %v4766
          %v4790 = vadd.f32 %v4595, %v4766
          %v4791 = vadd.f32 %v4598, %v4766
          %v4792 = vadd.f32 %v4603, %v4766
          %v4793 = vadd.f32 %v4606, %v4766
          %v4794 = vadd.f32 %v4611, %v4766
          %v4795 = vadd.f32 %v4614, %v4766
          %v4796 = vadd.f32 %v4619, %v4766
          %v4797 = vadd.f32 %v4622, %v4766
          %v4798 = vadd.f32 %v4627, %v4766
          %v4799 = vadd.f32 %v4630, %v4766
          %v4800 = vadd.f32 %v4635, %v4766
          %v4801 = vadd.f32 %v4638, %v4766
          %v4802 = vadd.f32 %v4643, %v4766
          %v4803 = vadd.f32 %v4646, %v4766
          %v4804 = vadd.f32 %v4651, %v4766
          %v4805 = vadd.f32 %v4654, %v4766
          %v4806 = vadd.f32 %v4659, %v4766
          %v4807 = vadd.f32 %v4662, %v4766
          %v4808 = vadd.f32 %v4667, %v4766
          %v4809 = vadd.f32 %v4670, %v4766
          %v4810 = vadd.f32 %v4675, %v4766
          %v4811 = vadd.f32 %v4678, %v4766
          %v4812 = vadd.f32 %v4683, %v4766
          %v4813 = vadd.f32 %v4686, %v4766
          %v4814 = vadd.f32 %v4691, %v4766
          %v4815 = vadd.f32 %v4694, %v4766
          %v4816 = vadd.f32 %v4699, %v4766
          %v4817 = vadd.f32 %v4702, %v4766
          %v4818 = vadd.f32 %v4707, %v4766
          %v4819 = vadd.f32 %v4710, %v4766
          %v4820 = vadd.f32 %v4715, %v4766
          %v4821 = vadd.f32 %v4718, %v4766
          %v4822 = vadd.f32 %v4723, %v4766
          %v4823 = vadd.f32 %v4726, %v4766
          %v4824 = vadd.f32 %v4731, %v4766
          %v4825 = vadd.f32 %v4734, %v4766
          %v4826 = vadd.f32 %v4739, %v4766
          %v4827 = vadd.f32 %v4742, %v4766
          %v4828 = vadd.f32 %v4747, %v4766
          %v4829 = vadd.f32 %v4750, %v4766
          %v4830 = vadd.f32 %v4755, %v4766
          %v4831 = vadd.f32 %v4758, %v4766
          %4832 = vst [vmem:[%s507] sm:$0xff] %v4768
          %4833 = vst [vmem:[%s507 + $0x8] sm:$0xff] %v4769
          %4834 = vst [vmem:[%s507 + $0x10] sm:$0xff] %v4770
          %4835 = vst [vmem:[%s507 + $0x18] sm:$0xff] %v4771
          %4836 = vst [vmem:[%s507 + $0x20] sm:$0xff] %v4772
          %4837 = vst [vmem:[%s507 + $0x28] sm:$0xff] %v4773
          %4838 = vst [vmem:[%s507 + $0x30] sm:$0xff] %v4774
          %4839 = vst [vmem:[%s507 + $0x38] sm:$0xff] %v4775
          %4840 = vst [vmem:[%s507 + $0x40] sm:$0xff] %v4776
          %4841 = vst [vmem:[%s507 + $0x48] sm:$0xff] %v4777
          %4842 = vst [vmem:[%s507 + $0x50] sm:$0xff] %v4778
          %4843 = vst [vmem:[%s507 + $0x58] sm:$0xff] %v4779
          %4844 = vst [vmem:[%s507 + $0x60] sm:$0xff] %v4780
          %4845 = vst [vmem:[%s507 + $0x68] sm:$0xff] %v4781
          %4846 = vst [vmem:[%s507 + $0x70] sm:$0xff] %v4782
          %4847 = vst [vmem:[%s507 + $0x78] sm:$0xff] %v4783
          %4848 = vst [vmem:[%s507 + $0x80] sm:$0xff] %v4784
          %4849 = vst [vmem:[%s507 + $0x88] sm:$0xff] %v4785
          %4850 = vst [vmem:[%s507 + $0x90] sm:$0xff] %v4786
          %4851 = vst [vmem:[%s507 + $0x98] sm:$0xff] %v4787
          %4852 = vst [vmem:[%s507 + $0xa0] sm:$0xff] %v4788
          %4853 = vst [vmem:[%s507 + $0xa8] sm:$0xff] %v4789
          %4854 = vst [vmem:[%s507 + $0xb0] sm:$0xff] %v4790
          %4855 = vst [vmem:[%s507 + $0xb8] sm:$0xff] %v4791
          %4856 = vst [vmem:[%s507 + $0xc0] sm:$0xff] %v4792
          %4857 = vst [vmem:[%s507 + $0xc8] sm:$0xff] %v4793
          %4858 = vst [vmem:[%s507 + $0xd0] sm:$0xff] %v4794
          %4859 = vst [vmem:[%s507 + $0xd8] sm:$0xff] %v4795
          %4860 = vst [vmem:[%s507 + $0xe0] sm:$0xff] %v4796
          %4861 = vst [vmem:[%s507 + $0xe8] sm:$0xff] %v4797
          %4862 = vst [vmem:[%s507 + $0xf0] sm:$0xff] %v4798
          %4863 = vst [vmem:[%s507 + $0xf8] sm:$0xff] %v4799
          %4864 = vst [vmem:[%s507 + $0x100] sm:$0xff] %v4800
          %4865 = vst [vmem:[%s507 + $0x108] sm:$0xff] %v4801
          %4866 = vst [vmem:[%s507 + $0x110] sm:$0xff] %v4802
          %4867 = vst [vmem:[%s507 + $0x118] sm:$0xff] %v4803
          %4868 = vst [vmem:[%s507 + $0x120] sm:$0xff] %v4804
          %4869 = vst [vmem:[%s507 + $0x128] sm:$0xff] %v4805
          %4870 = vst [vmem:[%s507 + $0x130] sm:$0xff] %v4806
          %4871 = vst [vmem:[%s507 + $0x138] sm:$0xff] %v4807
          %4872 = vst [vmem:[%s507 + $0x140] sm:$0xff] %v4808
          %4873 = vst [vmem:[%s507 + $0x148] sm:$0xff] %v4809
          %4874 = vst [vmem:[%s507 + $0x150] sm:$0xff] %v4810
          %4875 = vst [vmem:[%s507 + $0x158] sm:$0xff] %v4811
          %4876 = vst [vmem:[%s507 + $0x160] sm:$0xff] %v4812
          %4877 = vst [vmem:[%s507 + $0x168] sm:$0xff] %v4813
          %4878 = vst [vmem:[%s507 + $0x170] sm:$0xff] %v4814
          %4879 = vst [vmem:[%s507 + $0x178] sm:$0xff] %v4815
          %4880 = vst [vmem:[%s507 + $0x180] sm:$0xff] %v4816
          %4881 = vst [vmem:[%s507 + $0x188] sm:$0xff] %v4817
          %4882 = vst [vmem:[%s507 + $0x190] sm:$0xff] %v4818
          %4883 = vst [vmem:[%s507 + $0x198] sm:$0xff] %v4819
          %4884 = vst [vmem:[%s507 + $0x1a0] sm:$0xff] %v4820
          %4885 = vst [vmem:[%s507 + $0x1a8] sm:$0xff] %v4821
          %4886 = vst [vmem:[%s507 + $0x1b0] sm:$0xff] %v4822
          %4887 = vst [vmem:[%s507 + $0x1b8] sm:$0xff] %v4823
          %4888 = vst [vmem:[%s507 + $0x1c0] sm:$0xff] %v4824
          %4889 = vst [vmem:[%s507 + $0x1c8] sm:$0xff] %v4825
          %4890 = vst [vmem:[%s507 + $0x1d0] sm:$0xff] %v4826
          %4891 = vst [vmem:[%s507 + $0x1d8] sm:$0xff] %v4827
          %4892 = vst [vmem:[%s507 + $0x1e0] sm:$0xff] %v4828
          %4893 = vst [vmem:[%s507 + $0x1e8] sm:$0xff] %v4829
          %4894 = vst [vmem:[%s507 + $0x1f0] sm:$0xff] %v4830
          %4895 = vst [vmem:[%s507 + $0x1f8] sm:$0xff] %v4831
        $region96: #{tpu_custom_call.1} parent=51 // pred_fallthru
          _
        %s4896 = sand.u32 %s259, 1
        %s4897 = scalar_lea.sflag [#allocation6], %s4896
        %s4898 = sand.u32 %s259, 1
        %s4899 = smul.addr %s4898, 512
        %s4900 = scalar_lea.vmem [#allocation15], %s4899
        // Predicated region
        $region97: #{tpu_custom_call.1} parent=51 // pred_check
          %p4901 = pneg %p269
        $region98: #{tpu_custom_call.1} parent=51 // pred_check_branch
          %4903 = sbr.rel (%p4901) target = $region100
        $region99: #{tpu_custom_call.1} parent=51 // pred_region
          %s4904 = smul.u32 %s38, %s37
          %s4905 = smul.u32 64, %s4904
          %s4907 = ssub.s32 8192, 8192
          %4908 = vsyncadd %s4897, %s4907
          %s4909 = smul.addr %s4905, 128
          %s4910 = scalar_lea.hbm %s8, %s4909
          %s4911 = sshll.u32 %s4900, 4
          %s4912 = int_to_ptr.vmem [resolvable:$true] %s4911
          %4917 = dma.vmem_to_hbm [thread:$0]  %s4912, 8192, %s4910, %s4897, 128, 128, 8
        $region100: #{tpu_custom_call.1} parent=51 // pred_fallthru
          _
      $region52: #{tpu_custom_call.1} parent=5 // pred_fallthru
        _
      %p4918 = scmp.le.s32.totalorder 2, %s27
      // Predicated region
      $region101: #{tpu_custom_call.1} parent=5 // pred_check
        %p4919 = pneg %p4918
      $region102: #{tpu_custom_call.1} parent=5 // pred_check_branch
        %4921 = sbr.rel (%p4919) target = $region104
      $region103: #{tpu_custom_call.1} parent=5 // pred_region
        %s4922 = ssub.s32 %s27, 2
        // Predicated region
        $region105: #{tpu_custom_call.1} parent=103 // pred_check
          %p4923 = pneg %p275
        $region106: #{tpu_custom_call.1} parent=103 // pred_check_branch
          %4925 = sbr.rel (%p4923) target = $region108
        $region107: #{tpu_custom_call.1} parent=103 // pred_region
          %s4926 = sand.u32 %s260, 1
          %s4927 = scalar_lea.sflag [#allocation6], %s4926
          %s4928 = sand.u32 %s260, 1
          %s4929 = smul.addr %s4928, 512
          %s4930 = scalar_lea.vmem [#allocation15], %s4929
          %4931 = dma.done %s4927, 8192
        $region108: #{tpu_custom_call.1} parent=103 // pred_fallthru
          _
      $region104: #{tpu_custom_call.1} parent=5 // pred_fallthru
        _
    $region6: #{tpu_custom_call.1} parent=1 // loop_footer
      %s31 = sadd.s32 1, %s27
    $region7: #{tpu_custom_call.1} parent=1 // loop_footer_branch
      %26 = sbr.rel target = $region3
    $region8: #{tpu_custom_call.1} parent=1 // loop_exit
      _
    %4932 = vsyncpa [#allocation5], 1
    %s4933 = scalar_lea.sflag [#allocation5], 1
    %4934 = vsyncpa %s4933, 1
    %4935 = vsyncpa [#allocation8], 1
    %s4936 = scalar_lea.sflag [#allocation8], 1
    %4937 = vsyncpa %s4936, 1
    %4938 = vsyncpa [#allocation11], 1
    %s4939 = scalar_lea.sflag [#allocation11], 1
    %4940 = vsyncpa %s4939, 1
    %4941 = vsyncpa [#allocation14], 1
    %4942 = vsyncpa [#allocation6], 1
    %s4943 = scalar_lea.sflag [#allocation6], 1
    %4944 = vsyncpa %s4943, 1

</llo_original>
